<compile_context>
chip_gen: v7x
topology: tpu7x:2x2x1
jax: 0.10.0
libtpu: 0.0.40
codegen_flags: <defaults>
</compile_context>

<pallas_src>
import functools

import jax
import jax.numpy as jnp
from jax import lax
from jax.experimental import pallas as pl
from jax.experimental.pallas import tpu as pltpu

# Interior of the padded scratch starts at this (sublane-aligned) column so the two
# full-activation writes into scratch are plain aligned stores. Left halo sits at
# column _PAD_L-1, right halo at column _PAD_L+W.
_PAD_L = 8


def _basic_block_kernel(x_ref, w1_ref, w2_ref, bias_ref, o_ref,
                        xpad_ref, y1pad_ref, *, compute_dtype, use_concat_im2col):
    """conv1+bn1+relu -> conv2+bn2 -> +x -> relu, one batch element per grid step."""
    _, H, W, Cin = x_ref.shape
    Cout = w1_ref.shape[-1]

    x = x_ref[0]                                    # (H, W, Cin) f32, resident in VMEM

    def zero_halo(pad_ref):
        # Only the 1-pixel halo needs zeros -- the interior is fully overwritten every
        # step. Do not gate on program_id==0: each megacore TC has its own scratch.
        hp, wp, c = pad_ref.shape
        z_row = jnp.zeros((1, wp, c), pad_ref.dtype)
        pad_ref[0:1, :, :] = z_row                                   # top halo row
        pad_ref[H + 1:H + 2, :, :] = z_row                           # bottom halo row
        z_col = jnp.zeros((hp, 1, c), pad_ref.dtype)
        pad_ref[:, _PAD_L - 1:_PAD_L, :] = z_col                     # left halo column
        pad_ref[:, _PAD_L + W:_PAD_L + W + 1, :] = z_col             # right halo column

    def conv3x3(pad_ref, w_ref, cin):
        # Tap (kh, kw) reads pad[kh : kh+H, _PAD_L-1+kw : _PAD_L-1+kw+W, :].
        if use_concat_im2col:
            # Small C: one (H*W, 9C) @ (9C, Cout) matmul -> better MXU K-dim use.
            taps = [pad_ref[kh:kh + H, _PAD_L - 1 + kw:_PAD_L - 1 + kw + W, :]
                    .reshape(H * W, cin)
                    for kh in range(3) for kw in range(3)]
            patches = jnp.concatenate(taps, axis=-1)
            return jnp.dot(patches, w_ref[...], preferred_element_type=jnp.float32)
        # Large C: K = C already fills the MXU contraction depth; accumulate per-tap
        # dots and skip the (H*W, 9C) lane-concat temp (the largest VMEM consumer).
        acc = jnp.zeros((H * W, Cout), jnp.float32)
        for t, (kh, kw) in enumerate([(a, b) for a in range(3) for b in range(3)]):
            patch = pad_ref[kh:kh + H,
                            _PAD_L - 1 + kw:_PAD_L - 1 + kw + W, :].reshape(H * W, cin)
            acc = acc + jnp.dot(patch, w_ref[t * cin:(t + 1) * cin, :],
                                preferred_element_type=jnp.float32)
        return acc

    # ---- conv1 (BN1 scale folded into w1) + bias1 + ReLU; y1 never leaves VMEM ----
    zero_halo(xpad_ref)
    xpad_ref[1:H + 1, _PAD_L:_PAD_L + W, :] = x.astype(compute_dtype)
    y1 = conv3x3(xpad_ref, w1_ref, Cin)                              # (H*W, Cout) f32
    y1 = jnp.maximum(y1 + bias_ref[0:1, :], 0.0)

    # ---- conv2 (BN2 scale folded into w2) + bias2 + residual + ReLU ----
    zero_halo(y1pad_ref)
    y1pad_ref[1:H + 1, _PAD_L:_PAD_L + W, :] = (
        y1.reshape(H, W, Cout).astype(compute_dtype))
    y2 = conv3x3(y1pad_ref, w2_ref, Cout)
    y2 = y2 + bias_ref[1:2, :]
    y2 = y2 + x.reshape(H * W, Cin)                  # residual (Cin == Cout), f32
    y2 = jnp.maximum(y2, 0.0)

    # TODO(synk): a lane-dense (1, H, W*C) output slab for C<128 would avoid masked
    # vst.msk HBM stores, but requires an (H*W,C)->(H,W*C) relayout of the matmul
    # output that Mosaic does not lower cheaply; conv is MXU-bound at real C, so the
    # masked store is not the binding slot here.
    o_ref[...] = y2.reshape(1, H, W, Cout).astype(o_ref.dtype)


def basic_block_forward_nhwc(x_nhwc, params, *, eps=1e-5,
                             compute_dtype=jnp.bfloat16, out_dtype=jnp.float32):
    """Fused BasicBlock forward in NHWC (prefer this entry point when chaining blocks)."""
    x = x_nhwc.astype(jnp.float32)
    N, H, W, C = x.shape
    Cin, Cout = params["w1"].shape[2], params["w1"].shape[3]
    # TODO(synk): stride > 1 / downsample branch of BasicBlock not implemented.
    assert Cin == C and Cout == C, "stride=1 / no-downsample BasicBlock needs Cin == Cout"

    def fold_bn(gamma, beta, mean, var):
        scale = (gamma / jnp.sqrt(var + eps)).astype(jnp.float32)
        bias = (beta - mean * scale).astype(jnp.float32)
        return scale, bias

    s1, b1 = fold_bn(params["gamma1"], params["beta1"], params["mean1"], params["var1"])
    s2, b2 = fold_bn(params["gamma2"], params["beta2"], params["mean2"], params["var2"])

    # HWIO (3,3,Ci,Co) -> im2col (9*Ci, Co), K order (kh, kw, ci). Fold BN scale into
    # the weight columns and cast ONCE here (bf16 default -> native MXU path, half the
    # weight DMA/VMEM, no per-grid-step casts inside the kernel).
    w1 = (params["w1"].reshape(9 * Cin, Cout).astype(jnp.float32)
          * s1[None, :]).astype(compute_dtype)
    w2 = (params["w2"].reshape(9 * Cout, Cout).astype(jnp.float32)
          * s2[None, :]).astype(compute_dtype)
    bias = jnp.stack([b1, b2], axis=0)                               # (2, Cout) f32

    # One wide im2col matmul for small C; per-tap accumulation once C is large.
    use_concat_im2col = (9 * max(Cin, Cout)) <= 288

    # VMEM budget ~= 3/4 of physical capacity (96 MiB on v5e/v6e, 48 MiB on v7x).
    try:
        vmem_cap = int(pltpu.get_tpu_info().vmem_capacity_bytes)
    except Exception:
        vmem_cap = 64 * 1024 * 1024
    vmem_limit = int(min(3 * vmem_cap // 4, 96 * 1024 * 1024))

    w_pad = _PAD_L + W + 1   # cols [0, _PAD_L-1) unused; halos at _PAD_L-1 and _PAD_L+W

    kernel = functools.partial(_basic_block_kernel, compute_dtype=compute_dtype,
                               use_concat_im2col=use_concat_im2col)

    out = pl.pallas_call(
        kernel,
        out_shape=jax.ShapeDtypeStruct((N, H, W, Cout), out_dtype),
        grid_spec=pltpu.PrefetchScalarGridSpec(
            num_scalar_prefetch=0,
            grid=(N,),
            in_specs=[
                pl.BlockSpec((1, H, W, Cin), lambda n: (n, 0, 0, 0)),     # x
                pl.BlockSpec((9 * Cin, Cout), lambda n: (0, 0)),          # w1*scale1
                pl.BlockSpec((9 * Cout, Cout), lambda n: (0, 0)),         # w2*scale2
                pl.BlockSpec((2, Cout), lambda n: (0, 0)),                # [bias1; bias2]
            ],
            out_specs=pl.BlockSpec((1, H, W, Cout), lambda n: (n, 0, 0, 0)),
            scratch_shapes=[
                pltpu.VMEM((H + 2, w_pad, Cin), compute_dtype),   # padded x (halo in VMEM)
                pltpu.VMEM((H + 2, w_pad, Cout), compute_dtype),  # padded y1
            ],
        ),
        compiler_params=pltpu.CompilerParams(
            dimension_semantics=("parallel",),
            vmem_limit_bytes=vmem_limit,
        ),
    )(x, w1, w2, bias)
    # TODO(synk): for 56-112 px ResNet stages on v7x (64 MiB VMEM) add an H-tiled grid
    # axis with a 1-row halo instead of whole-image blocks (also deepens the pipeline
    # and feeds both TensorCores at N=1).
    return out


def basic_block_forward(x_nchw, params, *, eps=1e-5,
                        compute_dtype=jnp.bfloat16, out_dtype=jnp.float32):
    """PyTorch-layout entry point (NCHW in / NCHW out)."""
    x = jnp.transpose(x_nchw, (0, 2, 3, 1))
    out = basic_block_forward_nhwc(x, params, eps=eps, compute_dtype=compute_dtype,
                                   out_dtype=out_dtype)
    return jnp.transpose(out, (0, 3, 1, 2))


def _reference_forward(x_nchw, params, eps=1e-5):
    """Pure-JAX reference (lax.conv) for correctness checking."""
    x = jnp.transpose(x_nchw, (0, 2, 3, 1)).astype(jnp.float32)
    dn = ("NHWC", "HWIO", "NHWC")

    def conv(v, w):
        return lax.conv_general_dilated(v, w, (1, 1), ((1, 1), (1, 1)),
                                        dimension_numbers=dn)

    def bn(v, g, b, m, s):
        return (v - m) / jnp.sqrt(s + eps) * g + b

    y = jax.nn.relu(bn(conv(x, params["w1"]), params["gamma1"], params["beta1"],
                       params["mean1"], params["var1"]))
    y = bn(conv(y, params["w2"]), params["gamma2"], params["beta2"],
           params["mean2"], params["var2"])
    y = jax.nn.relu(y + x)
    return jnp.transpose(y, (0, 3, 1, 2))


def make_params(key, inplanes, planes):
    ks = jax.random.split(key, 8)
    fan_in = 9 * inplanes
    std = (2.0 / fan_in) ** 0.5
    return {
        "w1": jax.random.normal(ks[0], (3, 3, inplanes, planes), jnp.float32) * std,
        "gamma1": 1.0 + 0.1 * jax.random.normal(ks[1], (planes,), jnp.float32),
        "beta1": 0.1 * jax.random.normal(ks[2], (planes,), jnp.float32),
        "mean1": 0.1 * jax.random.normal(ks[3], (planes,), jnp.float32),
        "var1": jnp.abs(jax.random.normal(ks[4], (planes,), jnp.float32)) + 0.5,
        "w2": jax.random.normal(ks[5], (3, 3, planes, planes), jnp.float32) * std,
        "gamma2": 1.0 + 0.1 * jax.random.normal(ks[6], (planes,), jnp.float32),
        "beta2": 0.1 * jax.random.normal(ks[7], (planes,), jnp.float32),
        "mean2": 0.05 * jnp.ones((planes,), jnp.float32),
        "var2": 0.8 * jnp.ones((planes,), jnp.float32),
    }


if __name__ == "__main__":
    key = jax.random.PRNGKey(0)
    kx, kp = jax.random.split(key)

    N, C, H, W = 2, 4, 16, 16       # inplanes = planes = 4, stride = 1
    x = jax.random.normal(kx, (N, C, H, W), jnp.float32)
    params = make_params(kp, C, C)

    ref = jax.block_until_ready(_reference_forward(x, params))

    # Exact-parity path (f32 MXU inputs).
    out_f32 = jax.block_until_ready(
        basic_block_forward(x, params, compute_dtype=jnp.float32))
    assert out_f32.shape == (N, C, H, W)
    err_f32 = float(jnp.max(jnp.abs(out_f32 - ref)))
    assert err_f32 < 2e-4, f"f32 path mismatch vs reference: {err_f32}"

    # Default performance path (bf16 MXU inputs, f32 accumulation / BN / residual).
    out_bf16 = jax.block_until_ready(basic_block_forward(x, params))
    scale = 1.0 + float(jnp.max(jnp.abs(ref)))
    err_bf16 = float(jnp.max(jnp.abs(out_bf16 - ref)))
    assert err_bf16 < 3e-2 * scale, f"bf16 path mismatch vs reference: {err_bf16}"

    print("KERNEL_OK")
</pallas_src>

<mosaic_0001>
module attributes {stable_mosaic.version = 11 : i64} {
  func.func @_basic_block_kernel(%arg0: i32, %arg1: memref<1x16x16x4xf32, #tpu.memory_space<vmem>>, %arg2: memref<36x4xf32, #tpu.memory_space<vmem>>, %arg3: memref<36x4xf32, #tpu.memory_space<vmem>>, %arg4: memref<2x4xf32, #tpu.memory_space<vmem>>, %arg5: memref<1x16x16x4xf32, #tpu.memory_space<vmem>>, %arg6: memref<18x25x4xf32, #tpu.memory_space<vmem>>, %arg7: memref<18x25x4xf32, #tpu.memory_space<vmem>>) attributes {dimension_semantics = [#tpu.dimension_semantics<parallel>], iteration_bounds = array<i64: 2>, scalar_prefetch = 0 : i64, scratch_operands = 2 : i64, tpu.core_type = #tpu.core_type<tc>, window_params = [{transform_indices = @transform_0, window_bounds = array<i64: 1, 16, 16, 4>}, {pipeline_mode = #tpu.pipeline_mode<synchronous>, transform_indices = @transform_1, window_bounds = array<i64: 36, 4>}, {pipeline_mode = #tpu.pipeline_mode<synchronous>, transform_indices = @transform_2, window_bounds = array<i64: 36, 4>}, {pipeline_mode = #tpu.pipeline_mode<synchronous>, transform_indices = @transform_3, window_bounds = array<i64: 2, 4>}, {transform_indices = @transform_4, window_bounds = array<i64: 1, 16, 16, 4>}]} {
    %c0 = arith.constant 0 : index
    %c0_0 = arith.constant 0 : index
    %c0_1 = arith.constant 0 : index
    %c0_2 = arith.constant 0 : index
    %0 = vector.load %arg1[%c0, %c0_0, %c0_1, %c0_2] : memref<1x16x16x4xf32, #tpu.memory_space<vmem>>, vector<1x16x16x4xf32>
    %1 = vector.shape_cast %0 : vector<1x16x16x4xf32> to vector<16x16x4xf32>
    %cst = arith.constant 0.000000e+00 : f32
    %2 = vector.broadcast %cst : f32 to vector<1x25x4xf32>
    %c0_3 = arith.constant 0 : index
    %c0_4 = arith.constant 0 : index
    %c0_5 = arith.constant 0 : index
    %3 = vector.load %arg6[%c0_3, %c0_4, %c0_5] : memref<18x25x4xf32, #tpu.memory_space<vmem>>, vector<1x25x4xf32>
    tpu.vector_store %arg6[%c0_3, %c0_4, %c0_5], %2 {strides = array<i32>} : memref<18x25x4xf32, #tpu.memory_space<vmem>>, vector<1x25x4xf32>,
    %c17 = arith.constant 17 : index
    %c0_6 = arith.constant 0 : index
    %c0_7 = arith.constant 0 : index
    %4 = vector.load %arg6[%c17, %c0_6, %c0_7] : memref<18x25x4xf32, #tpu.memory_space<vmem>>, vector<1x25x4xf32>
    tpu.vector_store %arg6[%c17, %c0_6, %c0_7], %2 {strides = array<i32>} : memref<18x25x4xf32, #tpu.memory_space<vmem>>, vector<1x25x4xf32>,
    %cst_8 = arith.constant 0.000000e+00 : f32
    %5 = vector.broadcast %cst_8 : f32 to vector<18x1x4xf32>
    %c0_9 = arith.constant 0 : index
    %c7 = arith.constant 7 : index
    %c0_10 = arith.constant 0 : index
    %6 = vector.load %arg6[%c0_9, %c7, %c0_10] : memref<18x25x4xf32, #tpu.memory_space<vmem>>, vector<18x1x4xf32>
    tpu.vector_store %arg6[%c0_9, %c7, %c0_10], %5 {strides = array<i32>} : memref<18x25x4xf32, #tpu.memory_space<vmem>>, vector<18x1x4xf32>,
    %c0_11 = arith.constant 0 : index
    %c24 = arith.constant 24 : index
    %c0_12 = arith.constant 0 : index
    %7 = vector.load %arg6[%c0_11, %c24, %c0_12] : memref<18x25x4xf32, #tpu.memory_space<vmem>>, vector<18x1x4xf32>
    tpu.vector_store %arg6[%c0_11, %c24, %c0_12], %5 {strides = array<i32>} : memref<18x25x4xf32, #tpu.memory_space<vmem>>, vector<18x1x4xf32>,
    %c1 = arith.constant 1 : index
    %c8 = arith.constant 8 : index
    %c0_13 = arith.constant 0 : index
    %8 = vector.load %arg6[%c1, %c8, %c0_13] : memref<18x25x4xf32, #tpu.memory_space<vmem>>, vector<16x16x4xf32>
    tpu.vector_store %arg6[%c1, %c8, %c0_13], %1 {strides = array<i32>} : memref<18x25x4xf32, #tpu.memory_space<vmem>>, vector<16x16x4xf32>,
    %c0_14 = arith.constant 0 : index
    %c7_15 = arith.constant 7 : index
    %c0_16 = arith.constant 0 : index
    %9 = vector.load %arg6[%c0_14, %c7_15, %c0_16] : memref<18x25x4xf32, #tpu.memory_space<vmem>>, vector<16x16x4xf32>
    %10 = vector.shape_cast %9 : vector<16x16x4xf32> to vector<256x4xf32>
    %c0_17 = arith.constant 0 : index
    %c8_18 = arith.constant 8 : index
    %c0_19 = arith.constant 0 : index
    %11 = vector.load %arg6[%c0_17, %c8_18, %c0_19] : memref<18x25x4xf32, #tpu.memory_space<vmem>>, vector<16x16x4xf32>
    %12 = vector.shape_cast %11 : vector<16x16x4xf32> to vector<256x4xf32>
    %c0_20 = arith.constant 0 : index
    %c9 = arith.constant 9 : index
    %c0_21 = arith.constant 0 : index
    %13 = vector.load %arg6[%c0_20, %c9, %c0_21] : memref<18x25x4xf32, #tpu.memory_space<vmem>>, vector<16x16x4xf32>
    %14 = vector.shape_cast %13 : vector<16x16x4xf32> to vector<256x4xf32>
    %c1_22 = arith.constant 1 : index
    %c7_23 = arith.constant 7 : index
    %c0_24 = arith.constant 0 : index
    %15 = vector.load %arg6[%c1_22, %c7_23, %c0_24] : memref<18x25x4xf32, #tpu.memory_space<vmem>>, vector<16x16x4xf32>
    %16 = vector.shape_cast %15 : vector<16x16x4xf32> to vector<256x4xf32>
    %c1_25 = arith.constant 1 : index
    %c8_26 = arith.constant 8 : index
    %c0_27 = arith.constant 0 : index
    %17 = vector.load %arg6[%c1_25, %c8_26, %c0_27] : memref<18x25x4xf32, #tpu.memory_space<vmem>>, vector<16x16x4xf32>
    %18 = vector.shape_cast %17 : vector<16x16x4xf32> to vector<256x4xf32>
    %c1_28 = arith.constant 1 : index
    %c9_29 = arith.constant 9 : index
    %c0_30 = arith.constant 0 : index
    %19 = vector.load %arg6[%c1_28, %c9_29, %c0_30] : memref<18x25x4xf32, #tpu.memory_space<vmem>>, vector<16x16x4xf32>
    %20 = vector.shape_cast %19 : vector<16x16x4xf32> to vector<256x4xf32>
    %c2 = arith.constant 2 : index
    %c7_31 = arith.constant 7 : index
    %c0_32 = arith.constant 0 : index
    %21 = vector.load %arg6[%c2, %c7_31, %c0_32] : memref<18x25x4xf32, #tpu.memory_space<vmem>>, vector<16x16x4xf32>
    %22 = vector.shape_cast %21 : vector<16x16x4xf32> to vector<256x4xf32>
    %c2_33 = arith.constant 2 : index
    %c8_34 = arith.constant 8 : index
    %c0_35 = arith.constant 0 : index
    %23 = vector.load %arg6[%c2_33, %c8_34, %c0_35] : memref<18x25x4xf32, #tpu.memory_space<vmem>>, vector<16x16x4xf32>
    %24 = vector.shape_cast %23 : vector<16x16x4xf32> to vector<256x4xf32>
    %c2_36 = arith.constant 2 : index
    %c9_37 = arith.constant 9 : index
    %c0_38 = arith.constant 0 : index
    %25 = vector.load %arg6[%c2_36, %c9_37, %c0_38] : memref<18x25x4xf32, #tpu.memory_space<vmem>>, vector<16x16x4xf32>
    %26 = vector.shape_cast %25 : vector<16x16x4xf32> to vector<256x4xf32>
    %27 = tpu.concatenate %10, %12, %14, %16, %18, %20, %22, %24, %26 in 1 : vector<256x4xf32>, vector<256x4xf32>, vector<256x4xf32>, vector<256x4xf32>, vector<256x4xf32>, vector<256x4xf32>, vector<256x4xf32>, vector<256x4xf32>, vector<256x4xf32> -> vector<256x36xf32>
    %c0_39 = arith.constant 0 : index
    %c0_40 = arith.constant 0 : index
    %28 = vector.load %arg2[%c0_39, %c0_40] : memref<36x4xf32, #tpu.memory_space<vmem>>, vector<36x4xf32>
    %cst_41 = arith.constant dense<0.000000e+00> : vector<256x4xf32>
    %29 = tpu.matmul %27, %28, %cst_41 {dimension_numbers = #tpu.dot_dimension_numbers<[1], [0], [0], [1], [0, 0, 1, 1], [], []>} : vector<256x36xf32>, vector<36x4xf32>, vector<256x4xf32> -> vector<256x4xf32>
    %c0_42 = arith.constant 0 : index
    %c0_43 = arith.constant 0 : index
    %30 = vector.load %arg4[%c0_42, %c0_43] : memref<2x4xf32, #tpu.memory_space<vmem>>, vector<1x4xf32>
    %31 = vector.broadcast %30 : vector<1x4xf32> to vector<256x4xf32>
    %32 = arith.addf %29, %31 : vector<256x4xf32>
    %cst_44 = arith.constant 0.000000e+00 : f32
    %33 = vector.broadcast %cst_44 : f32 to vector<256x4xf32>
    %34 = arith.maximumf %32, %33 : vector<256x4xf32>
    %cst_45 = arith.constant 0.000000e+00 : f32
    %35 = vector.broadcast %cst_45 : f32 to vector<1x25x4xf32>
    %c0_46 = arith.constant 0 : index
    %c0_47 = arith.constant 0 : index
    %c0_48 = arith.constant 0 : index
    %36 = vector.load %arg7[%c0_46, %c0_47, %c0_48] : memref<18x25x4xf32, #tpu.memory_space<vmem>>, vector<1x25x4xf32>
    tpu.vector_store %arg7[%c0_46, %c0_47, %c0_48], %35 {strides = array<i32>} : memref<18x25x4xf32, #tpu.memory_space<vmem>>, vector<1x25x4xf32>,
    %c17_49 = arith.constant 17 : index
    %c0_50 = arith.constant 0 : index
    %c0_51 = arith.constant 0 : index
    %37 = vector.load %arg7[%c17_49, %c0_50, %c0_51] : memref<18x25x4xf32, #tpu.memory_space<vmem>>, vector<1x25x4xf32>
    tpu.vector_store %arg7[%c17_49, %c0_50, %c0_51], %35 {strides = array<i32>} : memref<18x25x4xf32, #tpu.memory_space<vmem>>, vector<1x25x4xf32>,
    %cst_52 = arith.constant 0.000000e+00 : f32
    %38 = vector.broadcast %cst_52 : f32 to vector<18x1x4xf32>
    %c0_53 = arith.constant 0 : index
    %c7_54 = arith.constant 7 : index
    %c0_55 = arith.constant 0 : index
    %39 = vector.load %arg7[%c0_53, %c7_54, %c0_55] : memref<18x25x4xf32, #tpu.memory_space<vmem>>, vector<18x1x4xf32>
    tpu.vector_store %arg7[%c0_53, %c7_54, %c0_55], %38 {strides = array<i32>} : memref<18x25x4xf32, #tpu.memory_space<vmem>>, vector<18x1x4xf32>,
    %c0_56 = arith.constant 0 : index
    %c24_57 = arith.constant 24 : index
    %c0_58 = arith.constant 0 : index
    %40 = vector.load %arg7[%c0_56, %c24_57, %c0_58] : memref<18x25x4xf32, #tpu.memory_space<vmem>>, vector<18x1x4xf32>
    tpu.vector_store %arg7[%c0_56, %c24_57, %c0_58], %38 {strides = array<i32>} : memref<18x25x4xf32, #tpu.memory_space<vmem>>, vector<18x1x4xf32>,
    %41 = vector.shape_cast %34 : vector<256x4xf32> to vector<16x16x4xf32>
    %c1_59 = arith.constant 1 : index
    %c8_60 = arith.constant 8 : index
    %c0_61 = arith.constant 0 : index
    %42 = vector.load %arg7[%c1_59, %c8_60, %c0_61] : memref<18x25x4xf32, #tpu.memory_space<vmem>>, vector<16x16x4xf32>
    tpu.vector_store %arg7[%c1_59, %c8_60, %c0_61], %41 {strides = array<i32>} : memref<18x25x4xf32, #tpu.memory_space<vmem>>, vector<16x16x4xf32>,
    %c0_62 = arith.constant 0 : index
    %c7_63 = arith.constant 7 : index
    %c0_64 = arith.constant 0 : index
    %43 = vector.load %arg7[%c0_62, %c7_63, %c0_64] : memref<18x25x4xf32, #tpu.memory_space<vmem>>, vector<16x16x4xf32>
    %44 = vector.shape_cast %43 : vector<16x16x4xf32> to vector<256x4xf32>
    %c0_65 = arith.constant 0 : index
    %c8_66 = arith.constant 8 : index
    %c0_67 = arith.constant 0 : index
    %45 = vector.load %arg7[%c0_65, %c8_66, %c0_67] : memref<18x25x4xf32, #tpu.memory_space<vmem>>, vector<16x16x4xf32>
    %46 = vector.shape_cast %45 : vector<16x16x4xf32> to vector<256x4xf32>
    %c0_68 = arith.constant 0 : index
    %c9_69 = arith.constant 9 : index
    %c0_70 = arith.constant 0 : index
    %47 = vector.load %arg7[%c0_68, %c9_69, %c0_70] : memref<18x25x4xf32, #tpu.memory_space<vmem>>, vector<16x16x4xf32>
    %48 = vector.shape_cast %47 : vector<16x16x4xf32> to vector<256x4xf32>
    %c1_71 = arith.constant 1 : index
    %c7_72 = arith.constant 7 : index
    %c0_73 = arith.constant 0 : index
    %49 = vector.load %arg7[%c1_71, %c7_72, %c0_73] : memref<18x25x4xf32, #tpu.memory_space<vmem>>, vector<16x16x4xf32>
    %50 = vector.shape_cast %49 : vector<16x16x4xf32> to vector<256x4xf32>
    %c1_74 = arith.constant 1 : index
    %c8_75 = arith.constant 8 : index
    %c0_76 = arith.constant 0 : index
    %51 = vector.load %arg7[%c1_74, %c8_75, %c0_76] : memref<18x25x4xf32, #tpu.memory_space<vmem>>, vector<16x16x4xf32>
    %52 = vector.shape_cast %51 : vector<16x16x4xf32> to vector<256x4xf32>
    %c1_77 = arith.constant 1 : index
    %c9_78 = arith.constant 9 : index
    %c0_79 = arith.constant 0 : index
    %53 = vector.load %arg7[%c1_77, %c9_78, %c0_79] : memref<18x25x4xf32, #tpu.memory_space<vmem>>, vector<16x16x4xf32>
    %54 = vector.shape_cast %53 : vector<16x16x4xf32> to vector<256x4xf32>
    %c2_80 = arith.constant 2 : index
    %c7_81 = arith.constant 7 : index
    %c0_82 = arith.constant 0 : index
    %55 = vector.load %arg7[%c2_80, %c7_81, %c0_82] : memref<18x25x4xf32, #tpu.memory_space<vmem>>, vector<16x16x4xf32>
    %56 = vector.shape_cast %55 : vector<16x16x4xf32> to vector<256x4xf32>
    %c2_83 = arith.constant 2 : index
    %c8_84 = arith.constant 8 : index
    %c0_85 = arith.constant 0 : index
    %57 = vector.load %arg7[%c2_83, %c8_84, %c0_85] : memref<18x25x4xf32, #tpu.memory_space<vmem>>, vector<16x16x4xf32>
    %58 = vector.shape_cast %57 : vector<16x16x4xf32> to vector<256x4xf32>
    %c2_86 = arith.constant 2 : index
    %c9_87 = arith.constant 9 : index
    %c0_88 = arith.constant 0 : index
    %59 = vector.load %arg7[%c2_86, %c9_87, %c0_88] : memref<18x25x4xf32, #tpu.memory_space<vmem>>, vector<16x16x4xf32>
    %60 = vector.shape_cast %59 : vector<16x16x4xf32> to vector<256x4xf32>
    %61 = tpu.concatenate %44, %46, %48, %50, %52, %54, %56, %58, %60 in 1 : vector<256x4xf32>, vector<256x4xf32>, vector<256x4xf32>, vector<256x4xf32>, vector<256x4xf32>, vector<256x4xf32>, vector<256x4xf32>, vector<256x4xf32>, vector<256x4xf32> -> vector<256x36xf32>
    %c0_89 = arith.constant 0 : index
    %c0_90 = arith.constant 0 : index
    %62 = vector.load %arg3[%c0_89, %c0_90] : memref<36x4xf32, #tpu.memory_space<vmem>>, vector<36x4xf32>
    %cst_91 = arith.constant dense<0.000000e+00> : vector<256x4xf32>
    %63 = tpu.matmul %61, %62, %cst_91 {dimension_numbers = #tpu.dot_dimension_numbers<[1], [0], [0], [1], [0, 0, 1, 1], [], []>} : vector<256x36xf32>, vector<36x4xf32>, vector<256x4xf32> -> vector<256x4xf32>
    %c1_92 = arith.constant 1 : index
    %c0_93 = arith.constant 0 : index
    %64 = vector.load %arg4[%c1_92, %c0_93] : memref<2x4xf32, #tpu.memory_space<vmem>>, vector<1x4xf32>
    %65 = vector.broadcast %64 : vector<1x4xf32> to vector<256x4xf32>
    %66 = arith.addf %63, %65 : vector<256x4xf32>
    %67 = vector.shape_cast %1 : vector<16x16x4xf32> to vector<256x4xf32>
    %68 = arith.addf %66, %67 : vector<256x4xf32>
    %cst_94 = arith.constant 0.000000e+00 : f32
    %69 = vector.broadcast %cst_94 : f32 to vector<256x4xf32>
    %70 = arith.maximumf %68, %69 : vector<256x4xf32>
    %71 = vector.shape_cast %70 : vector<256x4xf32> to vector<1x16x16x4xf32>
    %c0_95 = arith.constant 0 : index
    %c0_96 = arith.constant 0 : index
    %c0_97 = arith.constant 0 : index
    %c0_98 = arith.constant 0 : index
    %72 = vector.load %arg5[%c0_95, %c0_96, %c0_97, %c0_98] : memref<1x16x16x4xf32, #tpu.memory_space<vmem>>, vector<1x16x16x4xf32>
    tpu.vector_store %arg5[%c0_95, %c0_96, %c0_97, %c0_98], %71 {strides = array<i32>} : memref<1x16x16x4xf32, #tpu.memory_space<vmem>>, vector<1x16x16x4xf32>,
    return
  }
  func.func @transform_0(%arg0: i32) -> (i32, i32, i32, i32) {
    %c0_i32 = arith.constant 0 : i32
    %c0_i32_0 = arith.constant 0 : i32
    %c0_i32_1 = arith.constant 0 : i32
    %c0_i32_2 = arith.constant 0 : i32
    return %arg0, %c0_i32, %c0_i32_0, %c0_i32_1 : i32, i32, i32, i32
  }
  func.func @transform_1(%arg0: i32) -> (i32, i32) {
    %c0_i32 = arith.constant 0 : i32
    %c0_i32_0 = arith.constant 0 : i32
    %c0_i32_1 = arith.constant 0 : i32
    return %c0_i32, %c0_i32_0 : i32, i32
  }
  func.func @transform_2(%arg0: i32) -> (i32, i32) {
    %c0_i32 = arith.constant 0 : i32
    %c0_i32_0 = arith.constant 0 : i32
    %c0_i32_1 = arith.constant 0 : i32
    return %c0_i32, %c0_i32_0 : i32, i32
  }
  func.func @transform_3(%arg0: i32) -> (i32, i32) {
    %c0_i32 = arith.constant 0 : i32
    %c0_i32_0 = arith.constant 0 : i32
    %c0_i32_1 = arith.constant 0 : i32
    return %c0_i32, %c0_i32_0 : i32, i32
  }
  func.func @transform_4(%arg0: i32) -> (i32, i32, i32, i32) {
    %c0_i32 = arith.constant 0 : i32
    %c0_i32_0 = arith.constant 0 : i32
    %c0_i32_1 = arith.constant 0 : i32
    %c0_i32_2 = arith.constant 0 : i32
    return %arg0, %c0_i32, %c0_i32_0, %c0_i32_1 : i32, i32, i32, i32
  }
}

</mosaic_0001>

<llo_original>
// kernel: tpu_custom_call.1
$region0: #{tpu_custom_call.1}
  #allocation0 [shape = 'u32[]', space=smem, size = 0x4, offset = 0x4, fixed_abs, tag = 'smem constant byte address 0x4 - core index']
  #allocation1 [shape = 'u32[144,128]{1,0:T(1,128)}', space=vmem, size = 0x12000, scoped, tag = 'internal scratch']
  #allocation2 [shape = 'f32[18,25,4]{2,1,0:T(8,128)}', space=vmem, size = 0x48000, scoped, tag = 'scratch operand']
  #allocation3 [shape = 'f32[18,25,4]{2,1,0:T(8,128)}', space=vmem, size = 0x48000, scoped, tag = 'scratch operand']
  %s0 = inlined_call_operand.vmem [shape: f32[2,16,16,4], index: 0, kind: input, shape index: {}]
  %s1 = inlined_call_operand.vmem [shape: f32[36,4], index: 1, kind: input, shape index: {}]
  %s2 = inlined_call_operand.vmem [shape: f32[36,4], index: 2, kind: input, shape index: {}]
  %s3 = inlined_call_operand.vmem [shape: f32[2,4], index: 3, kind: input, shape index: {}]
  %s4 = inlined_call_operand.vmem [shape: f32[2,16,16,4], index: 4, kind: output, shape index: {}]
  %s5 = sld [smem:[#allocation0]]
  $region49: #{tpu_custom_call.1} parent=0
    _
  %s7 = ssub.s32 1, %s5
  %s8 = scalar_select 0, %s7, %s5
  loop: start=0, step=1, limit=4
  $region2: #{tpu_custom_call.1} parent=0 // loop_pre_header
    _
  $region3: #{tpu_custom_call.1} parent=0 // loop_header
    %s10 = sphi 0, %s14
    %p11 = scmp.ge.s32.totalorder %s10, 4
    %s20 = sphi 0, %s22
    %s23 = sphi 0, %s20
    %s24 = sphi 0, %s23
    %s40 = sphi 0, %s24
    %s44 = sphi 0, %s44
    %s46 = sphi 0, %s44
    %s47 = sphi 0, %s46
    %s61 = sphi 0, %s47
    %s65 = sphi 0, %s65
    %s67 = sphi 0, %s65
    %s68 = sphi 0, %s67
    %s82 = sphi 0, %s68
    %s86 = sphi 0, %s86
    %s88 = sphi 0, %s86
    %s89 = sphi 0, %s88
    %s103 = sphi 0, %s89
    %s109 = sphi 0, %s111
    %s112 = sphi 0, %s109
    %s113 = sphi 0, %s112
    %s129 = sphi 0, %s113
  $region4: #{tpu_custom_call.1} parent=0 // loop_header_branch
    %13 = sbr.rel (%p11) target = $region8
  $region5: #{tpu_custom_call.1} parent=0 // loop_body
    %s15 = ssub.s32 %s10, 1
    %s16 = ssub.s32 %s10, 2
    %s17 = sadd.s32 %s10, 1
    %s18 = ssub.s32 %s10, %s17
    %p19 = scmp.eq.s32.totalorder %s18, 0
    %s21 = sadd.s32 %s20, 1
    %s22 = scalar_select %p19, %s20, %s21
    %p25 = pneg %p19
    %p26 = scmp.eq.s32.totalorder %s10, 1
    %p27 = por %p25, %p26
    %p28 = scmp.ne.s32.totalorder %s20, %s23
    %p29 = scmp.eq.s32.totalorder %s10, 0
    %p30 = por %p28, %p29
    %p31 = scmp.ne.s32.totalorder %s20, %s23
    %p32 = scmp.eq.s32.totalorder %s15, 1
    %p33 = por %p31, %p32
    %p34 = scmp.ne.s32.totalorder %s23, %s24
    %p35 = scmp.eq.s32.totalorder %s15, 0
    %p36 = por %p34, %p35
    %p37 = scmp.ne.s32.totalorder %s23, %s24
    %p38 = scmp.eq.s32.totalorder %s16, 1
    %p39 = por %p37, %p38
    %p41 = scmp.ne.s32.totalorder %s24, %s40
    %p42 = scmp.eq.s32.totalorder %s16, 0
    %p43 = por %p41, %p42
    %s45 = sadd.s32 %s44, 1
    %p48 = scmp.eq.s32.totalorder %s10, 1
    %p49 = scmp.ne.s32.totalorder %s44, %s46
    %p50 = scmp.eq.s32.totalorder %s10, 0
    %p51 = por %p49, %p50
    %p52 = scmp.ne.s32.totalorder %s44, %s46
    %p53 = scmp.eq.s32.totalorder %s15, 1
    %p54 = por %p52, %p53
    %p55 = scmp.ne.s32.totalorder %s46, %s47
    %p56 = scmp.eq.s32.totalorder %s15, 0
    %p57 = por %p55, %p56
    %p58 = scmp.ne.s32.totalorder %s46, %s47
    %p59 = scmp.eq.s32.totalorder %s16, 1
    %p60 = por %p58, %p59
    %p62 = scmp.ne.s32.totalorder %s47, %s61
    %p63 = scmp.eq.s32.totalorder %s16, 0
    %p64 = por %p62, %p63
    %s66 = sadd.s32 %s65, 1
    %p69 = scmp.eq.s32.totalorder %s10, 1
    %p70 = scmp.ne.s32.totalorder %s65, %s67
    %p71 = scmp.eq.s32.totalorder %s10, 0
    %p72 = por %p70, %p71
    %p73 = scmp.ne.s32.totalorder %s65, %s67
    %p74 = scmp.eq.s32.totalorder %s15, 1
    %p75 = por %p73, %p74
    %p76 = scmp.ne.s32.totalorder %s67, %s68
    %p77 = scmp.eq.s32.totalorder %s15, 0
    %p78 = por %p76, %p77
    %p79 = scmp.ne.s32.totalorder %s67, %s68
    %p80 = scmp.eq.s32.totalorder %s16, 1
    %p81 = por %p79, %p80
    %p83 = scmp.ne.s32.totalorder %s68, %s82
    %p84 = scmp.eq.s32.totalorder %s16, 0
    %p85 = por %p83, %p84
    %s87 = sadd.s32 %s86, 1
    %p90 = scmp.eq.s32.totalorder %s10, 1
    %p91 = scmp.ne.s32.totalorder %s86, %s88
    %p92 = scmp.eq.s32.totalorder %s10, 0
    %p93 = por %p91, %p92
    %p94 = scmp.ne.s32.totalorder %s86, %s88
    %p95 = scmp.eq.s32.totalorder %s15, 1
    %p96 = por %p94, %p95
    %p97 = scmp.ne.s32.totalorder %s88, %s89
    %p98 = scmp.eq.s32.totalorder %s15, 0
    %p99 = por %p97, %p98
    %p100 = scmp.ne.s32.totalorder %s88, %s89
    %p101 = scmp.eq.s32.totalorder %s16, 1
    %p102 = por %p100, %p101
    %p104 = scmp.ne.s32.totalorder %s89, %s103
    %p105 = scmp.eq.s32.totalorder %s16, 0
    %p106 = por %p104, %p105
    %s107 = ssub.s32 %s10, %s17
    %p108 = scmp.eq.s32.totalorder %s107, 0
    %s110 = sadd.s32 %s109, 1
    %s111 = scalar_select %p108, %s109, %s110
    %p114 = pneg %p108
    %p115 = scmp.eq.s32.totalorder %s10, 1
    %p116 = por %p114, %p115
    %p117 = scmp.ne.s32.totalorder %s109, %s112
    %p118 = scmp.eq.s32.totalorder %s10, 0
    %p119 = por %p117, %p118
    %p120 = scmp.ne.s32.totalorder %s109, %s112
    %p121 = scmp.eq.s32.totalorder %s15, 1
    %p122 = por %p120, %p121
    %p123 = scmp.ne.s32.totalorder %s112, %s113
    %p124 = scmp.eq.s32.totalorder %s15, 0
    %p125 = por %p123, %p124
    %p126 = scmp.ne.s32.totalorder %s112, %s113
    %p127 = scmp.eq.s32.totalorder %s16, 1
    %p128 = por %p126, %p127
    %p130 = scmp.ne.s32.totalorder %s113, %s129
    %p131 = scmp.eq.s32.totalorder %s16, 0
    %p132 = por %p130, %p131
    %p133 = scmp.le.s32.totalorder 1, %s10
    %p134 = scmp.lt.s32.totalorder %s10, 3
    %p135 = pnand %p133, %p134
    %p136 = pneg %p135
    // Predicated region
    $region9: #{tpu_custom_call.1} parent=5 // pred_check
      _
    $region10: #{tpu_custom_call.1} parent=5 // pred_check_branch
      %138 = sbr.rel (%p135) target = $region12
    $region11: #{tpu_custom_call.1} parent=5 // pred_region
      %s139 = ssub.s32 %s10, 1
      // Predicated region
      $region13: #{tpu_custom_call.1} parent=11 // pred_check
        %p140 = pneg %p57
      $region14: #{tpu_custom_call.1} parent=11 // pred_check_branch
        %142 = sbr.rel (%p140) target = $region16
      $region15: #{tpu_custom_call.1} parent=11 // pred_region
        _
      $region16: #{tpu_custom_call.1} parent=11 // pred_fallthru
        _
      // Predicated region
      $region17: #{tpu_custom_call.1} parent=11 // pred_check
        %p143 = pneg %p78
      $region18: #{tpu_custom_call.1} parent=11 // pred_check_branch
        %145 = sbr.rel (%p143) target = $region20
      $region19: #{tpu_custom_call.1} parent=11 // pred_region
        _
      $region20: #{tpu_custom_call.1} parent=11 // pred_fallthru
        _
      // Predicated region
      $region21: #{tpu_custom_call.1} parent=11 // pred_check
        %p146 = pneg %p99
      $region22: #{tpu_custom_call.1} parent=11 // pred_check_branch
        %148 = sbr.rel (%p146) target = $region24
      $region23: #{tpu_custom_call.1} parent=11 // pred_region
        _
      $region24: #{tpu_custom_call.1} parent=11 // pred_fallthru
        _
    $region12: #{tpu_custom_call.1} parent=5 // pred_fallthru
      _
    %p149 = scmp.lt.s32.totalorder %s10, 2
    // Predicated region
    $region25: #{tpu_custom_call.1} parent=5 // pred_check
      %p150 = pneg %p149
    $region26: #{tpu_custom_call.1} parent=5 // pred_check_branch
      %152 = sbr.rel (%p150) target = $region28
    $region27: #{tpu_custom_call.1} parent=5 // pred_region
      // Predicated region
      $region29: #{tpu_custom_call.1} parent=27 // pred_check
        %p153 = pneg %p30
      $region30: #{tpu_custom_call.1} parent=27 // pred_check_branch
        %155 = sbr.rel (%p153) target = $region32
      $region31: #{tpu_custom_call.1} parent=27 // pred_region
        %p156 = scmp.lt.s32.totalorder %s10, 1
        %s157 = scalar_select %p156, %s10, 1
        %s158 = smul.addr %s157, 32
        %s159 = smul.addr %s158, 8
        %s160 = scalar_lea.vmem %s0, %s159
      $region32: #{tpu_custom_call.1} parent=27 // pred_fallthru
        _
    $region28: #{tpu_custom_call.1} parent=5 // pred_fallthru
      _
    %p161 = scmp.le.s32.totalorder 1, %s10
    %p162 = scmp.lt.s32.totalorder %s10, 3
    %p163 = pnand %p161, %p162
    %p164 = pneg %p163
    // Predicated region
    $region33: #{tpu_custom_call.1} parent=5 // pred_check
      _
    $region34: #{tpu_custom_call.1} parent=5 // pred_check_branch
      %166 = sbr.rel (%p163) target = $region36
    $region35: #{tpu_custom_call.1} parent=5 // pred_region
      %s167 = ssub.s32 %s10, 1
      %p168 = scmp.lt.s32.totalorder %s15, 1
      %s169 = scalar_select %p168, %s15, 1
      %s170 = smul.addr %s169, 32
      %s171 = smul.addr %s170, 8
      %s172 = scalar_lea.vmem %s0, %s171
      %p173 = pneg %p36
      %p174 = pneg %p33
      %p175 = pneg %p57
      %p176 = pneg %p54
      %p177 = pneg %p78
      %p178 = pneg %p75
      %p179 = pneg %p99
      %p180 = pneg %p96
      %p181 = pneg %p125
      %p182 = pneg %p122
      %p183 = scmp.lt.s32.totalorder %s15, 1
      %s184 = scalar_select %p183, %s15, 1
      %s185 = smul.addr %s184, 32
      %s186 = smul.addr %s185, 8
      %s187 = scalar_lea.vmem %s4, %s186
      %p188 = scmp.lt.s32.totalorder %s15, 1
      %s189 = scalar_select %p188, %s15, 1
      %s190 = smul.addr %s189, 32
      %s191 = smul.addr %s190, 8
      %s192 = scalar_lea.vmem %s0, %s191
      %p193 = scmp.lt.s32.totalorder %s15, 1
      %s194 = scalar_select %p193, %s15, 1
      %s195 = smul.addr %s194, 32
      %s196 = smul.addr %s195, 8
      %s197 = scalar_lea.vmem %s4, %s196
      %v198 = vld [vmem:[%s192] sm:$0xff]
      %v199 = vld [vmem:[%s192 + $0x8] sm:$0xff]
      %v200 = vld [vmem:[%s192 + $0x10] sm:$0xff]
      %v201 = vld [vmem:[%s192 + $0x18] sm:$0xff]
      %v202 = vld [vmem:[%s192 + $0x20] sm:$0xff]
      %v203 = vld [vmem:[%s192 + $0x28] sm:$0xff]
      %v204 = vld [vmem:[%s192 + $0x30] sm:$0xff]
      %v205 = vld [vmem:[%s192 + $0x38] sm:$0xff]
      %v206 = vld [vmem:[%s192 + $0x40] sm:$0xff]
      %v207 = vld [vmem:[%s192 + $0x48] sm:$0xff]
      %v208 = vld [vmem:[%s192 + $0x50] sm:$0xff]
      %v209 = vld [vmem:[%s192 + $0x58] sm:$0xff]
      %v210 = vld [vmem:[%s192 + $0x60] sm:$0xff]
      %v211 = vld [vmem:[%s192 + $0x68] sm:$0xff]
      %v212 = vld [vmem:[%s192 + $0x70] sm:$0xff]
      %v213 = vld [vmem:[%s192 + $0x78] sm:$0xff]
      %v214 = vld [vmem:[%s192 + $0x80] sm:$0xff]
      %v215 = vld [vmem:[%s192 + $0x88] sm:$0xff]
      %v216 = vld [vmem:[%s192 + $0x90] sm:$0xff]
      %v217 = vld [vmem:[%s192 + $0x98] sm:$0xff]
      %v218 = vld [vmem:[%s192 + $0xa0] sm:$0xff]
      %v219 = vld [vmem:[%s192 + $0xa8] sm:$0xff]
      %v220 = vld [vmem:[%s192 + $0xb0] sm:$0xff]
      %v221 = vld [vmem:[%s192 + $0xb8] sm:$0xff]
      %v222 = vld [vmem:[%s192 + $0xc0] sm:$0xff]
      %v223 = vld [vmem:[%s192 + $0xc8] sm:$0xff]
      %v224 = vld [vmem:[%s192 + $0xd0] sm:$0xff]
      %v225 = vld [vmem:[%s192 + $0xd8] sm:$0xff]
      %v226 = vld [vmem:[%s192 + $0xe0] sm:$0xff]
      %v227 = vld [vmem:[%s192 + $0xe8] sm:$0xff]
      %v228 = vld [vmem:[%s192 + $0xf0] sm:$0xff]
      %v229 = vld [vmem:[%s192 + $0xf8] sm:$0xff]
      %vm230 = vcmask 31744
      %231 = vst.msk [vmem:[#allocation2] sm:$0xff] %vm230, 0.0
      %232 = vst.msk [vmem:[#allocation2 + $0x8] sm:$0xff] %vm230, 0.0
      %233 = vst.msk [vmem:[#allocation2 + $0x10] sm:$0xff] %vm230, 0.0
      %vm234 = vcmask 24576
      %235 = vst.msk [vmem:[#allocation2 + $0x18] sm:$0x1] %vm234, 0.0
      %s236 = scalar_lea.vmem [#allocation2], 544
      %237 = vst.msk [vmem:[%s236] sm:$0xff] %vm230, 0.0
      %238 = vst.msk [vmem:[%s236 + $0x8] sm:$0xff] %vm230, 0.0
      %239 = vst.msk [vmem:[%s236 + $0x10] sm:$0xff] %vm230, 0.0
      %240 = vst.msk [vmem:[%s236 + $0x18] sm:$0x1] %vm234, 0.0
      %241 = vst.msk [vmem:[#allocation2 + $0x7] sm:$0x1] %vm234, 0.0
      %242 = vst.msk [vmem:[#allocation2 + $0x27] sm:$0x1] %vm234, 0.0
      %243 = vst.msk [vmem:[#allocation2 + $0x47] sm:$0x1] %vm234, 0.0
      %244 = vst.msk [vmem:[#allocation2 + $0x67] sm:$0x1] %vm234, 0.0
      %245 = vst.msk [vmem:[#allocation2 + $0x87] sm:$0x1] %vm234, 0.0
      %246 = vst.msk [vmem:[#allocation2 + $0xa7] sm:$0x1] %vm234, 0.0
      %247 = vst.msk [vmem:[#allocation2 + $0xc7] sm:$0x1] %vm234, 0.0
      %248 = vst.msk [vmem:[#allocation2 + $0xe7] sm:$0x1] %vm234, 0.0
      %249 = vst.msk [vmem:[#allocation2 + $0x107] sm:$0x1] %vm234, 0.0
      %250 = vst.msk [vmem:[#allocation2 + $0x127] sm:$0x1] %vm234, 0.0
      %251 = vst.msk [vmem:[#allocation2 + $0x147] sm:$0x1] %vm234, 0.0
      %252 = vst.msk [vmem:[#allocation2 + $0x167] sm:$0x1] %vm234, 0.0
      %253 = vst.msk [vmem:[#allocation2 + $0x187] sm:$0x1] %vm234, 0.0
      %254 = vst.msk [vmem:[#allocation2 + $0x1a7] sm:$0x1] %vm234, 0.0
      %255 = vst.msk [vmem:[#allocation2 + $0x1c7] sm:$0x1] %vm234, 0.0
      %256 = vst.msk [vmem:[#allocation2 + $0x1e7] sm:$0x1] %vm234, 0.0
      %257 = vst.msk [vmem:[#allocation2 + $0x207] sm:$0x1] %vm234, 0.0
      %258 = vst.msk [vmem:[#allocation2 + $0x227] sm:$0x1] %vm234, 0.0
      %259 = vst.msk [vmem:[#allocation2 + $0x18] sm:$0x1] %vm234, 0.0
      %260 = vst.msk [vmem:[#allocation2 + $0x38] sm:$0x1] %vm234, 0.0
      %261 = vst.msk [vmem:[#allocation2 + $0x58] sm:$0x1] %vm234, 0.0
      %262 = vst.msk [vmem:[#allocation2 + $0x78] sm:$0x1] %vm234, 0.0
      %263 = vst.msk [vmem:[#allocation2 + $0x98] sm:$0x1] %vm234, 0.0
      %264 = vst.msk [vmem:[#allocation2 + $0xb8] sm:$0x1] %vm234, 0.0
      %265 = vst.msk [vmem:[#allocation2 + $0xd8] sm:$0x1] %vm234, 0.0
      %266 = vst.msk [vmem:[#allocation2 + $0xf8] sm:$0x1] %vm234, 0.0
      %267 = vst.msk [vmem:[#allocation2 + $0x118] sm:$0x1] %vm234, 0.0
      %268 = vst.msk [vmem:[#allocation2 + $0x138] sm:$0x1] %vm234, 0.0
      %269 = vst.msk [vmem:[#allocation2 + $0x158] sm:$0x1] %vm234, 0.0
      %270 = vst.msk [vmem:[#allocation2 + $0x178] sm:$0x1] %vm234, 0.0
      %271 = vst.msk [vmem:[#allocation2 + $0x198] sm:$0x1] %vm234, 0.0
      %272 = vst.msk [vmem:[#allocation2 + $0x1b8] sm:$0x1] %vm234, 0.0
      %273 = vst.msk [vmem:[#allocation2 + $0x1d8] sm:$0x1] %vm234, 0.0
      %274 = vst.msk [vmem:[#allocation2 + $0x1f8] sm:$0x1] %vm234, 0.0
      %275 = vst.msk [vmem:[#allocation2 + $0x218] sm:$0x1] %vm234, 0.0
      %276 = vst.msk [vmem:[#allocation2 + $0x238] sm:$0x1] %vm234, 0.0
      %s277 = scalar_lea.vmem [#allocation2], 32
      %278 = vst.msk [vmem:[%s277 + $0x8] sm:$0xff] %vm230, %v198
      %279 = vst.msk [vmem:[%s277 + $0x10] sm:$0xff] %vm230, %v199
      %280 = vst.msk [vmem:[%s277 + $0x28] sm:$0xff] %vm230, %v200
      %281 = vst.msk [vmem:[%s277 + $0x30] sm:$0xff] %vm230, %v201
      %282 = vst.msk [vmem:[%s277 + $0x48] sm:$0xff] %vm230, %v202
      %283 = vst.msk [vmem:[%s277 + $0x50] sm:$0xff] %vm230, %v203
      %284 = vst.msk [vmem:[%s277 + $0x68] sm:$0xff] %vm230, %v204
      %285 = vst.msk [vmem:[%s277 + $0x70] sm:$0xff] %vm230, %v205
      %286 = vst.msk [vmem:[%s277 + $0x88] sm:$0xff] %vm230, %v206
      %287 = vst.msk [vmem:[%s277 + $0x90] sm:$0xff] %vm230, %v207
      %288 = vst.msk [vmem:[%s277 + $0xa8] sm:$0xff] %vm230, %v208
      %289 = vst.msk [vmem:[%s277 + $0xb0] sm:$0xff] %vm230, %v209
      %290 = vst.msk [vmem:[%s277 + $0xc8] sm:$0xff] %vm230, %v210
      %291 = vst.msk [vmem:[%s277 + $0xd0] sm:$0xff] %vm230, %v211
      %292 = vst.msk [vmem:[%s277 + $0xe8] sm:$0xff] %vm230, %v212
      %293 = vst.msk [vmem:[%s277 + $0xf0] sm:$0xff] %vm230, %v213
      %294 = vst.msk [vmem:[%s277 + $0x108] sm:$0xff] %vm230, %v214
      %295 = vst.msk [vmem:[%s277 + $0x110] sm:$0xff] %vm230, %v215
      %296 = vst.msk [vmem:[%s277 + $0x128] sm:$0xff] %vm230, %v216
      %297 = vst.msk [vmem:[%s277 + $0x130] sm:$0xff] %vm230, %v217
      %298 = vst.msk [vmem:[%s277 + $0x148] sm:$0xff] %vm230, %v218
      %299 = vst.msk [vmem:[%s277 + $0x150] sm:$0xff] %vm230, %v219
      %300 = vst.msk [vmem:[%s277 + $0x168] sm:$0xff] %vm230, %v220
      %301 = vst.msk [vmem:[%s277 + $0x170] sm:$0xff] %vm230, %v221
      %302 = vst.msk [vmem:[%s277 + $0x188] sm:$0xff] %vm230, %v222
      %303 = vst.msk [vmem:[%s277 + $0x190] sm:$0xff] %vm230, %v223
      %304 = vst.msk [vmem:[%s277 + $0x1a8] sm:$0xff] %vm230, %v224
      %305 = vst.msk [vmem:[%s277 + $0x1b0] sm:$0xff] %vm230, %v225
      %306 = vst.msk [vmem:[%s277 + $0x1c8] sm:$0xff] %vm230, %v226
      %307 = vst.msk [vmem:[%s277 + $0x1d0] sm:$0xff] %vm230, %v227
      %308 = vst.msk [vmem:[%s277 + $0x1e8] sm:$0xff] %vm230, %v228
      %309 = vst.msk [vmem:[%s277 + $0x1f0] sm:$0xff] %vm230, %v229
      %v310 = vld [vmem:[#allocation2 + $0x7] sm:$0xff]
      %v311 = vld [vmem:[#allocation2 + $0xf] sm:$0xff]
      %v312 = vld [vmem:[#allocation2 + $0x27] sm:$0xff]
      %v313 = vld [vmem:[#allocation2 + $0x2f] sm:$0xff]
      %v314 = vld [vmem:[#allocation2 + $0x47] sm:$0xff]
      %v315 = vld [vmem:[#allocation2 + $0x4f] sm:$0xff]
      %v316 = vld [vmem:[#allocation2 + $0x67] sm:$0xff]
      %v317 = vld [vmem:[#allocation2 + $0x6f] sm:$0xff]
      %v318 = vld [vmem:[#allocation2 + $0x87] sm:$0xff]
      %v319 = vld [vmem:[#allocation2 + $0x8f] sm:$0xff]
      %v320 = vld [vmem:[#allocation2 + $0xa7] sm:$0xff]
      %v321 = vld [vmem:[#allocation2 + $0xaf] sm:$0xff]
      %v322 = vld [vmem:[#allocation2 + $0xc7] sm:$0xff]
      %v323 = vld [vmem:[#allocation2 + $0xcf] sm:$0xff]
      %v324 = vld [vmem:[#allocation2 + $0xe7] sm:$0xff]
      %v325 = vld [vmem:[#allocation2 + $0xef] sm:$0xff]
      %v326 = vld [vmem:[#allocation2 + $0x107] sm:$0xff]
      %v327 = vld [vmem:[#allocation2 + $0x10f] sm:$0xff]
      %v328 = vld [vmem:[#allocation2 + $0x127] sm:$0xff]
      %v329 = vld [vmem:[#allocation2 + $0x12f] sm:$0xff]
      %v330 = vld [vmem:[#allocation2 + $0x147] sm:$0xff]
      %v331 = vld [vmem:[#allocation2 + $0x14f] sm:$0xff]
      %v332 = vld [vmem:[#allocation2 + $0x167] sm:$0xff]
      %v333 = vld [vmem:[#allocation2 + $0x16f] sm:$0xff]
      %v334 = vld [vmem:[#allocation2 + $0x187] sm:$0xff]
      %v335 = vld [vmem:[#allocation2 + $0x18f] sm:$0xff]
      %v336 = vld [vmem:[#allocation2 + $0x1a7] sm:$0xff]
      %v337 = vld [vmem:[#allocation2 + $0x1af] sm:$0xff]
      %v338 = vld [vmem:[#allocation2 + $0x1c7] sm:$0xff]
      %v339 = vld [vmem:[#allocation2 + $0x1cf] sm:$0xff]
      %v340 = vld [vmem:[#allocation2 + $0x1e7] sm:$0xff]
      %v341 = vld [vmem:[#allocation2 + $0x1ef] sm:$0xff]
      %v342 = vld [vmem:[#allocation2 + $0x8] sm:$0xff]
      %v343 = vld [vmem:[#allocation2 + $0x10] sm:$0xff]
      %v344 = vld [vmem:[#allocation2 + $0x28] sm:$0xff]
      %v345 = vld [vmem:[#allocation2 + $0x30] sm:$0xff]
      %v346 = vld [vmem:[#allocation2 + $0x48] sm:$0xff]
      %v347 = vld [vmem:[#allocation2 + $0x50] sm:$0xff]
      %v348 = vld [vmem:[#allocation2 + $0x68] sm:$0xff]
      %v349 = vld [vmem:[#allocation2 + $0x70] sm:$0xff]
      %v350 = vld [vmem:[#allocation2 + $0x88] sm:$0xff]
      %v351 = vld [vmem:[#allocation2 + $0x90] sm:$0xff]
      %v352 = vld [vmem:[#allocation2 + $0xa8] sm:$0xff]
      %v353 = vld [vmem:[#allocation2 + $0xb0] sm:$0xff]
      %v354 = vld [vmem:[#allocation2 + $0xc8] sm:$0xff]
      %v355 = vld [vmem:[#allocation2 + $0xd0] sm:$0xff]
      %v356 = vld [vmem:[#allocation2 + $0xe8] sm:$0xff]
      %v357 = vld [vmem:[#allocation2 + $0xf0] sm:$0xff]
      %v358 = vld [vmem:[#allocation2 + $0x108] sm:$0xff]
      %v359 = vld [vmem:[#allocation2 + $0x110] sm:$0xff]
      %v360 = vld [vmem:[#allocation2 + $0x128] sm:$0xff]
      %v361 = vld [vmem:[#allocation2 + $0x130] sm:$0xff]
      %v362 = vld [vmem:[#allocation2 + $0x148] sm:$0xff]
      %v363 = vld [vmem:[#allocation2 + $0x150] sm:$0xff]
      %v364 = vld [vmem:[#allocation2 + $0x168] sm:$0xff]
      %v365 = vld [vmem:[#allocation2 + $0x170] sm:$0xff]
      %v366 = vld [vmem:[#allocation2 + $0x188] sm:$0xff]
      %v367 = vld [vmem:[#allocation2 + $0x190] sm:$0xff]
      %v368 = vld [vmem:[#allocation2 + $0x1a8] sm:$0xff]
      %v369 = vld [vmem:[#allocation2 + $0x1b0] sm:$0xff]
      %v370 = vld [vmem:[#allocation2 + $0x1c8] sm:$0xff]
      %v371 = vld [vmem:[#allocation2 + $0x1d0] sm:$0xff]
      %v372 = vld [vmem:[#allocation2 + $0x1e8] sm:$0xff]
      %v373 = vld [vmem:[#allocation2 + $0x1f0] sm:$0xff]
      %v374 = vld [vmem:[#allocation2 + $0x9] sm:$0xff]
      %v375 = vld [vmem:[#allocation2 + $0x11] sm:$0xff]
      %v376 = vld [vmem:[#allocation2 + $0x29] sm:$0xff]
      %v377 = vld [vmem:[#allocation2 + $0x31] sm:$0xff]
      %v378 = vld [vmem:[#allocation2 + $0x49] sm:$0xff]
      %v379 = vld [vmem:[#allocation2 + $0x51] sm:$0xff]
      %v380 = vld [vmem:[#allocation2 + $0x69] sm:$0xff]
      %v381 = vld [vmem:[#allocation2 + $0x71] sm:$0xff]
      %v382 = vld [vmem:[#allocation2 + $0x89] sm:$0xff]
      %v383 = vld [vmem:[#allocation2 + $0x91] sm:$0xff]
      %v384 = vld [vmem:[#allocation2 + $0xa9] sm:$0xff]
      %v385 = vld [vmem:[#allocation2 + $0xb1] sm:$0xff]
      %v386 = vld [vmem:[#allocation2 + $0xc9] sm:$0xff]
      %v387 = vld [vmem:[#allocation2 + $0xd1] sm:$0xff]
      %v388 = vld [vmem:[#allocation2 + $0xe9] sm:$0xff]
      %v389 = vld [vmem:[#allocation2 + $0xf1] sm:$0xff]
      %v390 = vld [vmem:[#allocation2 + $0x109] sm:$0xff]
      %v391 = vld [vmem:[#allocation2 + $0x111] sm:$0xff]
      %v392 = vld [vmem:[#allocation2 + $0x129] sm:$0xff]
      %v393 = vld [vmem:[#allocation2 + $0x131] sm:$0xff]
      %v394 = vld [vmem:[#allocation2 + $0x149] sm:$0xff]
      %v395 = vld [vmem:[#allocation2 + $0x151] sm:$0xff]
      %v396 = vld [vmem:[#allocation2 + $0x169] sm:$0xff]
      %v397 = vld [vmem:[#allocation2 + $0x171] sm:$0xff]
      %v398 = vld [vmem:[#allocation2 + $0x189] sm:$0xff]
      %v399 = vld [vmem:[#allocation2 + $0x191] sm:$0xff]
      %v400 = vld [vmem:[#allocation2 + $0x1a9] sm:$0xff]
      %v401 = vld [vmem:[#allocation2 + $0x1b1] sm:$0xff]
      %v402 = vld [vmem:[#allocation2 + $0x1c9] sm:$0xff]
      %v403 = vld [vmem:[#allocation2 + $0x1d1] sm:$0xff]
      %v404 = vld [vmem:[#allocation2 + $0x1e9] sm:$0xff]
      %v405 = vld [vmem:[#allocation2 + $0x1f1] sm:$0xff]
      %v406 = vld [vmem:[%s277 + $0x7] sm:$0xff]
      %v407 = vld [vmem:[%s277 + $0xf] sm:$0xff]
      %v408 = vld [vmem:[%s277 + $0x27] sm:$0xff]
      %v409 = vld [vmem:[%s277 + $0x2f] sm:$0xff]
      %v410 = vld [vmem:[%s277 + $0x47] sm:$0xff]
      %v411 = vld [vmem:[%s277 + $0x4f] sm:$0xff]
      %v412 = vld [vmem:[%s277 + $0x67] sm:$0xff]
      %v413 = vld [vmem:[%s277 + $0x6f] sm:$0xff]
      %v414 = vld [vmem:[%s277 + $0x87] sm:$0xff]
      %v415 = vld [vmem:[%s277 + $0x8f] sm:$0xff]
      %v416 = vld [vmem:[%s277 + $0xa7] sm:$0xff]
      %v417 = vld [vmem:[%s277 + $0xaf] sm:$0xff]
      %v418 = vld [vmem:[%s277 + $0xc7] sm:$0xff]
      %v419 = vld [vmem:[%s277 + $0xcf] sm:$0xff]
      %v420 = vld [vmem:[%s277 + $0xe7] sm:$0xff]
      %v421 = vld [vmem:[%s277 + $0xef] sm:$0xff]
      %v422 = vld [vmem:[%s277 + $0x107] sm:$0xff]
      %v423 = vld [vmem:[%s277 + $0x10f] sm:$0xff]
      %v424 = vld [vmem:[%s277 + $0x127] sm:$0xff]
      %v425 = vld [vmem:[%s277 + $0x12f] sm:$0xff]
      %v426 = vld [vmem:[%s277 + $0x147] sm:$0xff]
      %v427 = vld [vmem:[%s277 + $0x14f] sm:$0xff]
      %v428 = vld [vmem:[%s277 + $0x167] sm:$0xff]
      %v429 = vld [vmem:[%s277 + $0x16f] sm:$0xff]
      %v430 = vld [vmem:[%s277 + $0x187] sm:$0xff]
      %v431 = vld [vmem:[%s277 + $0x18f] sm:$0xff]
      %v432 = vld [vmem:[%s277 + $0x1a7] sm:$0xff]
      %v433 = vld [vmem:[%s277 + $0x1af] sm:$0xff]
      %v434 = vld [vmem:[%s277 + $0x1c7] sm:$0xff]
      %v435 = vld [vmem:[%s277 + $0x1cf] sm:$0xff]
      %v436 = vld [vmem:[%s277 + $0x1e7] sm:$0xff]
      %v437 = vld [vmem:[%s277 + $0x1ef] sm:$0xff]
      %v438 = vld [vmem:[%s277 + $0x8] sm:$0xff]
      %v439 = vld [vmem:[%s277 + $0x10] sm:$0xff]
      %v440 = vld [vmem:[%s277 + $0x28] sm:$0xff]
      %v441 = vld [vmem:[%s277 + $0x30] sm:$0xff]
      %v442 = vld [vmem:[%s277 + $0x48] sm:$0xff]
      %v443 = vld [vmem:[%s277 + $0x50] sm:$0xff]
      %v444 = vld [vmem:[%s277 + $0x68] sm:$0xff]
      %v445 = vld [vmem:[%s277 + $0x70] sm:$0xff]
      %v446 = vld [vmem:[%s277 + $0x88] sm:$0xff]
      %v447 = vld [vmem:[%s277 + $0x90] sm:$0xff]
      %v448 = vld [vmem:[%s277 + $0xa8] sm:$0xff]
      %v449 = vld [vmem:[%s277 + $0xb0] sm:$0xff]
      %v450 = vld [vmem:[%s277 + $0xc8] sm:$0xff]
      %v451 = vld [vmem:[%s277 + $0xd0] sm:$0xff]
      %v452 = vld [vmem:[%s277 + $0xe8] sm:$0xff]
      %v453 = vld [vmem:[%s277 + $0xf0] sm:$0xff]
      %v454 = vld [vmem:[%s277 + $0x108] sm:$0xff]
      %v455 = vld [vmem:[%s277 + $0x110] sm:$0xff]
      %v456 = vld [vmem:[%s277 + $0x128] sm:$0xff]
      %v457 = vld [vmem:[%s277 + $0x130] sm:$0xff]
      %v458 = vld [vmem:[%s277 + $0x148] sm:$0xff]
      %v459 = vld [vmem:[%s277 + $0x150] sm:$0xff]
      %v460 = vld [vmem:[%s277 + $0x168] sm:$0xff]
      %v461 = vld [vmem:[%s277 + $0x170] sm:$0xff]
      %v462 = vld [vmem:[%s277 + $0x188] sm:$0xff]
      %v463 = vld [vmem:[%s277 + $0x190] sm:$0xff]
      %v464 = vld [vmem:[%s277 + $0x1a8] sm:$0xff]
      %v465 = vld [vmem:[%s277 + $0x1b0] sm:$0xff]
      %v466 = vld [vmem:[%s277 + $0x1c8] sm:$0xff]
      %v467 = vld [vmem:[%s277 + $0x1d0] sm:$0xff]
      %v468 = vld [vmem:[%s277 + $0x1e8] sm:$0xff]
      %v469 = vld [vmem:[%s277 + $0x1f0] sm:$0xff]
      %v470 = vld [vmem:[%s277 + $0x9] sm:$0xff]
      %v471 = vld [vmem:[%s277 + $0x11] sm:$0xff]
      %v472 = vld [vmem:[%s277 + $0x29] sm:$0xff]
      %v473 = vld [vmem:[%s277 + $0x31] sm:$0xff]
      %v474 = vld [vmem:[%s277 + $0x49] sm:$0xff]
      %v475 = vld [vmem:[%s277 + $0x51] sm:$0xff]
      %v476 = vld [vmem:[%s277 + $0x69] sm:$0xff]
      %v477 = vld [vmem:[%s277 + $0x71] sm:$0xff]
      %v478 = vld [vmem:[%s277 + $0x89] sm:$0xff]
      %v479 = vld [vmem:[%s277 + $0x91] sm:$0xff]
      %v480 = vld [vmem:[%s277 + $0xa9] sm:$0xff]
      %v481 = vld [vmem:[%s277 + $0xb1] sm:$0xff]
      %v482 = vld [vmem:[%s277 + $0xc9] sm:$0xff]
      %v483 = vld [vmem:[%s277 + $0xd1] sm:$0xff]
      %v484 = vld [vmem:[%s277 + $0xe9] sm:$0xff]
      %v485 = vld [vmem:[%s277 + $0xf1] sm:$0xff]
      %v486 = vld [vmem:[%s277 + $0x109] sm:$0xff]
      %v487 = vld [vmem:[%s277 + $0x111] sm:$0xff]
      %v488 = vld [vmem:[%s277 + $0x129] sm:$0xff]
      %v489 = vld [vmem:[%s277 + $0x131] sm:$0xff]
      %v490 = vld [vmem:[%s277 + $0x149] sm:$0xff]
      %v491 = vld [vmem:[%s277 + $0x151] sm:$0xff]
      %v492 = vld [vmem:[%s277 + $0x169] sm:$0xff]
      %v493 = vld [vmem:[%s277 + $0x171] sm:$0xff]
      %v494 = vld [vmem:[%s277 + $0x189] sm:$0xff]
      %v495 = vld [vmem:[%s277 + $0x191] sm:$0xff]
      %v496 = vld [vmem:[%s277 + $0x1a9] sm:$0xff]
      %v497 = vld [vmem:[%s277 + $0x1b1] sm:$0xff]
      %v498 = vld [vmem:[%s277 + $0x1c9] sm:$0xff]
      %v499 = vld [vmem:[%s277 + $0x1d1] sm:$0xff]
      %v500 = vld [vmem:[%s277 + $0x1e9] sm:$0xff]
      %v501 = vld [vmem:[%s277 + $0x1f1] sm:$0xff]
      %s502 = scalar_lea.vmem [#allocation2], 64
      %v503 = vld [vmem:[%s502 + $0x7] sm:$0xff]
      %v504 = vld [vmem:[%s502 + $0xf] sm:$0xff]
      %v505 = vld [vmem:[%s502 + $0x27] sm:$0xff]
      %v506 = vld [vmem:[%s502 + $0x2f] sm:$0xff]
      %v507 = vld [vmem:[%s502 + $0x47] sm:$0xff]
      %v508 = vld [vmem:[%s502 + $0x4f] sm:$0xff]
      %v509 = vld [vmem:[%s502 + $0x67] sm:$0xff]
      %v510 = vld [vmem:[%s502 + $0x6f] sm:$0xff]
      %v511 = vld [vmem:[%s502 + $0x87] sm:$0xff]
      %v512 = vld [vmem:[%s502 + $0x8f] sm:$0xff]
      %v513 = vld [vmem:[%s502 + $0xa7] sm:$0xff]
      %v514 = vld [vmem:[%s502 + $0xaf] sm:$0xff]
      %v515 = vld [vmem:[%s502 + $0xc7] sm:$0xff]
      %v516 = vld [vmem:[%s502 + $0xcf] sm:$0xff]
      %v517 = vld [vmem:[%s502 + $0xe7] sm:$0xff]
      %v518 = vld [vmem:[%s502 + $0xef] sm:$0xff]
      %v519 = vld [vmem:[%s502 + $0x107] sm:$0xff]
      %v520 = vld [vmem:[%s502 + $0x10f] sm:$0xff]
      %v521 = vld [vmem:[%s502 + $0x127] sm:$0xff]
      %v522 = vld [vmem:[%s502 + $0x12f] sm:$0xff]
      %v523 = vld [vmem:[%s502 + $0x147] sm:$0xff]
      %v524 = vld [vmem:[%s502 + $0x14f] sm:$0xff]
      %v525 = vld [vmem:[%s502 + $0x167] sm:$0xff]
      %v526 = vld [vmem:[%s502 + $0x16f] sm:$0xff]
      %v527 = vld [vmem:[%s502 + $0x187] sm:$0xff]
      %v528 = vld [vmem:[%s502 + $0x18f] sm:$0xff]
      %v529 = vld [vmem:[%s502 + $0x1a7] sm:$0xff]
      %v530 = vld [vmem:[%s502 + $0x1af] sm:$0xff]
      %v531 = vld [vmem:[%s502 + $0x1c7] sm:$0xff]
      %v532 = vld [vmem:[%s502 + $0x1cf] sm:$0xff]
      %v533 = vld [vmem:[%s502 + $0x1e7] sm:$0xff]
      %v534 = vld [vmem:[%s502 + $0x1ef] sm:$0xff]
      %v535 = vld [vmem:[%s502 + $0x8] sm:$0xff]
      %v536 = vld [vmem:[%s502 + $0x10] sm:$0xff]
      %v537 = vld [vmem:[%s502 + $0x28] sm:$0xff]
      %v538 = vld [vmem:[%s502 + $0x30] sm:$0xff]
      %v539 = vld [vmem:[%s502 + $0x48] sm:$0xff]
      %v540 = vld [vmem:[%s502 + $0x50] sm:$0xff]
      %v541 = vld [vmem:[%s502 + $0x68] sm:$0xff]
      %v542 = vld [vmem:[%s502 + $0x70] sm:$0xff]
      %v543 = vld [vmem:[%s502 + $0x88] sm:$0xff]
      %v544 = vld [vmem:[%s502 + $0x90] sm:$0xff]
      %v545 = vld [vmem:[%s502 + $0xa8] sm:$0xff]
      %v546 = vld [vmem:[%s502 + $0xb0] sm:$0xff]
      %v547 = vld [vmem:[%s502 + $0xc8] sm:$0xff]
      %v548 = vld [vmem:[%s502 + $0xd0] sm:$0xff]
      %v549 = vld [vmem:[%s502 + $0xe8] sm:$0xff]
      %v550 = vld [vmem:[%s502 + $0xf0] sm:$0xff]
      %v551 = vld [vmem:[%s502 + $0x108] sm:$0xff]
      %v552 = vld [vmem:[%s502 + $0x110] sm:$0xff]
      %v553 = vld [vmem:[%s502 + $0x128] sm:$0xff]
      %v554 = vld [vmem:[%s502 + $0x130] sm:$0xff]
      %v555 = vld [vmem:[%s502 + $0x148] sm:$0xff]
      %v556 = vld [vmem:[%s502 + $0x150] sm:$0xff]
      %v557 = vld [vmem:[%s502 + $0x168] sm:$0xff]
      %v558 = vld [vmem:[%s502 + $0x170] sm:$0xff]
      %v559 = vld [vmem:[%s502 + $0x188] sm:$0xff]
      %v560 = vld [vmem:[%s502 + $0x190] sm:$0xff]
      %v561 = vld [vmem:[%s502 + $0x1a8] sm:$0xff]
      %v562 = vld [vmem:[%s502 + $0x1b0] sm:$0xff]
      %v563 = vld [vmem:[%s502 + $0x1c8] sm:$0xff]
      %v564 = vld [vmem:[%s502 + $0x1d0] sm:$0xff]
      %v565 = vld [vmem:[%s502 + $0x1e8] sm:$0xff]
      %v566 = vld [vmem:[%s502 + $0x1f0] sm:$0xff]
      %v567 = vld [vmem:[%s502 + $0x9] sm:$0xff]
      %v568 = vld [vmem:[%s502 + $0x11] sm:$0xff]
      %v569 = vld [vmem:[%s502 + $0x29] sm:$0xff]
      %v570 = vld [vmem:[%s502 + $0x31] sm:$0xff]
      %v571 = vld [vmem:[%s502 + $0x49] sm:$0xff]
      %v572 = vld [vmem:[%s502 + $0x51] sm:$0xff]
      %v573 = vld [vmem:[%s502 + $0x69] sm:$0xff]
      %v574 = vld [vmem:[%s502 + $0x71] sm:$0xff]
      %v575 = vld [vmem:[%s502 + $0x89] sm:$0xff]
      %v576 = vld [vmem:[%s502 + $0x91] sm:$0xff]
      %v577 = vld [vmem:[%s502 + $0xa9] sm:$0xff]
      %v578 = vld [vmem:[%s502 + $0xb1] sm:$0xff]
      %v579 = vld [vmem:[%s502 + $0xc9] sm:$0xff]
      %v580 = vld [vmem:[%s502 + $0xd1] sm:$0xff]
      %v581 = vld [vmem:[%s502 + $0xe9] sm:$0xff]
      %v582 = vld [vmem:[%s502 + $0xf1] sm:$0xff]
      %v583 = vld [vmem:[%s502 + $0x109] sm:$0xff]
      %v584 = vld [vmem:[%s502 + $0x111] sm:$0xff]
      %v585 = vld [vmem:[%s502 + $0x129] sm:$0xff]
      %v586 = vld [vmem:[%s502 + $0x131] sm:$0xff]
      %v587 = vld [vmem:[%s502 + $0x149] sm:$0xff]
      %v588 = vld [vmem:[%s502 + $0x151] sm:$0xff]
      %v589 = vld [vmem:[%s502 + $0x169] sm:$0xff]
      %v590 = vld [vmem:[%s502 + $0x171] sm:$0xff]
      %v591 = vld [vmem:[%s502 + $0x189] sm:$0xff]
      %v592 = vld [vmem:[%s502 + $0x191] sm:$0xff]
      %v593 = vld [vmem:[%s502 + $0x1a9] sm:$0xff]
      %v594 = vld [vmem:[%s502 + $0x1b1] sm:$0xff]
      %v595 = vld [vmem:[%s502 + $0x1c9] sm:$0xff]
      %v596 = vld [vmem:[%s502 + $0x1d1] sm:$0xff]
      %v597 = vld [vmem:[%s502 + $0x1e9] sm:$0xff]
      %v598 = vld [vmem:[%s502 + $0x1f1] sm:$0xff]
      %631 = vrot.lane.b32.xlu0 %v342, 4
      %v632 = vpop.permute.xlu0 %631
      %633 = vrot.lane.b32.xlu0 %v343, 4
      %v634 = vpop.permute.xlu0 %633
      %635 = vrot.lane.b32.xlu0 %v344, 4
      %v636 = vpop.permute.xlu0 %635
      %637 = vrot.lane.b32.xlu0 %v345, 4
      %v638 = vpop.permute.xlu0 %637
      %639 = vrot.lane.b32.xlu0 %v346, 4
      %v640 = vpop.permute.xlu0 %639
      %641 = vrot.lane.b32.xlu0 %v347, 4
      %v642 = vpop.permute.xlu0 %641
      %643 = vrot.lane.b32.xlu0 %v348, 4
      %v644 = vpop.permute.xlu0 %643
      %645 = vrot.lane.b32.xlu0 %v349, 4
      %v646 = vpop.permute.xlu0 %645
      %647 = vrot.lane.b32.xlu0 %v350, 4
      %v648 = vpop.permute.xlu0 %647
      %649 = vrot.lane.b32.xlu0 %v351, 4
      %v650 = vpop.permute.xlu0 %649
      %651 = vrot.lane.b32.xlu0 %v352, 4
      %v652 = vpop.permute.xlu0 %651
      %653 = vrot.lane.b32.xlu0 %v353, 4
      %v654 = vpop.permute.xlu0 %653
      %655 = vrot.lane.b32.xlu0 %v354, 4
      %v656 = vpop.permute.xlu0 %655
      %657 = vrot.lane.b32.xlu0 %v355, 4
      %v658 = vpop.permute.xlu0 %657
      %659 = vrot.lane.b32.xlu0 %v356, 4
      %v660 = vpop.permute.xlu0 %659
      %661 = vrot.lane.b32.xlu0 %v357, 4
      %v662 = vpop.permute.xlu0 %661
      %663 = vrot.lane.b32.xlu0 %v358, 4
      %v664 = vpop.permute.xlu0 %663
      %665 = vrot.lane.b32.xlu0 %v359, 4
      %v666 = vpop.permute.xlu0 %665
      %667 = vrot.lane.b32.xlu0 %v360, 4
      %v668 = vpop.permute.xlu0 %667
      %669 = vrot.lane.b32.xlu0 %v361, 4
      %v670 = vpop.permute.xlu0 %669
      %671 = vrot.lane.b32.xlu0 %v362, 4
      %v672 = vpop.permute.xlu0 %671
      %673 = vrot.lane.b32.xlu0 %v363, 4
      %v674 = vpop.permute.xlu0 %673
      %675 = vrot.lane.b32.xlu0 %v364, 4
      %v676 = vpop.permute.xlu0 %675
      %677 = vrot.lane.b32.xlu0 %v365, 4
      %v678 = vpop.permute.xlu0 %677
      %679 = vrot.lane.b32.xlu0 %v366, 4
      %v680 = vpop.permute.xlu0 %679
      %681 = vrot.lane.b32.xlu0 %v367, 4
      %v682 = vpop.permute.xlu0 %681
      %683 = vrot.lane.b32.xlu0 %v368, 4
      %v684 = vpop.permute.xlu0 %683
      %685 = vrot.lane.b32.xlu0 %v369, 4
      %v686 = vpop.permute.xlu0 %685
      %687 = vrot.lane.b32.xlu0 %v370, 4
      %v688 = vpop.permute.xlu0 %687
      %689 = vrot.lane.b32.xlu0 %v371, 4
      %v690 = vpop.permute.xlu0 %689
      %691 = vrot.lane.b32.xlu0 %v372, 4
      %v692 = vpop.permute.xlu0 %691
      %693 = vrot.lane.b32.xlu0 %v373, 4
      %v694 = vpop.permute.xlu0 %693
      %759 = vrot.lane.b32.xlu0 %v374, 8
      %v760 = vpop.permute.xlu0 %759
      %761 = vrot.lane.b32.xlu0 %v375, 8
      %v762 = vpop.permute.xlu0 %761
      %763 = vrot.lane.b32.xlu0 %v376, 8
      %v764 = vpop.permute.xlu0 %763
      %765 = vrot.lane.b32.xlu0 %v377, 8
      %v766 = vpop.permute.xlu0 %765
      %767 = vrot.lane.b32.xlu0 %v378, 8
      %v768 = vpop.permute.xlu0 %767
      %769 = vrot.lane.b32.xlu0 %v379, 8
      %v770 = vpop.permute.xlu0 %769
      %771 = vrot.lane.b32.xlu0 %v380, 8
      %v772 = vpop.permute.xlu0 %771
      %773 = vrot.lane.b32.xlu0 %v381, 8
      %v774 = vpop.permute.xlu0 %773
      %775 = vrot.lane.b32.xlu0 %v382, 8
      %v776 = vpop.permute.xlu0 %775
      %777 = vrot.lane.b32.xlu0 %v383, 8
      %v778 = vpop.permute.xlu0 %777
      %779 = vrot.lane.b32.xlu0 %v384, 8
      %v780 = vpop.permute.xlu0 %779
      %781 = vrot.lane.b32.xlu0 %v385, 8
      %v782 = vpop.permute.xlu0 %781
      %783 = vrot.lane.b32.xlu0 %v386, 8
      %v784 = vpop.permute.xlu0 %783
      %785 = vrot.lane.b32.xlu0 %v387, 8
      %v786 = vpop.permute.xlu0 %785
      %787 = vrot.lane.b32.xlu0 %v388, 8
      %v788 = vpop.permute.xlu0 %787
      %789 = vrot.lane.b32.xlu0 %v389, 8
      %v790 = vpop.permute.xlu0 %789
      %791 = vrot.lane.b32.xlu0 %v390, 8
      %v792 = vpop.permute.xlu0 %791
      %793 = vrot.lane.b32.xlu0 %v391, 8
      %v794 = vpop.permute.xlu0 %793
      %795 = vrot.lane.b32.xlu0 %v392, 8
      %v796 = vpop.permute.xlu0 %795
      %797 = vrot.lane.b32.xlu0 %v393, 8
      %v798 = vpop.permute.xlu0 %797
      %799 = vrot.lane.b32.xlu0 %v394, 8
      %v800 = vpop.permute.xlu0 %799
      %801 = vrot.lane.b32.xlu0 %v395, 8
      %v802 = vpop.permute.xlu0 %801
      %803 = vrot.lane.b32.xlu0 %v396, 8
      %v804 = vpop.permute.xlu0 %803
      %805 = vrot.lane.b32.xlu0 %v397, 8
      %v806 = vpop.permute.xlu0 %805
      %807 = vrot.lane.b32.xlu0 %v398, 8
      %v808 = vpop.permute.xlu0 %807
      %809 = vrot.lane.b32.xlu0 %v399, 8
      %v810 = vpop.permute.xlu0 %809
      %811 = vrot.lane.b32.xlu0 %v400, 8
      %v812 = vpop.permute.xlu0 %811
      %813 = vrot.lane.b32.xlu0 %v401, 8
      %v814 = vpop.permute.xlu0 %813
      %815 = vrot.lane.b32.xlu0 %v402, 8
      %v816 = vpop.permute.xlu0 %815
      %817 = vrot.lane.b32.xlu0 %v403, 8
      %v818 = vpop.permute.xlu0 %817
      %819 = vrot.lane.b32.xlu0 %v404, 8
      %v820 = vpop.permute.xlu0 %819
      %821 = vrot.lane.b32.xlu0 %v405, 8
      %v822 = vpop.permute.xlu0 %821
      %887 = vrot.lane.b32.xlu0 %v406, 12
      %v888 = vpop.permute.xlu0 %887
      %889 = vrot.lane.b32.xlu0 %v407, 12
      %v890 = vpop.permute.xlu0 %889
      %891 = vrot.lane.b32.xlu0 %v408, 12
      %v892 = vpop.permute.xlu0 %891
      %893 = vrot.lane.b32.xlu0 %v409, 12
      %v894 = vpop.permute.xlu0 %893
      %895 = vrot.lane.b32.xlu0 %v410, 12
      %v896 = vpop.permute.xlu0 %895
      %897 = vrot.lane.b32.xlu0 %v411, 12
      %v898 = vpop.permute.xlu0 %897
      %899 = vrot.lane.b32.xlu0 %v412, 12
      %v900 = vpop.permute.xlu0 %899
      %901 = vrot.lane.b32.xlu0 %v413, 12
      %v902 = vpop.permute.xlu0 %901
      %903 = vrot.lane.b32.xlu0 %v414, 12
      %v904 = vpop.permute.xlu0 %903
      %905 = vrot.lane.b32.xlu0 %v415, 12
      %v906 = vpop.permute.xlu0 %905
      %907 = vrot.lane.b32.xlu0 %v416, 12
      %v908 = vpop.permute.xlu0 %907
      %909 = vrot.lane.b32.xlu0 %v417, 12
      %v910 = vpop.permute.xlu0 %909
      %911 = vrot.lane.b32.xlu0 %v418, 12
      %v912 = vpop.permute.xlu0 %911
      %913 = vrot.lane.b32.xlu0 %v419, 12
      %v914 = vpop.permute.xlu0 %913
      %915 = vrot.lane.b32.xlu0 %v420, 12
      %v916 = vpop.permute.xlu0 %915
      %917 = vrot.lane.b32.xlu0 %v421, 12
      %v918 = vpop.permute.xlu0 %917
      %919 = vrot.lane.b32.xlu0 %v422, 12
      %v920 = vpop.permute.xlu0 %919
      %921 = vrot.lane.b32.xlu0 %v423, 12
      %v922 = vpop.permute.xlu0 %921
      %923 = vrot.lane.b32.xlu0 %v424, 12
      %v924 = vpop.permute.xlu0 %923
      %925 = vrot.lane.b32.xlu0 %v425, 12
      %v926 = vpop.permute.xlu0 %925
      %927 = vrot.lane.b32.xlu0 %v426, 12
      %v928 = vpop.permute.xlu0 %927
      %929 = vrot.lane.b32.xlu0 %v427, 12
      %v930 = vpop.permute.xlu0 %929
      %931 = vrot.lane.b32.xlu0 %v428, 12
      %v932 = vpop.permute.xlu0 %931
      %933 = vrot.lane.b32.xlu0 %v429, 12
      %v934 = vpop.permute.xlu0 %933
      %935 = vrot.lane.b32.xlu0 %v430, 12
      %v936 = vpop.permute.xlu0 %935
      %937 = vrot.lane.b32.xlu0 %v431, 12
      %v938 = vpop.permute.xlu0 %937
      %939 = vrot.lane.b32.xlu0 %v432, 12
      %v940 = vpop.permute.xlu0 %939
      %941 = vrot.lane.b32.xlu0 %v433, 12
      %v942 = vpop.permute.xlu0 %941
      %943 = vrot.lane.b32.xlu0 %v434, 12
      %v944 = vpop.permute.xlu0 %943
      %945 = vrot.lane.b32.xlu0 %v435, 12
      %v946 = vpop.permute.xlu0 %945
      %947 = vrot.lane.b32.xlu0 %v436, 12
      %v948 = vpop.permute.xlu0 %947
      %949 = vrot.lane.b32.xlu0 %v437, 12
      %v950 = vpop.permute.xlu0 %949
      %1015 = vrot.lane.b32.xlu0 %v438, 16
      %v1016 = vpop.permute.xlu0 %1015
      %1017 = vrot.lane.b32.xlu0 %v439, 16
      %v1018 = vpop.permute.xlu0 %1017
      %1019 = vrot.lane.b32.xlu0 %v440, 16
      %v1020 = vpop.permute.xlu0 %1019
      %1021 = vrot.lane.b32.xlu0 %v441, 16
      %v1022 = vpop.permute.xlu0 %1021
      %1023 = vrot.lane.b32.xlu0 %v442, 16
      %v1024 = vpop.permute.xlu0 %1023
      %1025 = vrot.lane.b32.xlu0 %v443, 16
      %v1026 = vpop.permute.xlu0 %1025
      %1027 = vrot.lane.b32.xlu0 %v444, 16
      %v1028 = vpop.permute.xlu0 %1027
      %1029 = vrot.lane.b32.xlu0 %v445, 16
      %v1030 = vpop.permute.xlu0 %1029
      %1031 = vrot.lane.b32.xlu0 %v446, 16
      %v1032 = vpop.permute.xlu0 %1031
      %1033 = vrot.lane.b32.xlu0 %v447, 16
      %v1034 = vpop.permute.xlu0 %1033
      %1035 = vrot.lane.b32.xlu0 %v448, 16
      %v1036 = vpop.permute.xlu0 %1035
      %1037 = vrot.lane.b32.xlu0 %v449, 16
      %v1038 = vpop.permute.xlu0 %1037
      %1039 = vrot.lane.b32.xlu0 %v450, 16
      %v1040 = vpop.permute.xlu0 %1039
      %1041 = vrot.lane.b32.xlu0 %v451, 16
      %v1042 = vpop.permute.xlu0 %1041
      %1043 = vrot.lane.b32.xlu0 %v452, 16
      %v1044 = vpop.permute.xlu0 %1043
      %1045 = vrot.lane.b32.xlu0 %v453, 16
      %v1046 = vpop.permute.xlu0 %1045
      %1047 = vrot.lane.b32.xlu0 %v454, 16
      %v1048 = vpop.permute.xlu0 %1047
      %1049 = vrot.lane.b32.xlu0 %v455, 16
      %v1050 = vpop.permute.xlu0 %1049
      %1051 = vrot.lane.b32.xlu0 %v456, 16
      %v1052 = vpop.permute.xlu0 %1051
      %1053 = vrot.lane.b32.xlu0 %v457, 16
      %v1054 = vpop.permute.xlu0 %1053
      %1055 = vrot.lane.b32.xlu0 %v458, 16
      %v1056 = vpop.permute.xlu0 %1055
      %1057 = vrot.lane.b32.xlu0 %v459, 16
      %v1058 = vpop.permute.xlu0 %1057
      %1059 = vrot.lane.b32.xlu0 %v460, 16
      %v1060 = vpop.permute.xlu0 %1059
      %1061 = vrot.lane.b32.xlu0 %v461, 16
      %v1062 = vpop.permute.xlu0 %1061
      %1063 = vrot.lane.b32.xlu0 %v462, 16
      %v1064 = vpop.permute.xlu0 %1063
      %1065 = vrot.lane.b32.xlu0 %v463, 16
      %v1066 = vpop.permute.xlu0 %1065
      %1067 = vrot.lane.b32.xlu0 %v464, 16
      %v1068 = vpop.permute.xlu0 %1067
      %1069 = vrot.lane.b32.xlu0 %v465, 16
      %v1070 = vpop.permute.xlu0 %1069
      %1071 = vrot.lane.b32.xlu0 %v466, 16
      %v1072 = vpop.permute.xlu0 %1071
      %1073 = vrot.lane.b32.xlu0 %v467, 16
      %v1074 = vpop.permute.xlu0 %1073
      %1075 = vrot.lane.b32.xlu0 %v468, 16
      %v1076 = vpop.permute.xlu0 %1075
      %1077 = vrot.lane.b32.xlu0 %v469, 16
      %v1078 = vpop.permute.xlu0 %1077
      %1143 = vrot.lane.b32.xlu0 %v470, 20
      %v1144 = vpop.permute.xlu0 %1143
      %1145 = vrot.lane.b32.xlu0 %v471, 20
      %v1146 = vpop.permute.xlu0 %1145
      %1147 = vrot.lane.b32.xlu0 %v472, 20
      %v1148 = vpop.permute.xlu0 %1147
      %1149 = vrot.lane.b32.xlu0 %v473, 20
      %v1150 = vpop.permute.xlu0 %1149
      %1151 = vrot.lane.b32.xlu0 %v474, 20
      %v1152 = vpop.permute.xlu0 %1151
      %1153 = vrot.lane.b32.xlu0 %v475, 20
      %v1154 = vpop.permute.xlu0 %1153
      %1155 = vrot.lane.b32.xlu0 %v476, 20
      %v1156 = vpop.permute.xlu0 %1155
      %1157 = vrot.lane.b32.xlu0 %v477, 20
      %v1158 = vpop.permute.xlu0 %1157
      %1159 = vrot.lane.b32.xlu0 %v478, 20
      %v1160 = vpop.permute.xlu0 %1159
      %1161 = vrot.lane.b32.xlu0 %v479, 20
      %v1162 = vpop.permute.xlu0 %1161
      %1163 = vrot.lane.b32.xlu0 %v480, 20
      %v1164 = vpop.permute.xlu0 %1163
      %1165 = vrot.lane.b32.xlu0 %v481, 20
      %v1166 = vpop.permute.xlu0 %1165
      %1167 = vrot.lane.b32.xlu0 %v482, 20
      %v1168 = vpop.permute.xlu0 %1167
      %1169 = vrot.lane.b32.xlu0 %v483, 20
      %v1170 = vpop.permute.xlu0 %1169
      %1171 = vrot.lane.b32.xlu0 %v484, 20
      %v1172 = vpop.permute.xlu0 %1171
      %1173 = vrot.lane.b32.xlu0 %v485, 20
      %v1174 = vpop.permute.xlu0 %1173
      %1175 = vrot.lane.b32.xlu0 %v486, 20
      %v1176 = vpop.permute.xlu0 %1175
      %1177 = vrot.lane.b32.xlu0 %v487, 20
      %v1178 = vpop.permute.xlu0 %1177
      %1179 = vrot.lane.b32.xlu0 %v488, 20
      %v1180 = vpop.permute.xlu0 %1179
      %1181 = vrot.lane.b32.xlu0 %v489, 20
      %v1182 = vpop.permute.xlu0 %1181
      %1183 = vrot.lane.b32.xlu0 %v490, 20
      %v1184 = vpop.permute.xlu0 %1183
      %1185 = vrot.lane.b32.xlu0 %v491, 20
      %v1186 = vpop.permute.xlu0 %1185
      %1187 = vrot.lane.b32.xlu0 %v492, 20
      %v1188 = vpop.permute.xlu0 %1187
      %1189 = vrot.lane.b32.xlu0 %v493, 20
      %v1190 = vpop.permute.xlu0 %1189
      %1191 = vrot.lane.b32.xlu0 %v494, 20
      %v1192 = vpop.permute.xlu0 %1191
      %1193 = vrot.lane.b32.xlu0 %v495, 20
      %v1194 = vpop.permute.xlu0 %1193
      %1195 = vrot.lane.b32.xlu0 %v496, 20
      %v1196 = vpop.permute.xlu0 %1195
      %1197 = vrot.lane.b32.xlu0 %v497, 20
      %v1198 = vpop.permute.xlu0 %1197
      %1199 = vrot.lane.b32.xlu0 %v498, 20
      %v1200 = vpop.permute.xlu0 %1199
      %1201 = vrot.lane.b32.xlu0 %v499, 20
      %v1202 = vpop.permute.xlu0 %1201
      %1203 = vrot.lane.b32.xlu0 %v500, 20
      %v1204 = vpop.permute.xlu0 %1203
      %1205 = vrot.lane.b32.xlu0 %v501, 20
      %v1206 = vpop.permute.xlu0 %1205
      %1271 = vrot.lane.b32.xlu0 %v503, 24
      %v1272 = vpop.permute.xlu0 %1271
      %1273 = vrot.lane.b32.xlu0 %v504, 24
      %v1274 = vpop.permute.xlu0 %1273
      %1275 = vrot.lane.b32.xlu0 %v505, 24
      %v1276 = vpop.permute.xlu0 %1275
      %1277 = vrot.lane.b32.xlu0 %v506, 24
      %v1278 = vpop.permute.xlu0 %1277
      %1279 = vrot.lane.b32.xlu0 %v507, 24
      %v1280 = vpop.permute.xlu0 %1279
      %1281 = vrot.lane.b32.xlu0 %v508, 24
      %v1282 = vpop.permute.xlu0 %1281
      %1283 = vrot.lane.b32.xlu0 %v509, 24
      %v1284 = vpop.permute.xlu0 %1283
      %1285 = vrot.lane.b32.xlu0 %v510, 24
      %v1286 = vpop.permute.xlu0 %1285
      %1287 = vrot.lane.b32.xlu0 %v511, 24
      %v1288 = vpop.permute.xlu0 %1287
      %1289 = vrot.lane.b32.xlu0 %v512, 24
      %v1290 = vpop.permute.xlu0 %1289
      %1291 = vrot.lane.b32.xlu0 %v513, 24
      %v1292 = vpop.permute.xlu0 %1291
      %1293 = vrot.lane.b32.xlu0 %v514, 24
      %v1294 = vpop.permute.xlu0 %1293
      %1295 = vrot.lane.b32.xlu0 %v515, 24
      %v1296 = vpop.permute.xlu0 %1295
      %1297 = vrot.lane.b32.xlu0 %v516, 24
      %v1298 = vpop.permute.xlu0 %1297
      %1299 = vrot.lane.b32.xlu0 %v517, 24
      %v1300 = vpop.permute.xlu0 %1299
      %1301 = vrot.lane.b32.xlu0 %v518, 24
      %v1302 = vpop.permute.xlu0 %1301
      %1303 = vrot.lane.b32.xlu0 %v519, 24
      %v1304 = vpop.permute.xlu0 %1303
      %1305 = vrot.lane.b32.xlu0 %v520, 24
      %v1306 = vpop.permute.xlu0 %1305
      %1307 = vrot.lane.b32.xlu0 %v521, 24
      %v1308 = vpop.permute.xlu0 %1307
      %1309 = vrot.lane.b32.xlu0 %v522, 24
      %v1310 = vpop.permute.xlu0 %1309
      %1311 = vrot.lane.b32.xlu0 %v523, 24
      %v1312 = vpop.permute.xlu0 %1311
      %1313 = vrot.lane.b32.xlu0 %v524, 24
      %v1314 = vpop.permute.xlu0 %1313
      %1315 = vrot.lane.b32.xlu0 %v525, 24
      %v1316 = vpop.permute.xlu0 %1315
      %1317 = vrot.lane.b32.xlu0 %v526, 24
      %v1318 = vpop.permute.xlu0 %1317
      %1319 = vrot.lane.b32.xlu0 %v527, 24
      %v1320 = vpop.permute.xlu0 %1319
      %1321 = vrot.lane.b32.xlu0 %v528, 24
      %v1322 = vpop.permute.xlu0 %1321
      %1323 = vrot.lane.b32.xlu0 %v529, 24
      %v1324 = vpop.permute.xlu0 %1323
      %1325 = vrot.lane.b32.xlu0 %v530, 24
      %v1326 = vpop.permute.xlu0 %1325
      %1327 = vrot.lane.b32.xlu0 %v531, 24
      %v1328 = vpop.permute.xlu0 %1327
      %1329 = vrot.lane.b32.xlu0 %v532, 24
      %v1330 = vpop.permute.xlu0 %1329
      %1331 = vrot.lane.b32.xlu0 %v533, 24
      %v1332 = vpop.permute.xlu0 %1331
      %1333 = vrot.lane.b32.xlu0 %v534, 24
      %v1334 = vpop.permute.xlu0 %1333
      %1399 = vrot.lane.b32.xlu0 %v535, 28
      %v1400 = vpop.permute.xlu0 %1399
      %1401 = vrot.lane.b32.xlu0 %v536, 28
      %v1402 = vpop.permute.xlu0 %1401
      %1403 = vrot.lane.b32.xlu0 %v537, 28
      %v1404 = vpop.permute.xlu0 %1403
      %1405 = vrot.lane.b32.xlu0 %v538, 28
      %v1406 = vpop.permute.xlu0 %1405
      %1407 = vrot.lane.b32.xlu0 %v539, 28
      %v1408 = vpop.permute.xlu0 %1407
      %1409 = vrot.lane.b32.xlu0 %v540, 28
      %v1410 = vpop.permute.xlu0 %1409
      %1411 = vrot.lane.b32.xlu0 %v541, 28
      %v1412 = vpop.permute.xlu0 %1411
      %1413 = vrot.lane.b32.xlu0 %v542, 28
      %v1414 = vpop.permute.xlu0 %1413
      %1415 = vrot.lane.b32.xlu0 %v543, 28
      %v1416 = vpop.permute.xlu0 %1415
      %1417 = vrot.lane.b32.xlu0 %v544, 28
      %v1418 = vpop.permute.xlu0 %1417
      %1419 = vrot.lane.b32.xlu0 %v545, 28
      %v1420 = vpop.permute.xlu0 %1419
      %1421 = vrot.lane.b32.xlu0 %v546, 28
      %v1422 = vpop.permute.xlu0 %1421
      %1423 = vrot.lane.b32.xlu0 %v547, 28
      %v1424 = vpop.permute.xlu0 %1423
      %1425 = vrot.lane.b32.xlu0 %v548, 28
      %v1426 = vpop.permute.xlu0 %1425
      %1427 = vrot.lane.b32.xlu0 %v549, 28
      %v1428 = vpop.permute.xlu0 %1427
      %1429 = vrot.lane.b32.xlu0 %v550, 28
      %v1430 = vpop.permute.xlu0 %1429
      %1431 = vrot.lane.b32.xlu0 %v551, 28
      %v1432 = vpop.permute.xlu0 %1431
      %1433 = vrot.lane.b32.xlu0 %v552, 28
      %v1434 = vpop.permute.xlu0 %1433
      %1435 = vrot.lane.b32.xlu0 %v553, 28
      %v1436 = vpop.permute.xlu0 %1435
      %1437 = vrot.lane.b32.xlu0 %v554, 28
      %v1438 = vpop.permute.xlu0 %1437
      %1439 = vrot.lane.b32.xlu0 %v555, 28
      %v1440 = vpop.permute.xlu0 %1439
      %1441 = vrot.lane.b32.xlu0 %v556, 28
      %v1442 = vpop.permute.xlu0 %1441
      %1443 = vrot.lane.b32.xlu0 %v557, 28
      %v1444 = vpop.permute.xlu0 %1443
      %1445 = vrot.lane.b32.xlu0 %v558, 28
      %v1446 = vpop.permute.xlu0 %1445
      %1447 = vrot.lane.b32.xlu0 %v559, 28
      %v1448 = vpop.permute.xlu0 %1447
      %1449 = vrot.lane.b32.xlu0 %v560, 28
      %v1450 = vpop.permute.xlu0 %1449
      %1451 = vrot.lane.b32.xlu0 %v561, 28
      %v1452 = vpop.permute.xlu0 %1451
      %1453 = vrot.lane.b32.xlu0 %v562, 28
      %v1454 = vpop.permute.xlu0 %1453
      %1455 = vrot.lane.b32.xlu0 %v563, 28
      %v1456 = vpop.permute.xlu0 %1455
      %1457 = vrot.lane.b32.xlu0 %v564, 28
      %v1458 = vpop.permute.xlu0 %1457
      %1459 = vrot.lane.b32.xlu0 %v565, 28
      %v1460 = vpop.permute.xlu0 %1459
      %1461 = vrot.lane.b32.xlu0 %v566, 28
      %v1462 = vpop.permute.xlu0 %1461
      %1527 = vrot.lane.b32.xlu0 %v567, 32
      %v1528 = vpop.permute.xlu0 %1527
      %1529 = vrot.lane.b32.xlu0 %v568, 32
      %v1530 = vpop.permute.xlu0 %1529
      %1531 = vrot.lane.b32.xlu0 %v569, 32
      %v1532 = vpop.permute.xlu0 %1531
      %1533 = vrot.lane.b32.xlu0 %v570, 32
      %v1534 = vpop.permute.xlu0 %1533
      %1535 = vrot.lane.b32.xlu0 %v571, 32
      %v1536 = vpop.permute.xlu0 %1535
      %1537 = vrot.lane.b32.xlu0 %v572, 32
      %v1538 = vpop.permute.xlu0 %1537
      %1539 = vrot.lane.b32.xlu0 %v573, 32
      %v1540 = vpop.permute.xlu0 %1539
      %1541 = vrot.lane.b32.xlu0 %v574, 32
      %v1542 = vpop.permute.xlu0 %1541
      %1543 = vrot.lane.b32.xlu0 %v575, 32
      %v1544 = vpop.permute.xlu0 %1543
      %1545 = vrot.lane.b32.xlu0 %v576, 32
      %v1546 = vpop.permute.xlu0 %1545
      %1547 = vrot.lane.b32.xlu0 %v577, 32
      %v1548 = vpop.permute.xlu0 %1547
      %1549 = vrot.lane.b32.xlu0 %v578, 32
      %v1550 = vpop.permute.xlu0 %1549
      %1551 = vrot.lane.b32.xlu0 %v579, 32
      %v1552 = vpop.permute.xlu0 %1551
      %1553 = vrot.lane.b32.xlu0 %v580, 32
      %v1554 = vpop.permute.xlu0 %1553
      %1555 = vrot.lane.b32.xlu0 %v581, 32
      %v1556 = vpop.permute.xlu0 %1555
      %1557 = vrot.lane.b32.xlu0 %v582, 32
      %v1558 = vpop.permute.xlu0 %1557
      %1559 = vrot.lane.b32.xlu0 %v583, 32
      %v1560 = vpop.permute.xlu0 %1559
      %1561 = vrot.lane.b32.xlu0 %v584, 32
      %v1562 = vpop.permute.xlu0 %1561
      %1563 = vrot.lane.b32.xlu0 %v585, 32
      %v1564 = vpop.permute.xlu0 %1563
      %1565 = vrot.lane.b32.xlu0 %v586, 32
      %v1566 = vpop.permute.xlu0 %1565
      %1567 = vrot.lane.b32.xlu0 %v587, 32
      %v1568 = vpop.permute.xlu0 %1567
      %1569 = vrot.lane.b32.xlu0 %v588, 32
      %v1570 = vpop.permute.xlu0 %1569
      %1571 = vrot.lane.b32.xlu0 %v589, 32
      %v1572 = vpop.permute.xlu0 %1571
      %1573 = vrot.lane.b32.xlu0 %v590, 32
      %v1574 = vpop.permute.xlu0 %1573
      %1575 = vrot.lane.b32.xlu0 %v591, 32
      %v1576 = vpop.permute.xlu0 %1575
      %1577 = vrot.lane.b32.xlu0 %v592, 32
      %v1578 = vpop.permute.xlu0 %1577
      %1579 = vrot.lane.b32.xlu0 %v593, 32
      %v1580 = vpop.permute.xlu0 %1579
      %1581 = vrot.lane.b32.xlu0 %v594, 32
      %v1582 = vpop.permute.xlu0 %1581
      %1583 = vrot.lane.b32.xlu0 %v595, 32
      %v1584 = vpop.permute.xlu0 %1583
      %1585 = vrot.lane.b32.xlu0 %v596, 32
      %v1586 = vpop.permute.xlu0 %1585
      %1587 = vrot.lane.b32.xlu0 %v597, 32
      %v1588 = vpop.permute.xlu0 %1587
      %1589 = vrot.lane.b32.xlu0 %v598, 32
      %v1590 = vpop.permute.xlu0 %1589
      %v1623 = vsel %vm230, %v310, %v632
      %v1624 = vsel %vm230, %v311, %v634
      %v1625 = vsel %vm230, %v312, %v636
      %v1626 = vsel %vm230, %v313, %v638
      %v1627 = vsel %vm230, %v314, %v640
      %v1628 = vsel %vm230, %v315, %v642
      %v1629 = vsel %vm230, %v316, %v644
      %v1630 = vsel %vm230, %v317, %v646
      %v1631 = vsel %vm230, %v318, %v648
      %v1632 = vsel %vm230, %v319, %v650
      %v1633 = vsel %vm230, %v320, %v652
      %v1634 = vsel %vm230, %v321, %v654
      %v1635 = vsel %vm230, %v322, %v656
      %v1636 = vsel %vm230, %v323, %v658
      %v1637 = vsel %vm230, %v324, %v660
      %v1638 = vsel %vm230, %v325, %v662
      %v1639 = vsel %vm230, %v326, %v664
      %v1640 = vsel %vm230, %v327, %v666
      %v1641 = vsel %vm230, %v328, %v668
      %v1642 = vsel %vm230, %v329, %v670
      %v1643 = vsel %vm230, %v330, %v672
      %v1644 = vsel %vm230, %v331, %v674
      %v1645 = vsel %vm230, %v332, %v676
      %v1646 = vsel %vm230, %v333, %v678
      %v1647 = vsel %vm230, %v334, %v680
      %v1648 = vsel %vm230, %v335, %v682
      %v1649 = vsel %vm230, %v336, %v684
      %v1650 = vsel %vm230, %v337, %v686
      %v1651 = vsel %vm230, %v338, %v688
      %v1652 = vsel %vm230, %v339, %v690
      %v1653 = vsel %vm230, %v340, %v692
      %v1654 = vsel %vm230, %v341, %v694
      %vm1655 = vcmask 64512
      %v1656 = vsel %vm1655, %v1623, %v760
      %v1657 = vsel %vm1655, %v1624, %v762
      %v1658 = vsel %vm1655, %v1625, %v764
      %v1659 = vsel %vm1655, %v1626, %v766
      %v1660 = vsel %vm1655, %v1627, %v768
      %v1661 = vsel %vm1655, %v1628, %v770
      %v1662 = vsel %vm1655, %v1629, %v772
      %v1663 = vsel %vm1655, %v1630, %v774
      %v1664 = vsel %vm1655, %v1631, %v776
      %v1665 = vsel %vm1655, %v1632, %v778
      %v1666 = vsel %vm1655, %v1633, %v780
      %v1667 = vsel %vm1655, %v1634, %v782
      %v1668 = vsel %vm1655, %v1635, %v784
      %v1669 = vsel %vm1655, %v1636, %v786
      %v1670 = vsel %vm1655, %v1637, %v788
      %v1671 = vsel %vm1655, %v1638, %v790
      %v1672 = vsel %vm1655, %v1639, %v792
      %v1673 = vsel %vm1655, %v1640, %v794
      %v1674 = vsel %vm1655, %v1641, %v796
      %v1675 = vsel %vm1655, %v1642, %v798
      %v1676 = vsel %vm1655, %v1643, %v800
      %v1677 = vsel %vm1655, %v1644, %v802
      %v1678 = vsel %vm1655, %v1645, %v804
      %v1679 = vsel %vm1655, %v1646, %v806
      %v1680 = vsel %vm1655, %v1647, %v808
      %v1681 = vsel %vm1655, %v1648, %v810
      %v1682 = vsel %vm1655, %v1649, %v812
      %v1683 = vsel %vm1655, %v1650, %v814
      %v1684 = vsel %vm1655, %v1651, %v816
      %v1685 = vsel %vm1655, %v1652, %v818
      %v1686 = vsel %vm1655, %v1653, %v820
      %v1687 = vsel %vm1655, %v1654, %v822
      %vm1688 = vcmask 97280
      %v1689 = vsel %vm1688, %v1656, %v888
      %v1690 = vsel %vm1688, %v1657, %v890
      %v1691 = vsel %vm1688, %v1658, %v892
      %v1692 = vsel %vm1688, %v1659, %v894
      %v1693 = vsel %vm1688, %v1660, %v896
      %v1694 = vsel %vm1688, %v1661, %v898
      %v1695 = vsel %vm1688, %v1662, %v900
      %v1696 = vsel %vm1688, %v1663, %v902
      %v1697 = vsel %vm1688, %v1664, %v904
      %v1698 = vsel %vm1688, %v1665, %v906
      %v1699 = vsel %vm1688, %v1666, %v908
      %v1700 = vsel %vm1688, %v1667, %v910
      %v1701 = vsel %vm1688, %v1668, %v912
      %v1702 = vsel %vm1688, %v1669, %v914
      %v1703 = vsel %vm1688, %v1670, %v916
      %v1704 = vsel %vm1688, %v1671, %v918
      %v1705 = vsel %vm1688, %v1672, %v920
      %v1706 = vsel %vm1688, %v1673, %v922
      %v1707 = vsel %vm1688, %v1674, %v924
      %v1708 = vsel %vm1688, %v1675, %v926
      %v1709 = vsel %vm1688, %v1676, %v928
      %v1710 = vsel %vm1688, %v1677, %v930
      %v1711 = vsel %vm1688, %v1678, %v932
      %v1712 = vsel %vm1688, %v1679, %v934
      %v1713 = vsel %vm1688, %v1680, %v936
      %v1714 = vsel %vm1688, %v1681, %v938
      %v1715 = vsel %vm1688, %v1682, %v940
      %v1716 = vsel %vm1688, %v1683, %v942
      %v1717 = vsel %vm1688, %v1684, %v944
      %v1718 = vsel %vm1688, %v1685, %v946
      %v1719 = vsel %vm1688, %v1686, %v948
      %v1720 = vsel %vm1688, %v1687, %v950
      %vm1721 = vcmask 130048
      %v1722 = vsel %vm1721, %v1689, %v1016
      %v1723 = vsel %vm1721, %v1690, %v1018
      %v1724 = vsel %vm1721, %v1691, %v1020
      %v1725 = vsel %vm1721, %v1692, %v1022
      %v1726 = vsel %vm1721, %v1693, %v1024
      %v1727 = vsel %vm1721, %v1694, %v1026
      %v1728 = vsel %vm1721, %v1695, %v1028
      %v1729 = vsel %vm1721, %v1696, %v1030
      %v1730 = vsel %vm1721, %v1697, %v1032
      %v1731 = vsel %vm1721, %v1698, %v1034
      %v1732 = vsel %vm1721, %v1699, %v1036
      %v1733 = vsel %vm1721, %v1700, %v1038
      %v1734 = vsel %vm1721, %v1701, %v1040
      %v1735 = vsel %vm1721, %v1702, %v1042
      %v1736 = vsel %vm1721, %v1703, %v1044
      %v1737 = vsel %vm1721, %v1704, %v1046
      %v1738 = vsel %vm1721, %v1705, %v1048
      %v1739 = vsel %vm1721, %v1706, %v1050
      %v1740 = vsel %vm1721, %v1707, %v1052
      %v1741 = vsel %vm1721, %v1708, %v1054
      %v1742 = vsel %vm1721, %v1709, %v1056
      %v1743 = vsel %vm1721, %v1710, %v1058
      %v1744 = vsel %vm1721, %v1711, %v1060
      %v1745 = vsel %vm1721, %v1712, %v1062
      %v1746 = vsel %vm1721, %v1713, %v1064
      %v1747 = vsel %vm1721, %v1714, %v1066
      %v1748 = vsel %vm1721, %v1715, %v1068
      %v1749 = vsel %vm1721, %v1716, %v1070
      %v1750 = vsel %vm1721, %v1717, %v1072
      %v1751 = vsel %vm1721, %v1718, %v1074
      %v1752 = vsel %vm1721, %v1719, %v1076
      %v1753 = vsel %vm1721, %v1720, %v1078
      %vm1754 = vcmask 162816
      %v1755 = vsel %vm1754, %v1722, %v1144
      %v1756 = vsel %vm1754, %v1723, %v1146
      %v1757 = vsel %vm1754, %v1724, %v1148
      %v1758 = vsel %vm1754, %v1725, %v1150
      %v1759 = vsel %vm1754, %v1726, %v1152
      %v1760 = vsel %vm1754, %v1727, %v1154
      %v1761 = vsel %vm1754, %v1728, %v1156
      %v1762 = vsel %vm1754, %v1729, %v1158
      %v1763 = vsel %vm1754, %v1730, %v1160
      %v1764 = vsel %vm1754, %v1731, %v1162
      %v1765 = vsel %vm1754, %v1732, %v1164
      %v1766 = vsel %vm1754, %v1733, %v1166
      %v1767 = vsel %vm1754, %v1734, %v1168
      %v1768 = vsel %vm1754, %v1735, %v1170
      %v1769 = vsel %vm1754, %v1736, %v1172
      %v1770 = vsel %vm1754, %v1737, %v1174
      %v1771 = vsel %vm1754, %v1738, %v1176
      %v1772 = vsel %vm1754, %v1739, %v1178
      %v1773 = vsel %vm1754, %v1740, %v1180
      %v1774 = vsel %vm1754, %v1741, %v1182
      %v1775 = vsel %vm1754, %v1742, %v1184
      %v1776 = vsel %vm1754, %v1743, %v1186
      %v1777 = vsel %vm1754, %v1744, %v1188
      %v1778 = vsel %vm1754, %v1745, %v1190
      %v1779 = vsel %vm1754, %v1746, %v1192
      %v1780 = vsel %vm1754, %v1747, %v1194
      %v1781 = vsel %vm1754, %v1748, %v1196
      %v1782 = vsel %vm1754, %v1749, %v1198
      %v1783 = vsel %vm1754, %v1750, %v1200
      %v1784 = vsel %vm1754, %v1751, %v1202
      %v1785 = vsel %vm1754, %v1752, %v1204
      %v1786 = vsel %vm1754, %v1753, %v1206
      %vm1787 = vcmask 195584
      %v1788 = vsel %vm1787, %v1755, %v1272
      %v1789 = vsel %vm1787, %v1756, %v1274
      %v1790 = vsel %vm1787, %v1757, %v1276
      %v1791 = vsel %vm1787, %v1758, %v1278
      %v1792 = vsel %vm1787, %v1759, %v1280
      %v1793 = vsel %vm1787, %v1760, %v1282
      %v1794 = vsel %vm1787, %v1761, %v1284
      %v1795 = vsel %vm1787, %v1762, %v1286
      %v1796 = vsel %vm1787, %v1763, %v1288
      %v1797 = vsel %vm1787, %v1764, %v1290
      %v1798 = vsel %vm1787, %v1765, %v1292
      %v1799 = vsel %vm1787, %v1766, %v1294
      %v1800 = vsel %vm1787, %v1767, %v1296
      %v1801 = vsel %vm1787, %v1768, %v1298
      %v1802 = vsel %vm1787, %v1769, %v1300
      %v1803 = vsel %vm1787, %v1770, %v1302
      %v1804 = vsel %vm1787, %v1771, %v1304
      %v1805 = vsel %vm1787, %v1772, %v1306
      %v1806 = vsel %vm1787, %v1773, %v1308
      %v1807 = vsel %vm1787, %v1774, %v1310
      %v1808 = vsel %vm1787, %v1775, %v1312
      %v1809 = vsel %vm1787, %v1776, %v1314
      %v1810 = vsel %vm1787, %v1777, %v1316
      %v1811 = vsel %vm1787, %v1778, %v1318
      %v1812 = vsel %vm1787, %v1779, %v1320
      %v1813 = vsel %vm1787, %v1780, %v1322
      %v1814 = vsel %vm1787, %v1781, %v1324
      %v1815 = vsel %vm1787, %v1782, %v1326
      %v1816 = vsel %vm1787, %v1783, %v1328
      %v1817 = vsel %vm1787, %v1784, %v1330
      %v1818 = vsel %vm1787, %v1785, %v1332
      %v1819 = vsel %vm1787, %v1786, %v1334
      %vm1820 = vcmask 228352
      %v1821 = vsel %vm1820, %v1788, %v1400
      %v1822 = vsel %vm1820, %v1789, %v1402
      %v1823 = vsel %vm1820, %v1790, %v1404
      %v1824 = vsel %vm1820, %v1791, %v1406
      %v1825 = vsel %vm1820, %v1792, %v1408
      %v1826 = vsel %vm1820, %v1793, %v1410
      %v1827 = vsel %vm1820, %v1794, %v1412
      %v1828 = vsel %vm1820, %v1795, %v1414
      %v1829 = vsel %vm1820, %v1796, %v1416
      %v1830 = vsel %vm1820, %v1797, %v1418
      %v1831 = vsel %vm1820, %v1798, %v1420
      %v1832 = vsel %vm1820, %v1799, %v1422
      %v1833 = vsel %vm1820, %v1800, %v1424
      %v1834 = vsel %vm1820, %v1801, %v1426
      %v1835 = vsel %vm1820, %v1802, %v1428
      %v1836 = vsel %vm1820, %v1803, %v1430
      %v1837 = vsel %vm1820, %v1804, %v1432
      %v1838 = vsel %vm1820, %v1805, %v1434
      %v1839 = vsel %vm1820, %v1806, %v1436
      %v1840 = vsel %vm1820, %v1807, %v1438
      %v1841 = vsel %vm1820, %v1808, %v1440
      %v1842 = vsel %vm1820, %v1809, %v1442
      %v1843 = vsel %vm1820, %v1810, %v1444
      %v1844 = vsel %vm1820, %v1811, %v1446
      %v1845 = vsel %vm1820, %v1812, %v1448
      %v1846 = vsel %vm1820, %v1813, %v1450
      %v1847 = vsel %vm1820, %v1814, %v1452
      %v1848 = vsel %vm1820, %v1815, %v1454
      %v1849 = vsel %vm1820, %v1816, %v1456
      %v1850 = vsel %vm1820, %v1817, %v1458
      %v1851 = vsel %vm1820, %v1818, %v1460
      %v1852 = vsel %vm1820, %v1819, %v1462
      %vm1853 = vcmask 261120
      %v1854 = vsel %vm1853, %v1821, %v1528
      %v1855 = vsel %vm1853, %v1822, %v1530
      %v1856 = vsel %vm1853, %v1823, %v1532
      %v1857 = vsel %vm1853, %v1824, %v1534
      %v1858 = vsel %vm1853, %v1825, %v1536
      %v1859 = vsel %vm1853, %v1826, %v1538
      %v1860 = vsel %vm1853, %v1827, %v1540
      %v1861 = vsel %vm1853, %v1828, %v1542
      %v1862 = vsel %vm1853, %v1829, %v1544
      %v1863 = vsel %vm1853, %v1830, %v1546
      %v1864 = vsel %vm1853, %v1831, %v1548
      %v1865 = vsel %vm1853, %v1832, %v1550
      %v1866 = vsel %vm1853, %v1833, %v1552
      %v1867 = vsel %vm1853, %v1834, %v1554
      %v1868 = vsel %vm1853, %v1835, %v1556
      %v1869 = vsel %vm1853, %v1836, %v1558
      %v1870 = vsel %vm1853, %v1837, %v1560
      %v1871 = vsel %vm1853, %v1838, %v1562
      %v1872 = vsel %vm1853, %v1839, %v1564
      %v1873 = vsel %vm1853, %v1840, %v1566
      %v1874 = vsel %vm1853, %v1841, %v1568
      %v1875 = vsel %vm1853, %v1842, %v1570
      %v1876 = vsel %vm1853, %v1843, %v1572
      %v1877 = vsel %vm1853, %v1844, %v1574
      %v1878 = vsel %vm1853, %v1845, %v1576
      %v1879 = vsel %vm1853, %v1846, %v1578
      %v1880 = vsel %vm1853, %v1847, %v1580
      %v1881 = vsel %vm1853, %v1848, %v1582
      %v1882 = vsel %vm1853, %v1849, %v1584
      %v1883 = vsel %vm1853, %v1850, %v1586
      %v1884 = vsel %vm1853, %v1851, %v1588
      %v1885 = vsel %vm1853, %v1852, %v1590
      %v1886 = vld [vmem:[%s1] sm:$0xff]
      %v1887 = vld [vmem:[%s1 + $0x8] sm:$0xff]
      %v1888 = vld [vmem:[%s1 + $0x10] sm:$0xff]
      %v1889 = vld [vmem:[%s1 + $0x18] sm:$0xff]
      %v1890 = vld [vmem:[%s1 + $0x20] sm:$0xf]
      %v1891 = vld [vmem:[%s3] sm:$0x1]
      %v1892 = vlaneseq
      %v1893 = vshrl.u32 %v1892, 7
      %v1894 = vsub.s32 0, %v1893
      %v1895 = vrot.slane %v1891, %v1894
      %vm1896 = vcmask 293888
      %v1898 = vsel %vm1896, %v1854, 0
      %v1901 = vsel %vm1896, %v1855, 0
      %v1904 = vsel %vm1896, %v1856, 0
      %v1907 = vsel %vm1896, %v1857, 0
      %v1910 = vsel %vm1896, %v1858, 0
      %v1913 = vsel %vm1896, %v1859, 0
      %v1916 = vsel %vm1896, %v1860, 0
      %v1919 = vsel %vm1896, %v1861, 0
      %v1922 = vsel %vm1896, %v1862, 0
      %v1925 = vsel %vm1896, %v1863, 0
      %v1928 = vsel %vm1896, %v1864, 0
      %v1931 = vsel %vm1896, %v1865, 0
      %v1934 = vsel %vm1896, %v1866, 0
      %v1937 = vsel %vm1896, %v1867, 0
      %v1940 = vsel %vm1896, %v1868, 0
      %v1943 = vsel %vm1896, %v1869, 0
      %v1946 = vsel %vm1896, %v1870, 0
      %v1949 = vsel %vm1896, %v1871, 0
      %v1952 = vsel %vm1896, %v1872, 0
      %v1955 = vsel %vm1896, %v1873, 0
      %v1958 = vsel %vm1896, %v1874, 0
      %v1961 = vsel %vm1896, %v1875, 0
      %v1964 = vsel %vm1896, %v1876, 0
      %v1967 = vsel %vm1896, %v1877, 0
      %v1970 = vsel %vm1896, %v1878, 0
      %v1973 = vsel %vm1896, %v1879, 0
      %v1976 = vsel %vm1896, %v1880, 0
      %v1979 = vsel %vm1896, %v1881, 0
      %v1982 = vsel %vm1896, %v1882, 0
      %v1985 = vsel %vm1896, %v1883, 0
      %v1988 = vsel %vm1896, %v1884, 0
      %v1991 = vsel %vm1896, %v1885, 0
      %vm1993 = vcmask 1043456
      %v1995 = vsel %vm1993, %v1890, 0
      %1997 = vmatprep.subr.mxu0 0.0
      %1998 = vmatpush1.msra.mxu0 %v1886
      %1999 = vmatprep.subr.mxu0 0.0
      %2000 = vmatpush1.msra.mxu0 %v1887
      %2001 = vmatprep.subr.mxu0 0.0
      %2002 = vmatpush1.msra.mxu0 %v1888
      %2003 = vmatprep.subr.mxu0 0.0
      %2004 = vmatpush1.msra.mxu0 %v1889
      %2005 = vmatprep.subr.mxu0 0.0
      %2006 = vmatpush1.msra.mxu0 %v1995
      %2007 = vmatprep.subr.mxu0 0.0
      %2008 = vmatpush1.msra.mxu0 0.0
      %2009 = vmatprep.subr.mxu0 0.0
      %2010 = vmatpush1.msra.mxu0 0.0
      %2011 = vmatprep.subr.mxu0 0.0
      %2012 = vmatpush1.msra.mxu0 0.0
      %2013 = vmatprep.subr.mxu0 0.0
      %2014 = vmatpush1.msra.mxu0 0.0
      %2015 = vmatprep.subr.mxu0 0.0
      %2016 = vmatpush1.msra.mxu0 0.0
      %2017 = vmatprep.subr.mxu0 0.0
      %2018 = vmatpush1.msra.mxu0 0.0
      %2019 = vmatprep.subr.mxu0 0.0
      %2020 = vmatpush1.msra.mxu0 0.0
      %2021 = vmatprep.subr.mxu0 0.0
      %2022 = vmatpush1.msra.mxu0 0.0
      %2023 = vmatprep.subr.mxu0 0.0
      %2024 = vmatpush1.msra.mxu0 0.0
      %2025 = vmatprep.subr.mxu0 0.0
      %2026 = vmatpush1.msra.mxu0 0.0
      %2027 = vmatprep.subr.mxu0 0.0
      %2028 = vmatpush1.msra.mxu0 0.0
      %2029 = vmatprep.subr.mxu0 0.0
      %2030 = vmatpush1.msra.mxu0 0.0
      %2031 = vmatprep.subr.mxu0 0.0
      %2032 = vmatpush1.msra.mxu0 0.0
      %2033 = vmatprep.subr.mxu0 0.0
      %2034 = vmatpush1.msra.mxu0 0.0
      %2035 = vmatprep.subr.mxu0 0.0
      %2036 = vmatpush1.msra.mxu0 0.0
      %2037 = vmatprep.subr.mxu0 0.0
      %2038 = vmatpush1.msra.mxu0 0.0
      %2039 = vmatprep.subr.mxu0 0.0
      %2040 = vmatpush1.msra.mxu0 0.0
      %2041 = vmatprep.subr.mxu0 0.0
      %2042 = vmatpush1.msra.mxu0 0.0
      %2043 = vmatprep.subr.mxu0 0.0
      %2044 = vmatpush1.msra.mxu0 0.0
      %2045 = vmatprep.subr.mxu0 0.0
      %2046 = vmatpush1.msra.mxu0 0.0
      %2047 = vmatprep.subr.mxu0 0.0
      %2048 = vmatpush1.msra.mxu0 0.0
      %2049 = vmatprep.subr.mxu0 0.0
      %2050 = vmatpush1.msra.mxu0 0.0
      %2051 = vmatprep.subr.mxu0 0.0
      %2052 = vmatpush1.msra.mxu0 0.0
      %2053 = vmatprep.subr.mxu0 0.0
      %2054 = vmatpush1.msra.mxu0 0.0
      %2055 = vmatprep.subr.mxu0 0.0
      %2056 = vmatpush1.msra.mxu0 0.0
      %2057 = vmatprep.subr.mxu0 0.0
      %2058 = vmatpush1.msra.mxu0 0.0
      %2059 = vmatprep.subr.mxu0 0.0
      %2060 = vmatpush1.msra.mxu0 0.0
      %2061 = vmatprep.mubr.f32.mxu0 0.0
      %2062 = vmatmul.mubr.f32.gmra.mrb[0].mxu0 %v1898
      %v2063 = vpop.f32.mrb[0].mxu0
      %v2064 = vadd.f32 %v1895, %v2063
      %v2065 = vpop.f32.mrb[0].mxu0
      %2066 = vmatprep.mubr.f32.mxu0 0.0
      %2067 = vmatmul.mubr.f32.gmra.mrb[0].mxu0 %v1901
      %v2068 = vpop.f32.mrb[0].mxu0
      %v2069 = vadd.f32 %v1895, %v2068
      %v2070 = vpop.f32.mrb[0].mxu0
      %2071 = vmatprep.mubr.f32.mxu0 0.0
      %2072 = vmatmul.mubr.f32.gmra.mrb[0].mxu0 %v1904
      %v2073 = vpop.f32.mrb[0].mxu0
      %v2074 = vadd.f32 %v1895, %v2073
      %v2075 = vpop.f32.mrb[0].mxu0
      %2076 = vmatprep.mubr.f32.mxu0 0.0
      %2077 = vmatmul.mubr.f32.gmra.mrb[0].mxu0 %v1907
      %v2078 = vpop.f32.mrb[0].mxu0
      %v2079 = vadd.f32 %v1895, %v2078
      %v2080 = vpop.f32.mrb[0].mxu0
      %2081 = vmatprep.mubr.f32.mxu0 0.0
      %2082 = vmatmul.mubr.f32.gmra.mrb[0].mxu0 %v1910
      %v2083 = vpop.f32.mrb[0].mxu0
      %v2084 = vadd.f32 %v1895, %v2083
      %v2085 = vpop.f32.mrb[0].mxu0
      %2086 = vmatprep.mubr.f32.mxu0 0.0
      %2087 = vmatmul.mubr.f32.gmra.mrb[0].mxu0 %v1913
      %v2088 = vpop.f32.mrb[0].mxu0
      %v2089 = vadd.f32 %v1895, %v2088
      %v2090 = vpop.f32.mrb[0].mxu0
      %2091 = vmatprep.mubr.f32.mxu0 0.0
      %2092 = vmatmul.mubr.f32.gmra.mrb[0].mxu0 %v1916
      %v2093 = vpop.f32.mrb[0].mxu0
      %v2094 = vadd.f32 %v1895, %v2093
      %v2095 = vpop.f32.mrb[0].mxu0
      %2096 = vmatprep.mubr.f32.mxu0 0.0
      %2097 = vmatmul.mubr.f32.gmra.mrb[0].mxu0 %v1919
      %v2098 = vpop.f32.mrb[0].mxu0
      %v2099 = vadd.f32 %v1895, %v2098
      %v2100 = vpop.f32.mrb[0].mxu0
      %2101 = vmatprep.mubr.f32.mxu0 0.0
      %2102 = vmatmul.mubr.f32.gmra.mrb[0].mxu0 %v1922
      %v2103 = vpop.f32.mrb[0].mxu0
      %v2104 = vadd.f32 %v1895, %v2103
      %v2105 = vpop.f32.mrb[0].mxu0
      %2106 = vmatprep.mubr.f32.mxu0 0.0
      %2107 = vmatmul.mubr.f32.gmra.mrb[0].mxu0 %v1925
      %v2108 = vpop.f32.mrb[0].mxu0
      %v2109 = vadd.f32 %v1895, %v2108
      %v2110 = vpop.f32.mrb[0].mxu0
      %2111 = vmatprep.mubr.f32.mxu0 0.0
      %2112 = vmatmul.mubr.f32.gmra.mrb[0].mxu0 %v1928
      %v2113 = vpop.f32.mrb[0].mxu0
      %v2114 = vadd.f32 %v1895, %v2113
      %v2115 = vpop.f32.mrb[0].mxu0
      %2116 = vmatprep.mubr.f32.mxu0 0.0
      %2117 = vmatmul.mubr.f32.gmra.mrb[0].mxu0 %v1931
      %v2118 = vpop.f32.mrb[0].mxu0
      %v2119 = vadd.f32 %v1895, %v2118
      %v2120 = vpop.f32.mrb[0].mxu0
      %2121 = vmatprep.mubr.f32.mxu0 0.0
      %2122 = vmatmul.mubr.f32.gmra.mrb[0].mxu0 %v1934
      %v2123 = vpop.f32.mrb[0].mxu0
      %v2124 = vadd.f32 %v1895, %v2123
      %v2125 = vpop.f32.mrb[0].mxu0
      %2126 = vmatprep.mubr.f32.mxu0 0.0
      %2127 = vmatmul.mubr.f32.gmra.mrb[0].mxu0 %v1937
      %v2128 = vpop.f32.mrb[0].mxu0
      %v2129 = vadd.f32 %v1895, %v2128
      %v2130 = vpop.f32.mrb[0].mxu0
      %2131 = vmatprep.mubr.f32.mxu0 0.0
      %2132 = vmatmul.mubr.f32.gmra.mrb[0].mxu0 %v1940
      %v2133 = vpop.f32.mrb[0].mxu0
      %v2134 = vadd.f32 %v1895, %v2133
      %v2135 = vpop.f32.mrb[0].mxu0
      %2136 = vmatprep.mubr.f32.mxu0 0.0
      %2137 = vmatmul.mubr.f32.gmra.mrb[0].mxu0 %v1943
      %v2138 = vpop.f32.mrb[0].mxu0
      %v2139 = vadd.f32 %v1895, %v2138
      %v2140 = vpop.f32.mrb[0].mxu0
      %2141 = vmatprep.mubr.f32.mxu0 0.0
      %2142 = vmatmul.mubr.f32.gmra.mrb[0].mxu0 %v1946
      %v2143 = vpop.f32.mrb[0].mxu0
      %v2144 = vadd.f32 %v1895, %v2143
      %v2145 = vpop.f32.mrb[0].mxu0
      %2146 = vmatprep.mubr.f32.mxu0 0.0
      %2147 = vmatmul.mubr.f32.gmra.mrb[0].mxu0 %v1949
      %v2148 = vpop.f32.mrb[0].mxu0
      %v2149 = vadd.f32 %v1895, %v2148
      %v2150 = vpop.f32.mrb[0].mxu0
      %2151 = vmatprep.mubr.f32.mxu0 0.0
      %2152 = vmatmul.mubr.f32.gmra.mrb[0].mxu0 %v1952
      %v2153 = vpop.f32.mrb[0].mxu0
      %v2154 = vadd.f32 %v1895, %v2153
      %v2155 = vpop.f32.mrb[0].mxu0
      %2156 = vmatprep.mubr.f32.mxu0 0.0
      %2157 = vmatmul.mubr.f32.gmra.mrb[0].mxu0 %v1955
      %v2158 = vpop.f32.mrb[0].mxu0
      %v2159 = vadd.f32 %v1895, %v2158
      %v2160 = vpop.f32.mrb[0].mxu0
      %2161 = vmatprep.mubr.f32.mxu0 0.0
      %2162 = vmatmul.mubr.f32.gmra.mrb[0].mxu0 %v1958
      %v2163 = vpop.f32.mrb[0].mxu0
      %v2164 = vadd.f32 %v1895, %v2163
      %v2165 = vpop.f32.mrb[0].mxu0
      %2166 = vmatprep.mubr.f32.mxu0 0.0
      %2167 = vmatmul.mubr.f32.gmra.mrb[0].mxu0 %v1961
      %v2168 = vpop.f32.mrb[0].mxu0
      %v2169 = vadd.f32 %v1895, %v2168
      %v2170 = vpop.f32.mrb[0].mxu0
      %2171 = vmatprep.mubr.f32.mxu0 0.0
      %2172 = vmatmul.mubr.f32.gmra.mrb[0].mxu0 %v1964
      %v2173 = vpop.f32.mrb[0].mxu0
      %v2174 = vadd.f32 %v1895, %v2173
      %v2175 = vpop.f32.mrb[0].mxu0
      %2176 = vmatprep.mubr.f32.mxu0 0.0
      %2177 = vmatmul.mubr.f32.gmra.mrb[0].mxu0 %v1967
      %v2178 = vpop.f32.mrb[0].mxu0
      %v2179 = vadd.f32 %v1895, %v2178
      %v2180 = vpop.f32.mrb[0].mxu0
      %2181 = vmatprep.mubr.f32.mxu0 0.0
      %2182 = vmatmul.mubr.f32.gmra.mrb[0].mxu0 %v1970
      %v2183 = vpop.f32.mrb[0].mxu0
      %v2184 = vadd.f32 %v1895, %v2183
      %v2185 = vpop.f32.mrb[0].mxu0
      %2186 = vmatprep.mubr.f32.mxu0 0.0
      %2187 = vmatmul.mubr.f32.gmra.mrb[0].mxu0 %v1973
      %v2188 = vpop.f32.mrb[0].mxu0
      %v2189 = vadd.f32 %v1895, %v2188
      %v2190 = vpop.f32.mrb[0].mxu0
      %2191 = vmatprep.mubr.f32.mxu0 0.0
      %2192 = vmatmul.mubr.f32.gmra.mrb[0].mxu0 %v1976
      %v2193 = vpop.f32.mrb[0].mxu0
      %v2194 = vadd.f32 %v1895, %v2193
      %v2195 = vpop.f32.mrb[0].mxu0
      %2196 = vmatprep.mubr.f32.mxu0 0.0
      %2197 = vmatmul.mubr.f32.gmra.mrb[0].mxu0 %v1979
      %v2198 = vpop.f32.mrb[0].mxu0
      %v2199 = vadd.f32 %v1895, %v2198
      %v2200 = vpop.f32.mrb[0].mxu0
      %2201 = vmatprep.mubr.f32.mxu0 0.0
      %2202 = vmatmul.mubr.f32.gmra.mrb[0].mxu0 %v1982
      %v2203 = vpop.f32.mrb[0].mxu0
      %v2204 = vadd.f32 %v1895, %v2203
      %v2205 = vpop.f32.mrb[0].mxu0
      %2206 = vmatprep.mubr.f32.mxu0 0.0
      %2207 = vmatmul.mubr.f32.gmra.mrb[0].mxu0 %v1985
      %v2208 = vpop.f32.mrb[0].mxu0
      %v2209 = vadd.f32 %v1895, %v2208
      %v2210 = vpop.f32.mrb[0].mxu0
      %2211 = vmatprep.mubr.f32.mxu0 0.0
      %2212 = vmatmul.mubr.f32.gmra.mrb[0].mxu0 %v1988
      %v2213 = vpop.f32.mrb[0].mxu0
      %v2214 = vadd.f32 %v1895, %v2213
      %v2215 = vpop.f32.mrb[0].mxu0
      %2216 = vmatprep.mubr.f32.mxu0 0.0
      %2217 = vmatmul.mubr.f32.gmra.mrb[0].mxu0 %v1991
      %v2218 = vpop.f32.mrb[0].mxu0
      %v2219 = vadd.f32 %v1895, %v2218
      %v2220 = vpop.f32.mrb[0].mxu0
      %2221 = vdwg.mxu0
      %v2222 = vmax.f32 %v2064, 0.0
      %v2223 = vmax.f32 %v2069, 0.0
      %v2224 = vmax.f32 %v2074, 0.0
      %v2225 = vmax.f32 %v2079, 0.0
      %v2226 = vmax.f32 %v2084, 0.0
      %v2227 = vmax.f32 %v2089, 0.0
      %v2228 = vmax.f32 %v2094, 0.0
      %v2229 = vmax.f32 %v2099, 0.0
      %v2230 = vmax.f32 %v2104, 0.0
      %v2231 = vmax.f32 %v2109, 0.0
      %v2232 = vmax.f32 %v2114, 0.0
      %v2233 = vmax.f32 %v2119, 0.0
      %v2234 = vmax.f32 %v2124, 0.0
      %v2235 = vmax.f32 %v2129, 0.0
      %v2236 = vmax.f32 %v2134, 0.0
      %v2237 = vmax.f32 %v2139, 0.0
      %v2238 = vmax.f32 %v2144, 0.0
      %v2239 = vmax.f32 %v2149, 0.0
      %v2240 = vmax.f32 %v2154, 0.0
      %v2241 = vmax.f32 %v2159, 0.0
      %v2242 = vmax.f32 %v2164, 0.0
      %v2243 = vmax.f32 %v2169, 0.0
      %v2244 = vmax.f32 %v2174, 0.0
      %v2245 = vmax.f32 %v2179, 0.0
      %v2246 = vmax.f32 %v2184, 0.0
      %v2247 = vmax.f32 %v2189, 0.0
      %v2248 = vmax.f32 %v2194, 0.0
      %v2249 = vmax.f32 %v2199, 0.0
      %v2250 = vmax.f32 %v2204, 0.0
      %v2251 = vmax.f32 %v2209, 0.0
      %v2252 = vmax.f32 %v2214, 0.0
      %v2253 = vmax.f32 %v2219, 0.0
      %2254 = vst.msk [vmem:[#allocation3] sm:$0xff] %vm230, 0.0
      %2255 = vst.msk [vmem:[#allocation3 + $0x8] sm:$0xff] %vm230, 0.0
      %2256 = vst.msk [vmem:[#allocation3 + $0x10] sm:$0xff] %vm230, 0.0
      %2257 = vst.msk [vmem:[#allocation3 + $0x18] sm:$0x1] %vm234, 0.0
      %s2258 = scalar_lea.vmem [#allocation3], 544
      %2259 = vst.msk [vmem:[%s2258] sm:$0xff] %vm230, 0.0
      %2260 = vst.msk [vmem:[%s2258 + $0x8] sm:$0xff] %vm230, 0.0
      %2261 = vst.msk [vmem:[%s2258 + $0x10] sm:$0xff] %vm230, 0.0
      %2262 = vst.msk [vmem:[%s2258 + $0x18] sm:$0x1] %vm234, 0.0
      %2263 = vst.msk [vmem:[#allocation3 + $0x7] sm:$0x1] %vm234, 0.0
      %2264 = vst.msk [vmem:[#allocation3 + $0x27] sm:$0x1] %vm234, 0.0
      %2265 = vst.msk [vmem:[#allocation3 + $0x47] sm:$0x1] %vm234, 0.0
      %2266 = vst.msk [vmem:[#allocation3 + $0x67] sm:$0x1] %vm234, 0.0
      %2267 = vst.msk [vmem:[#allocation3 + $0x87] sm:$0x1] %vm234, 0.0
      %2268 = vst.msk [vmem:[#allocation3 + $0xa7] sm:$0x1] %vm234, 0.0
      %2269 = vst.msk [vmem:[#allocation3 + $0xc7] sm:$0x1] %vm234, 0.0
      %2270 = vst.msk [vmem:[#allocation3 + $0xe7] sm:$0x1] %vm234, 0.0
      %2271 = vst.msk [vmem:[#allocation3 + $0x107] sm:$0x1] %vm234, 0.0
      %2272 = vst.msk [vmem:[#allocation3 + $0x127] sm:$0x1] %vm234, 0.0
      %2273 = vst.msk [vmem:[#allocation3 + $0x147] sm:$0x1] %vm234, 0.0
      %2274 = vst.msk [vmem:[#allocation3 + $0x167] sm:$0x1] %vm234, 0.0
      %2275 = vst.msk [vmem:[#allocation3 + $0x187] sm:$0x1] %vm234, 0.0
      %2276 = vst.msk [vmem:[#allocation3 + $0x1a7] sm:$0x1] %vm234, 0.0
      %2277 = vst.msk [vmem:[#allocation3 + $0x1c7] sm:$0x1] %vm234, 0.0
      %2278 = vst.msk [vmem:[#allocation3 + $0x1e7] sm:$0x1] %vm234, 0.0
      %2279 = vst.msk [vmem:[#allocation3 + $0x207] sm:$0x1] %vm234, 0.0
      %2280 = vst.msk [vmem:[#allocation3 + $0x227] sm:$0x1] %vm234, 0.0
      %2281 = vst.msk [vmem:[#allocation3 + $0x18] sm:$0x1] %vm234, 0.0
      %2282 = vst.msk [vmem:[#allocation3 + $0x38] sm:$0x1] %vm234, 0.0
      %2283 = vst.msk [vmem:[#allocation3 + $0x58] sm:$0x1] %vm234, 0.0
      %2284 = vst.msk [vmem:[#allocation3 + $0x78] sm:$0x1] %vm234, 0.0
      %2285 = vst.msk [vmem:[#allocation3 + $0x98] sm:$0x1] %vm234, 0.0
      %2286 = vst.msk [vmem:[#allocation3 + $0xb8] sm:$0x1] %vm234, 0.0
      %2287 = vst.msk [vmem:[#allocation3 + $0xd8] sm:$0x1] %vm234, 0.0
      %2288 = vst.msk [vmem:[#allocation3 + $0xf8] sm:$0x1] %vm234, 0.0
      %2289 = vst.msk [vmem:[#allocation3 + $0x118] sm:$0x1] %vm234, 0.0
      %2290 = vst.msk [vmem:[#allocation3 + $0x138] sm:$0x1] %vm234, 0.0
      %2291 = vst.msk [vmem:[#allocation3 + $0x158] sm:$0x1] %vm234, 0.0
      %2292 = vst.msk [vmem:[#allocation3 + $0x178] sm:$0x1] %vm234, 0.0
      %2293 = vst.msk [vmem:[#allocation3 + $0x198] sm:$0x1] %vm234, 0.0
      %2294 = vst.msk [vmem:[#allocation3 + $0x1b8] sm:$0x1] %vm234, 0.0
      %2295 = vst.msk [vmem:[#allocation3 + $0x1d8] sm:$0x1] %vm234, 0.0
      %2296 = vst.msk [vmem:[#allocation3 + $0x1f8] sm:$0x1] %vm234, 0.0
      %2297 = vst.msk [vmem:[#allocation3 + $0x218] sm:$0x1] %vm234, 0.0
      %2298 = vst.msk [vmem:[#allocation3 + $0x238] sm:$0x1] %vm234, 0.0
      %s2299 = scalar_lea.vmem [#allocation3], 32
      %2300 = vst.msk [vmem:[%s2299 + $0x8] sm:$0xff] %vm230, %v2222
      %2301 = vst.msk [vmem:[%s2299 + $0x10] sm:$0xff] %vm230, %v2223
      %2302 = vst.msk [vmem:[%s2299 + $0x28] sm:$0xff] %vm230, %v2224
      %2303 = vst.msk [vmem:[%s2299 + $0x30] sm:$0xff] %vm230, %v2225
      %2304 = vst.msk [vmem:[%s2299 + $0x48] sm:$0xff] %vm230, %v2226
      %2305 = vst.msk [vmem:[%s2299 + $0x50] sm:$0xff] %vm230, %v2227
      %2306 = vst.msk [vmem:[%s2299 + $0x68] sm:$0xff] %vm230, %v2228
      %2307 = vst.msk [vmem:[%s2299 + $0x70] sm:$0xff] %vm230, %v2229
      %2308 = vst.msk [vmem:[%s2299 + $0x88] sm:$0xff] %vm230, %v2230
      %2309 = vst.msk [vmem:[%s2299 + $0x90] sm:$0xff] %vm230, %v2231
      %2310 = vst.msk [vmem:[%s2299 + $0xa8] sm:$0xff] %vm230, %v2232
      %2311 = vst.msk [vmem:[%s2299 + $0xb0] sm:$0xff] %vm230, %v2233
      %2312 = vst.msk [vmem:[%s2299 + $0xc8] sm:$0xff] %vm230, %v2234
      %2313 = vst.msk [vmem:[%s2299 + $0xd0] sm:$0xff] %vm230, %v2235
      %2314 = vst.msk [vmem:[%s2299 + $0xe8] sm:$0xff] %vm230, %v2236
      %2315 = vst.msk [vmem:[%s2299 + $0xf0] sm:$0xff] %vm230, %v2237
      %2316 = vst.msk [vmem:[%s2299 + $0x108] sm:$0xff] %vm230, %v2238
      %2317 = vst.msk [vmem:[%s2299 + $0x110] sm:$0xff] %vm230, %v2239
      %2318 = vst.msk [vmem:[%s2299 + $0x128] sm:$0xff] %vm230, %v2240
      %2319 = vst.msk [vmem:[%s2299 + $0x130] sm:$0xff] %vm230, %v2241
      %2320 = vst.msk [vmem:[%s2299 + $0x148] sm:$0xff] %vm230, %v2242
      %2321 = vst.msk [vmem:[%s2299 + $0x150] sm:$0xff] %vm230, %v2243
      %2322 = vst.msk [vmem:[%s2299 + $0x168] sm:$0xff] %vm230, %v2244
      %2323 = vst.msk [vmem:[%s2299 + $0x170] sm:$0xff] %vm230, %v2245
      %2324 = vst.msk [vmem:[%s2299 + $0x188] sm:$0xff] %vm230, %v2246
      %2325 = vst.msk [vmem:[%s2299 + $0x190] sm:$0xff] %vm230, %v2247
      %2326 = vst.msk [vmem:[%s2299 + $0x1a8] sm:$0xff] %vm230, %v2248
      %2327 = vst.msk [vmem:[%s2299 + $0x1b0] sm:$0xff] %vm230, %v2249
      %2328 = vst.msk [vmem:[%s2299 + $0x1c8] sm:$0xff] %vm230, %v2250
      %2329 = vst.msk [vmem:[%s2299 + $0x1d0] sm:$0xff] %vm230, %v2251
      %2330 = vst.msk [vmem:[%s2299 + $0x1e8] sm:$0xff] %vm230, %v2252
      %2331 = vst.msk [vmem:[%s2299 + $0x1f0] sm:$0xff] %vm230, %v2253
      %v2332 = vld [vmem:[#allocation3 + $0x7] sm:$0xff]
      %v2333 = vld [vmem:[#allocation3 + $0xf] sm:$0xff]
      %v2334 = vld [vmem:[#allocation3 + $0x27] sm:$0xff]
      %v2335 = vld [vmem:[#allocation3 + $0x2f] sm:$0xff]
      %v2336 = vld [vmem:[#allocation3 + $0x47] sm:$0xff]
      %v2337 = vld [vmem:[#allocation3 + $0x4f] sm:$0xff]
      %v2338 = vld [vmem:[#allocation3 + $0x67] sm:$0xff]
      %v2339 = vld [vmem:[#allocation3 + $0x6f] sm:$0xff]
      %v2340 = vld [vmem:[#allocation3 + $0x87] sm:$0xff]
      %v2341 = vld [vmem:[#allocation3 + $0x8f] sm:$0xff]
      %v2342 = vld [vmem:[#allocation3 + $0xa7] sm:$0xff]
      %v2343 = vld [vmem:[#allocation3 + $0xaf] sm:$0xff]
      %v2344 = vld [vmem:[#allocation3 + $0xc7] sm:$0xff]
      %v2345 = vld [vmem:[#allocation3 + $0xcf] sm:$0xff]
      %v2346 = vld [vmem:[#allocation3 + $0xe7] sm:$0xff]
      %v2347 = vld [vmem:[#allocation3 + $0xef] sm:$0xff]
      %v2348 = vld [vmem:[#allocation3 + $0x107] sm:$0xff]
      %v2349 = vld [vmem:[#allocation3 + $0x10f] sm:$0xff]
      %v2350 = vld [vmem:[#allocation3 + $0x127] sm:$0xff]
      %v2351 = vld [vmem:[#allocation3 + $0x12f] sm:$0xff]
      %v2352 = vld [vmem:[#allocation3 + $0x147] sm:$0xff]
      %v2353 = vld [vmem:[#allocation3 + $0x14f] sm:$0xff]
      %v2354 = vld [vmem:[#allocation3 + $0x167] sm:$0xff]
      %v2355 = vld [vmem:[#allocation3 + $0x16f] sm:$0xff]
      %v2356 = vld [vmem:[#allocation3 + $0x187] sm:$0xff]
      %v2357 = vld [vmem:[#allocation3 + $0x18f] sm:$0xff]
      %v2358 = vld [vmem:[#allocation3 + $0x1a7] sm:$0xff]
      %v2359 = vld [vmem:[#allocation3 + $0x1af] sm:$0xff]
      %v2360 = vld [vmem:[#allocation3 + $0x1c7] sm:$0xff]
      %v2361 = vld [vmem:[#allocation3 + $0x1cf] sm:$0xff]
      %v2362 = vld [vmem:[#allocation3 + $0x1e7] sm:$0xff]
      %v2363 = vld [vmem:[#allocation3 + $0x1ef] sm:$0xff]
      %v2364 = vld [vmem:[#allocation3 + $0x8] sm:$0xff]
      %v2365 = vld [vmem:[#allocation3 + $0x10] sm:$0xff]
      %v2366 = vld [vmem:[#allocation3 + $0x28] sm:$0xff]
      %v2367 = vld [vmem:[#allocation3 + $0x30] sm:$0xff]
      %v2368 = vld [vmem:[#allocation3 + $0x48] sm:$0xff]
      %v2369 = vld [vmem:[#allocation3 + $0x50] sm:$0xff]
      %v2370 = vld [vmem:[#allocation3 + $0x68] sm:$0xff]
      %v2371 = vld [vmem:[#allocation3 + $0x70] sm:$0xff]
      %v2372 = vld [vmem:[#allocation3 + $0x88] sm:$0xff]
      %v2373 = vld [vmem:[#allocation3 + $0x90] sm:$0xff]
      %v2374 = vld [vmem:[#allocation3 + $0xa8] sm:$0xff]
      %v2375 = vld [vmem:[#allocation3 + $0xb0] sm:$0xff]
      %v2376 = vld [vmem:[#allocation3 + $0xc8] sm:$0xff]
      %v2377 = vld [vmem:[#allocation3 + $0xd0] sm:$0xff]
      %v2378 = vld [vmem:[#allocation3 + $0xe8] sm:$0xff]
      %v2379 = vld [vmem:[#allocation3 + $0xf0] sm:$0xff]
      %v2380 = vld [vmem:[#allocation3 + $0x108] sm:$0xff]
      %v2381 = vld [vmem:[#allocation3 + $0x110] sm:$0xff]
      %v2382 = vld [vmem:[#allocation3 + $0x128] sm:$0xff]
      %v2383 = vld [vmem:[#allocation3 + $0x130] sm:$0xff]
      %v2384 = vld [vmem:[#allocation3 + $0x148] sm:$0xff]
      %v2385 = vld [vmem:[#allocation3 + $0x150] sm:$0xff]
      %v2386 = vld [vmem:[#allocation3 + $0x168] sm:$0xff]
      %v2387 = vld [vmem:[#allocation3 + $0x170] sm:$0xff]
      %v2388 = vld [vmem:[#allocation3 + $0x188] sm:$0xff]
      %v2389 = vld [vmem:[#allocation3 + $0x190] sm:$0xff]
      %v2390 = vld [vmem:[#allocation3 + $0x1a8] sm:$0xff]
      %v2391 = vld [vmem:[#allocation3 + $0x1b0] sm:$0xff]
      %v2392 = vld [vmem:[#allocation3 + $0x1c8] sm:$0xff]
      %v2393 = vld [vmem:[#allocation3 + $0x1d0] sm:$0xff]
      %v2394 = vld [vmem:[#allocation3 + $0x1e8] sm:$0xff]
      %v2395 = vld [vmem:[#allocation3 + $0x1f0] sm:$0xff]
      %v2396 = vld [vmem:[#allocation3 + $0x9] sm:$0xff]
      %v2397 = vld [vmem:[#allocation3 + $0x11] sm:$0xff]
      %v2398 = vld [vmem:[#allocation3 + $0x29] sm:$0xff]
      %v2399 = vld [vmem:[#allocation3 + $0x31] sm:$0xff]
      %v2400 = vld [vmem:[#allocation3 + $0x49] sm:$0xff]
      %v2401 = vld [vmem:[#allocation3 + $0x51] sm:$0xff]
      %v2402 = vld [vmem:[#allocation3 + $0x69] sm:$0xff]
      %v2403 = vld [vmem:[#allocation3 + $0x71] sm:$0xff]
      %v2404 = vld [vmem:[#allocation3 + $0x89] sm:$0xff]
      %v2405 = vld [vmem:[#allocation3 + $0x91] sm:$0xff]
      %v2406 = vld [vmem:[#allocation3 + $0xa9] sm:$0xff]
      %v2407 = vld [vmem:[#allocation3 + $0xb1] sm:$0xff]
      %v2408 = vld [vmem:[#allocation3 + $0xc9] sm:$0xff]
      %v2409 = vld [vmem:[#allocation3 + $0xd1] sm:$0xff]
      %v2410 = vld [vmem:[#allocation3 + $0xe9] sm:$0xff]
      %v2411 = vld [vmem:[#allocation3 + $0xf1] sm:$0xff]
      %v2412 = vld [vmem:[#allocation3 + $0x109] sm:$0xff]
      %v2413 = vld [vmem:[#allocation3 + $0x111] sm:$0xff]
      %v2414 = vld [vmem:[#allocation3 + $0x129] sm:$0xff]
      %v2415 = vld [vmem:[#allocation3 + $0x131] sm:$0xff]
      %v2416 = vld [vmem:[#allocation3 + $0x149] sm:$0xff]
      %v2417 = vld [vmem:[#allocation3 + $0x151] sm:$0xff]
      %v2418 = vld [vmem:[#allocation3 + $0x169] sm:$0xff]
      %v2419 = vld [vmem:[#allocation3 + $0x171] sm:$0xff]
      %v2420 = vld [vmem:[#allocation3 + $0x189] sm:$0xff]
      %v2421 = vld [vmem:[#allocation3 + $0x191] sm:$0xff]
      %v2422 = vld [vmem:[#allocation3 + $0x1a9] sm:$0xff]
      %v2423 = vld [vmem:[#allocation3 + $0x1b1] sm:$0xff]
      %v2424 = vld [vmem:[#allocation3 + $0x1c9] sm:$0xff]
      %v2425 = vld [vmem:[#allocation3 + $0x1d1] sm:$0xff]
      %v2426 = vld [vmem:[#allocation3 + $0x1e9] sm:$0xff]
      %v2427 = vld [vmem:[#allocation3 + $0x1f1] sm:$0xff]
      %v2428 = vld [vmem:[%s2299 + $0x7] sm:$0xff]
      %v2429 = vld [vmem:[%s2299 + $0xf] sm:$0xff]
      %v2430 = vld [vmem:[%s2299 + $0x27] sm:$0xff]
      %v2431 = vld [vmem:[%s2299 + $0x2f] sm:$0xff]
      %v2432 = vld [vmem:[%s2299 + $0x47] sm:$0xff]
      %v2433 = vld [vmem:[%s2299 + $0x4f] sm:$0xff]
      %v2434 = vld [vmem:[%s2299 + $0x67] sm:$0xff]
      %v2435 = vld [vmem:[%s2299 + $0x6f] sm:$0xff]
      %v2436 = vld [vmem:[%s2299 + $0x87] sm:$0xff]
      %v2437 = vld [vmem:[%s2299 + $0x8f] sm:$0xff]
      %v2438 = vld [vmem:[%s2299 + $0xa7] sm:$0xff]
      %v2439 = vld [vmem:[%s2299 + $0xaf] sm:$0xff]
      %v2440 = vld [vmem:[%s2299 + $0xc7] sm:$0xff]
      %v2441 = vld [vmem:[%s2299 + $0xcf] sm:$0xff]
      %v2442 = vld [vmem:[%s2299 + $0xe7] sm:$0xff]
      %v2443 = vld [vmem:[%s2299 + $0xef] sm:$0xff]
      %v2444 = vld [vmem:[%s2299 + $0x107] sm:$0xff]
      %v2445 = vld [vmem:[%s2299 + $0x10f] sm:$0xff]
      %v2446 = vld [vmem:[%s2299 + $0x127] sm:$0xff]
      %v2447 = vld [vmem:[%s2299 + $0x12f] sm:$0xff]
      %v2448 = vld [vmem:[%s2299 + $0x147] sm:$0xff]
      %v2449 = vld [vmem:[%s2299 + $0x14f] sm:$0xff]
      %v2450 = vld [vmem:[%s2299 + $0x167] sm:$0xff]
      %v2451 = vld [vmem:[%s2299 + $0x16f] sm:$0xff]
      %v2452 = vld [vmem:[%s2299 + $0x187] sm:$0xff]
      %v2453 = vld [vmem:[%s2299 + $0x18f] sm:$0xff]
      %v2454 = vld [vmem:[%s2299 + $0x1a7] sm:$0xff]
      %v2455 = vld [vmem:[%s2299 + $0x1af] sm:$0xff]
      %v2456 = vld [vmem:[%s2299 + $0x1c7] sm:$0xff]
      %v2457 = vld [vmem:[%s2299 + $0x1cf] sm:$0xff]
      %v2458 = vld [vmem:[%s2299 + $0x1e7] sm:$0xff]
      %v2459 = vld [vmem:[%s2299 + $0x1ef] sm:$0xff]
      %v2460 = vld [vmem:[%s2299 + $0x8] sm:$0xff]
      %v2461 = vld [vmem:[%s2299 + $0x10] sm:$0xff]
      %v2462 = vld [vmem:[%s2299 + $0x28] sm:$0xff]
      %v2463 = vld [vmem:[%s2299 + $0x30] sm:$0xff]
      %v2464 = vld [vmem:[%s2299 + $0x48] sm:$0xff]
      %v2465 = vld [vmem:[%s2299 + $0x50] sm:$0xff]
      %v2466 = vld [vmem:[%s2299 + $0x68] sm:$0xff]
      %v2467 = vld [vmem:[%s2299 + $0x70] sm:$0xff]
      %v2468 = vld [vmem:[%s2299 + $0x88] sm:$0xff]
      %v2469 = vld [vmem:[%s2299 + $0x90] sm:$0xff]
      %v2470 = vld [vmem:[%s2299 + $0xa8] sm:$0xff]
      %v2471 = vld [vmem:[%s2299 + $0xb0] sm:$0xff]
      %v2472 = vld [vmem:[%s2299 + $0xc8] sm:$0xff]
      %v2473 = vld [vmem:[%s2299 + $0xd0] sm:$0xff]
      %v2474 = vld [vmem:[%s2299 + $0xe8] sm:$0xff]
      %v2475 = vld [vmem:[%s2299 + $0xf0] sm:$0xff]
      %v2476 = vld [vmem:[%s2299 + $0x108] sm:$0xff]
      %v2477 = vld [vmem:[%s2299 + $0x110] sm:$0xff]
      %v2478 = vld [vmem:[%s2299 + $0x128] sm:$0xff]
      %v2479 = vld [vmem:[%s2299 + $0x130] sm:$0xff]
      %v2480 = vld [vmem:[%s2299 + $0x148] sm:$0xff]
      %v2481 = vld [vmem:[%s2299 + $0x150] sm:$0xff]
      %v2482 = vld [vmem:[%s2299 + $0x168] sm:$0xff]
      %v2483 = vld [vmem:[%s2299 + $0x170] sm:$0xff]
      %v2484 = vld [vmem:[%s2299 + $0x188] sm:$0xff]
      %v2485 = vld [vmem:[%s2299 + $0x190] sm:$0xff]
      %v2486 = vld [vmem:[%s2299 + $0x1a8] sm:$0xff]
      %v2487 = vld [vmem:[%s2299 + $0x1b0] sm:$0xff]
      %v2488 = vld [vmem:[%s2299 + $0x1c8] sm:$0xff]
      %v2489 = vld [vmem:[%s2299 + $0x1d0] sm:$0xff]
      %v2490 = vld [vmem:[%s2299 + $0x1e8] sm:$0xff]
      %v2491 = vld [vmem:[%s2299 + $0x1f0] sm:$0xff]
      %v2492 = vld [vmem:[%s2299 + $0x9] sm:$0xff]
      %v2493 = vld [vmem:[%s2299 + $0x11] sm:$0xff]
      %v2494 = vld [vmem:[%s2299 + $0x29] sm:$0xff]
      %v2495 = vld [vmem:[%s2299 + $0x31] sm:$0xff]
      %v2496 = vld [vmem:[%s2299 + $0x49] sm:$0xff]
      %v2497 = vld [vmem:[%s2299 + $0x51] sm:$0xff]
      %v2498 = vld [vmem:[%s2299 + $0x69] sm:$0xff]
      %v2499 = vld [vmem:[%s2299 + $0x71] sm:$0xff]
      %v2500 = vld [vmem:[%s2299 + $0x89] sm:$0xff]
      %v2501 = vld [vmem:[%s2299 + $0x91] sm:$0xff]
      %v2502 = vld [vmem:[%s2299 + $0xa9] sm:$0xff]
      %v2503 = vld [vmem:[%s2299 + $0xb1] sm:$0xff]
      %v2504 = vld [vmem:[%s2299 + $0xc9] sm:$0xff]
      %v2505 = vld [vmem:[%s2299 + $0xd1] sm:$0xff]
      %v2506 = vld [vmem:[%s2299 + $0xe9] sm:$0xff]
      %v2507 = vld [vmem:[%s2299 + $0xf1] sm:$0xff]
      %v2508 = vld [vmem:[%s2299 + $0x109] sm:$0xff]
      %v2509 = vld [vmem:[%s2299 + $0x111] sm:$0xff]
      %v2510 = vld [vmem:[%s2299 + $0x129] sm:$0xff]
      %v2511 = vld [vmem:[%s2299 + $0x131] sm:$0xff]
      %v2512 = vld [vmem:[%s2299 + $0x149] sm:$0xff]
      %v2513 = vld [vmem:[%s2299 + $0x151] sm:$0xff]
      %v2514 = vld [vmem:[%s2299 + $0x169] sm:$0xff]
      %v2515 = vld [vmem:[%s2299 + $0x171] sm:$0xff]
      %v2516 = vld [vmem:[%s2299 + $0x189] sm:$0xff]
      %v2517 = vld [vmem:[%s2299 + $0x191] sm:$0xff]
      %v2518 = vld [vmem:[%s2299 + $0x1a9] sm:$0xff]
      %v2519 = vld [vmem:[%s2299 + $0x1b1] sm:$0xff]
      %v2520 = vld [vmem:[%s2299 + $0x1c9] sm:$0xff]
      %v2521 = vld [vmem:[%s2299 + $0x1d1] sm:$0xff]
      %v2522 = vld [vmem:[%s2299 + $0x1e9] sm:$0xff]
      %v2523 = vld [vmem:[%s2299 + $0x1f1] sm:$0xff]
      %s2524 = scalar_lea.vmem [#allocation3], 64
      %v2525 = vld [vmem:[%s2524 + $0x7] sm:$0xff]
      %v2526 = vld [vmem:[%s2524 + $0xf] sm:$0xff]
      %v2527 = vld [vmem:[%s2524 + $0x27] sm:$0xff]
      %v2528 = vld [vmem:[%s2524 + $0x2f] sm:$0xff]
      %v2529 = vld [vmem:[%s2524 + $0x47] sm:$0xff]
      %v2530 = vld [vmem:[%s2524 + $0x4f] sm:$0xff]
      %v2531 = vld [vmem:[%s2524 + $0x67] sm:$0xff]
      %v2532 = vld [vmem:[%s2524 + $0x6f] sm:$0xff]
      %v2533 = vld [vmem:[%s2524 + $0x87] sm:$0xff]
      %v2534 = vld [vmem:[%s2524 + $0x8f] sm:$0xff]
      %v2535 = vld [vmem:[%s2524 + $0xa7] sm:$0xff]
      %v2536 = vld [vmem:[%s2524 + $0xaf] sm:$0xff]
      %v2537 = vld [vmem:[%s2524 + $0xc7] sm:$0xff]
      %v2538 = vld [vmem:[%s2524 + $0xcf] sm:$0xff]
      %v2539 = vld [vmem:[%s2524 + $0xe7] sm:$0xff]
      %v2540 = vld [vmem:[%s2524 + $0xef] sm:$0xff]
      %v2541 = vld [vmem:[%s2524 + $0x107] sm:$0xff]
      %v2542 = vld [vmem:[%s2524 + $0x10f] sm:$0xff]
      %v2543 = vld [vmem:[%s2524 + $0x127] sm:$0xff]
      %v2544 = vld [vmem:[%s2524 + $0x12f] sm:$0xff]
      %v2545 = vld [vmem:[%s2524 + $0x147] sm:$0xff]
      %v2546 = vld [vmem:[%s2524 + $0x14f] sm:$0xff]
      %v2547 = vld [vmem:[%s2524 + $0x167] sm:$0xff]
      %v2548 = vld [vmem:[%s2524 + $0x16f] sm:$0xff]
      %v2549 = vld [vmem:[%s2524 + $0x187] sm:$0xff]
      %v2550 = vld [vmem:[%s2524 + $0x18f] sm:$0xff]
      %v2551 = vld [vmem:[%s2524 + $0x1a7] sm:$0xff]
      %v2552 = vld [vmem:[%s2524 + $0x1af] sm:$0xff]
      %v2553 = vld [vmem:[%s2524 + $0x1c7] sm:$0xff]
      %v2554 = vld [vmem:[%s2524 + $0x1cf] sm:$0xff]
      %v2555 = vld [vmem:[%s2524 + $0x1e7] sm:$0xff]
      %v2556 = vld [vmem:[%s2524 + $0x1ef] sm:$0xff]
      %v2557 = vld [vmem:[%s2524 + $0x8] sm:$0xff]
      %v2558 = vld [vmem:[%s2524 + $0x10] sm:$0xff]
      %v2559 = vld [vmem:[%s2524 + $0x28] sm:$0xff]
      %v2560 = vld [vmem:[%s2524 + $0x30] sm:$0xff]
      %v2561 = vld [vmem:[%s2524 + $0x48] sm:$0xff]
      %v2562 = vld [vmem:[%s2524 + $0x50] sm:$0xff]
      %v2563 = vld [vmem:[%s2524 + $0x68] sm:$0xff]
      %v2564 = vld [vmem:[%s2524 + $0x70] sm:$0xff]
      %v2565 = vld [vmem:[%s2524 + $0x88] sm:$0xff]
      %v2566 = vld [vmem:[%s2524 + $0x90] sm:$0xff]
      %v2567 = vld [vmem:[%s2524 + $0xa8] sm:$0xff]
      %v2568 = vld [vmem:[%s2524 + $0xb0] sm:$0xff]
      %v2569 = vld [vmem:[%s2524 + $0xc8] sm:$0xff]
      %v2570 = vld [vmem:[%s2524 + $0xd0] sm:$0xff]
      %v2571 = vld [vmem:[%s2524 + $0xe8] sm:$0xff]
      %v2572 = vld [vmem:[%s2524 + $0xf0] sm:$0xff]
      %v2573 = vld [vmem:[%s2524 + $0x108] sm:$0xff]
      %v2574 = vld [vmem:[%s2524 + $0x110] sm:$0xff]
      %v2575 = vld [vmem:[%s2524 + $0x128] sm:$0xff]
      %v2576 = vld [vmem:[%s2524 + $0x130] sm:$0xff]
      %v2577 = vld [vmem:[%s2524 + $0x148] sm:$0xff]
      %v2578 = vld [vmem:[%s2524 + $0x150] sm:$0xff]
      %v2579 = vld [vmem:[%s2524 + $0x168] sm:$0xff]
      %v2580 = vld [vmem:[%s2524 + $0x170] sm:$0xff]
      %v2581 = vld [vmem:[%s2524 + $0x188] sm:$0xff]
      %v2582 = vld [vmem:[%s2524 + $0x190] sm:$0xff]
      %v2583 = vld [vmem:[%s2524 + $0x1a8] sm:$0xff]
      %v2584 = vld [vmem:[%s2524 + $0x1b0] sm:$0xff]
      %v2585 = vld [vmem:[%s2524 + $0x1c8] sm:$0xff]
      %v2586 = vld [vmem:[%s2524 + $0x1d0] sm:$0xff]
      %v2587 = vld [vmem:[%s2524 + $0x1e8] sm:$0xff]
      %v2588 = vld [vmem:[%s2524 + $0x1f0] sm:$0xff]
      %v2589 = vld [vmem:[%s2524 + $0x9] sm:$0xff]
      %v2590 = vld [vmem:[%s2524 + $0x11] sm:$0xff]
      %v2591 = vld [vmem:[%s2524 + $0x29] sm:$0xff]
      %v2592 = vld [vmem:[%s2524 + $0x31] sm:$0xff]
      %v2593 = vld [vmem:[%s2524 + $0x49] sm:$0xff]
      %v2594 = vld [vmem:[%s2524 + $0x51] sm:$0xff]
      %v2595 = vld [vmem:[%s2524 + $0x69] sm:$0xff]
      %v2596 = vld [vmem:[%s2524 + $0x71] sm:$0xff]
      %v2597 = vld [vmem:[%s2524 + $0x89] sm:$0xff]
      %v2598 = vld [vmem:[%s2524 + $0x91] sm:$0xff]
      %v2599 = vld [vmem:[%s2524 + $0xa9] sm:$0xff]
      %v2600 = vld [vmem:[%s2524 + $0xb1] sm:$0xff]
      %v2601 = vld [vmem:[%s2524 + $0xc9] sm:$0xff]
      %v2602 = vld [vmem:[%s2524 + $0xd1] sm:$0xff]
      %v2603 = vld [vmem:[%s2524 + $0xe9] sm:$0xff]
      %v2604 = vld [vmem:[%s2524 + $0xf1] sm:$0xff]
      %v2605 = vld [vmem:[%s2524 + $0x109] sm:$0xff]
      %v2606 = vld [vmem:[%s2524 + $0x111] sm:$0xff]
      %v2607 = vld [vmem:[%s2524 + $0x129] sm:$0xff]
      %v2608 = vld [vmem:[%s2524 + $0x131] sm:$0xff]
      %v2609 = vld [vmem:[%s2524 + $0x149] sm:$0xff]
      %v2610 = vld [vmem:[%s2524 + $0x151] sm:$0xff]
      %v2611 = vld [vmem:[%s2524 + $0x169] sm:$0xff]
      %v2612 = vld [vmem:[%s2524 + $0x171] sm:$0xff]
      %v2613 = vld [vmem:[%s2524 + $0x189] sm:$0xff]
      %v2614 = vld [vmem:[%s2524 + $0x191] sm:$0xff]
      %v2615 = vld [vmem:[%s2524 + $0x1a9] sm:$0xff]
      %v2616 = vld [vmem:[%s2524 + $0x1b1] sm:$0xff]
      %v2617 = vld [vmem:[%s2524 + $0x1c9] sm:$0xff]
      %v2618 = vld [vmem:[%s2524 + $0x1d1] sm:$0xff]
      %v2619 = vld [vmem:[%s2524 + $0x1e9] sm:$0xff]
      %v2620 = vld [vmem:[%s2524 + $0x1f1] sm:$0xff]
      %2653 = vrot.lane.b32.xlu0 %v2364, 4
      %v2654 = vpop.permute.xlu0 %2653
      %2655 = vrot.lane.b32.xlu0 %v2365, 4
      %v2656 = vpop.permute.xlu0 %2655
      %2657 = vrot.lane.b32.xlu0 %v2366, 4
      %v2658 = vpop.permute.xlu0 %2657
      %2659 = vrot.lane.b32.xlu0 %v2367, 4
      %v2660 = vpop.permute.xlu0 %2659
      %2661 = vrot.lane.b32.xlu0 %v2368, 4
      %v2662 = vpop.permute.xlu0 %2661
      %2663 = vrot.lane.b32.xlu0 %v2369, 4
      %v2664 = vpop.permute.xlu0 %2663
      %2665 = vrot.lane.b32.xlu0 %v2370, 4
      %v2666 = vpop.permute.xlu0 %2665
      %2667 = vrot.lane.b32.xlu0 %v2371, 4
      %v2668 = vpop.permute.xlu0 %2667
      %2669 = vrot.lane.b32.xlu0 %v2372, 4
      %v2670 = vpop.permute.xlu0 %2669
      %2671 = vrot.lane.b32.xlu0 %v2373, 4
      %v2672 = vpop.permute.xlu0 %2671
      %2673 = vrot.lane.b32.xlu0 %v2374, 4
      %v2674 = vpop.permute.xlu0 %2673
      %2675 = vrot.lane.b32.xlu0 %v2375, 4
      %v2676 = vpop.permute.xlu0 %2675
      %2677 = vrot.lane.b32.xlu0 %v2376, 4
      %v2678 = vpop.permute.xlu0 %2677
      %2679 = vrot.lane.b32.xlu0 %v2377, 4
      %v2680 = vpop.permute.xlu0 %2679
      %2681 = vrot.lane.b32.xlu0 %v2378, 4
      %v2682 = vpop.permute.xlu0 %2681
      %2683 = vrot.lane.b32.xlu0 %v2379, 4
      %v2684 = vpop.permute.xlu0 %2683
      %2685 = vrot.lane.b32.xlu0 %v2380, 4
      %v2686 = vpop.permute.xlu0 %2685
      %2687 = vrot.lane.b32.xlu0 %v2381, 4
      %v2688 = vpop.permute.xlu0 %2687
      %2689 = vrot.lane.b32.xlu0 %v2382, 4
      %v2690 = vpop.permute.xlu0 %2689
      %2691 = vrot.lane.b32.xlu0 %v2383, 4
      %v2692 = vpop.permute.xlu0 %2691
      %2693 = vrot.lane.b32.xlu0 %v2384, 4
      %v2694 = vpop.permute.xlu0 %2693
      %2695 = vrot.lane.b32.xlu0 %v2385, 4
      %v2696 = vpop.permute.xlu0 %2695
      %2697 = vrot.lane.b32.xlu0 %v2386, 4
      %v2698 = vpop.permute.xlu0 %2697
      %2699 = vrot.lane.b32.xlu0 %v2387, 4
      %v2700 = vpop.permute.xlu0 %2699
      %2701 = vrot.lane.b32.xlu0 %v2388, 4
      %v2702 = vpop.permute.xlu0 %2701
      %2703 = vrot.lane.b32.xlu0 %v2389, 4
      %v2704 = vpop.permute.xlu0 %2703
      %2705 = vrot.lane.b32.xlu0 %v2390, 4
      %v2706 = vpop.permute.xlu0 %2705
      %2707 = vrot.lane.b32.xlu0 %v2391, 4
      %v2708 = vpop.permute.xlu0 %2707
      %2709 = vrot.lane.b32.xlu0 %v2392, 4
      %v2710 = vpop.permute.xlu0 %2709
      %2711 = vrot.lane.b32.xlu0 %v2393, 4
      %v2712 = vpop.permute.xlu0 %2711
      %2713 = vrot.lane.b32.xlu0 %v2394, 4
      %v2714 = vpop.permute.xlu0 %2713
      %2715 = vrot.lane.b32.xlu0 %v2395, 4
      %v2716 = vpop.permute.xlu0 %2715
      %2781 = vrot.lane.b32.xlu0 %v2396, 8
      %v2782 = vpop.permute.xlu0 %2781
      %2783 = vrot.lane.b32.xlu0 %v2397, 8
      %v2784 = vpop.permute.xlu0 %2783
      %2785 = vrot.lane.b32.xlu0 %v2398, 8
      %v2786 = vpop.permute.xlu0 %2785
      %2787 = vrot.lane.b32.xlu0 %v2399, 8
      %v2788 = vpop.permute.xlu0 %2787
      %2789 = vrot.lane.b32.xlu0 %v2400, 8
      %v2790 = vpop.permute.xlu0 %2789
      %2791 = vrot.lane.b32.xlu0 %v2401, 8
      %v2792 = vpop.permute.xlu0 %2791
      %2793 = vrot.lane.b32.xlu0 %v2402, 8
      %v2794 = vpop.permute.xlu0 %2793
      %2795 = vrot.lane.b32.xlu0 %v2403, 8
      %v2796 = vpop.permute.xlu0 %2795
      %2797 = vrot.lane.b32.xlu0 %v2404, 8
      %v2798 = vpop.permute.xlu0 %2797
      %2799 = vrot.lane.b32.xlu0 %v2405, 8
      %v2800 = vpop.permute.xlu0 %2799
      %2801 = vrot.lane.b32.xlu0 %v2406, 8
      %v2802 = vpop.permute.xlu0 %2801
      %2803 = vrot.lane.b32.xlu0 %v2407, 8
      %v2804 = vpop.permute.xlu0 %2803
      %2805 = vrot.lane.b32.xlu0 %v2408, 8
      %v2806 = vpop.permute.xlu0 %2805
      %2807 = vrot.lane.b32.xlu0 %v2409, 8
      %v2808 = vpop.permute.xlu0 %2807
      %2809 = vrot.lane.b32.xlu0 %v2410, 8
      %v2810 = vpop.permute.xlu0 %2809
      %2811 = vrot.lane.b32.xlu0 %v2411, 8
      %v2812 = vpop.permute.xlu0 %2811
      %2813 = vrot.lane.b32.xlu0 %v2412, 8
      %v2814 = vpop.permute.xlu0 %2813
      %2815 = vrot.lane.b32.xlu0 %v2413, 8
      %v2816 = vpop.permute.xlu0 %2815
      %2817 = vrot.lane.b32.xlu0 %v2414, 8
      %v2818 = vpop.permute.xlu0 %2817
      %2819 = vrot.lane.b32.xlu0 %v2415, 8
      %v2820 = vpop.permute.xlu0 %2819
      %2821 = vrot.lane.b32.xlu0 %v2416, 8
      %v2822 = vpop.permute.xlu0 %2821
      %2823 = vrot.lane.b32.xlu0 %v2417, 8
      %v2824 = vpop.permute.xlu0 %2823
      %2825 = vrot.lane.b32.xlu0 %v2418, 8
      %v2826 = vpop.permute.xlu0 %2825
      %2827 = vrot.lane.b32.xlu0 %v2419, 8
      %v2828 = vpop.permute.xlu0 %2827
      %2829 = vrot.lane.b32.xlu0 %v2420, 8
      %v2830 = vpop.permute.xlu0 %2829
      %2831 = vrot.lane.b32.xlu0 %v2421, 8
      %v2832 = vpop.permute.xlu0 %2831
      %2833 = vrot.lane.b32.xlu0 %v2422, 8
      %v2834 = vpop.permute.xlu0 %2833
      %2835 = vrot.lane.b32.xlu0 %v2423, 8
      %v2836 = vpop.permute.xlu0 %2835
      %2837 = vrot.lane.b32.xlu0 %v2424, 8
      %v2838 = vpop.permute.xlu0 %2837
      %2839 = vrot.lane.b32.xlu0 %v2425, 8
      %v2840 = vpop.permute.xlu0 %2839
      %2841 = vrot.lane.b32.xlu0 %v2426, 8
      %v2842 = vpop.permute.xlu0 %2841
      %2843 = vrot.lane.b32.xlu0 %v2427, 8
      %v2844 = vpop.permute.xlu0 %2843
      %2909 = vrot.lane.b32.xlu0 %v2428, 12
      %v2910 = vpop.permute.xlu0 %2909
      %2911 = vrot.lane.b32.xlu0 %v2429, 12
      %v2912 = vpop.permute.xlu0 %2911
      %2913 = vrot.lane.b32.xlu0 %v2430, 12
      %v2914 = vpop.permute.xlu0 %2913
      %2915 = vrot.lane.b32.xlu0 %v2431, 12
      %v2916 = vpop.permute.xlu0 %2915
      %2917 = vrot.lane.b32.xlu0 %v2432, 12
      %v2918 = vpop.permute.xlu0 %2917
      %2919 = vrot.lane.b32.xlu0 %v2433, 12
      %v2920 = vpop.permute.xlu0 %2919
      %2921 = vrot.lane.b32.xlu0 %v2434, 12
      %v2922 = vpop.permute.xlu0 %2921
      %2923 = vrot.lane.b32.xlu0 %v2435, 12
      %v2924 = vpop.permute.xlu0 %2923
      %2925 = vrot.lane.b32.xlu0 %v2436, 12
      %v2926 = vpop.permute.xlu0 %2925
      %2927 = vrot.lane.b32.xlu0 %v2437, 12
      %v2928 = vpop.permute.xlu0 %2927
      %2929 = vrot.lane.b32.xlu0 %v2438, 12
      %v2930 = vpop.permute.xlu0 %2929
      %2931 = vrot.lane.b32.xlu0 %v2439, 12
      %v2932 = vpop.permute.xlu0 %2931
      %2933 = vrot.lane.b32.xlu0 %v2440, 12
      %v2934 = vpop.permute.xlu0 %2933
      %2935 = vrot.lane.b32.xlu0 %v2441, 12
      %v2936 = vpop.permute.xlu0 %2935
      %2937 = vrot.lane.b32.xlu0 %v2442, 12
      %v2938 = vpop.permute.xlu0 %2937
      %2939 = vrot.lane.b32.xlu0 %v2443, 12
      %v2940 = vpop.permute.xlu0 %2939
      %2941 = vrot.lane.b32.xlu0 %v2444, 12
      %v2942 = vpop.permute.xlu0 %2941
      %2943 = vrot.lane.b32.xlu0 %v2445, 12
      %v2944 = vpop.permute.xlu0 %2943
      %2945 = vrot.lane.b32.xlu0 %v2446, 12
      %v2946 = vpop.permute.xlu0 %2945
      %2947 = vrot.lane.b32.xlu0 %v2447, 12
      %v2948 = vpop.permute.xlu0 %2947
      %2949 = vrot.lane.b32.xlu0 %v2448, 12
      %v2950 = vpop.permute.xlu0 %2949
      %2951 = vrot.lane.b32.xlu0 %v2449, 12
      %v2952 = vpop.permute.xlu0 %2951
      %2953 = vrot.lane.b32.xlu0 %v2450, 12
      %v2954 = vpop.permute.xlu0 %2953
      %2955 = vrot.lane.b32.xlu0 %v2451, 12
      %v2956 = vpop.permute.xlu0 %2955
      %2957 = vrot.lane.b32.xlu0 %v2452, 12
      %v2958 = vpop.permute.xlu0 %2957
      %2959 = vrot.lane.b32.xlu0 %v2453, 12
      %v2960 = vpop.permute.xlu0 %2959
      %2961 = vrot.lane.b32.xlu0 %v2454, 12
      %v2962 = vpop.permute.xlu0 %2961
      %2963 = vrot.lane.b32.xlu0 %v2455, 12
      %v2964 = vpop.permute.xlu0 %2963
      %2965 = vrot.lane.b32.xlu0 %v2456, 12
      %v2966 = vpop.permute.xlu0 %2965
      %2967 = vrot.lane.b32.xlu0 %v2457, 12
      %v2968 = vpop.permute.xlu0 %2967
      %2969 = vrot.lane.b32.xlu0 %v2458, 12
      %v2970 = vpop.permute.xlu0 %2969
      %2971 = vrot.lane.b32.xlu0 %v2459, 12
      %v2972 = vpop.permute.xlu0 %2971
      %3037 = vrot.lane.b32.xlu0 %v2460, 16
      %v3038 = vpop.permute.xlu0 %3037
      %3039 = vrot.lane.b32.xlu0 %v2461, 16
      %v3040 = vpop.permute.xlu0 %3039
      %3041 = vrot.lane.b32.xlu0 %v2462, 16
      %v3042 = vpop.permute.xlu0 %3041
      %3043 = vrot.lane.b32.xlu0 %v2463, 16
      %v3044 = vpop.permute.xlu0 %3043
      %3045 = vrot.lane.b32.xlu0 %v2464, 16
      %v3046 = vpop.permute.xlu0 %3045
      %3047 = vrot.lane.b32.xlu0 %v2465, 16
      %v3048 = vpop.permute.xlu0 %3047
      %3049 = vrot.lane.b32.xlu0 %v2466, 16
      %v3050 = vpop.permute.xlu0 %3049
      %3051 = vrot.lane.b32.xlu0 %v2467, 16
      %v3052 = vpop.permute.xlu0 %3051
      %3053 = vrot.lane.b32.xlu0 %v2468, 16
      %v3054 = vpop.permute.xlu0 %3053
      %3055 = vrot.lane.b32.xlu0 %v2469, 16
      %v3056 = vpop.permute.xlu0 %3055
      %3057 = vrot.lane.b32.xlu0 %v2470, 16
      %v3058 = vpop.permute.xlu0 %3057
      %3059 = vrot.lane.b32.xlu0 %v2471, 16
      %v3060 = vpop.permute.xlu0 %3059
      %3061 = vrot.lane.b32.xlu0 %v2472, 16
      %v3062 = vpop.permute.xlu0 %3061
      %3063 = vrot.lane.b32.xlu0 %v2473, 16
      %v3064 = vpop.permute.xlu0 %3063
      %3065 = vrot.lane.b32.xlu0 %v2474, 16
      %v3066 = vpop.permute.xlu0 %3065
      %3067 = vrot.lane.b32.xlu0 %v2475, 16
      %v3068 = vpop.permute.xlu0 %3067
      %3069 = vrot.lane.b32.xlu0 %v2476, 16
      %v3070 = vpop.permute.xlu0 %3069
      %3071 = vrot.lane.b32.xlu0 %v2477, 16
      %v3072 = vpop.permute.xlu0 %3071
      %3073 = vrot.lane.b32.xlu0 %v2478, 16
      %v3074 = vpop.permute.xlu0 %3073
      %3075 = vrot.lane.b32.xlu0 %v2479, 16
      %v3076 = vpop.permute.xlu0 %3075
      %3077 = vrot.lane.b32.xlu0 %v2480, 16
      %v3078 = vpop.permute.xlu0 %3077
      %3079 = vrot.lane.b32.xlu0 %v2481, 16
      %v3080 = vpop.permute.xlu0 %3079
      %3081 = vrot.lane.b32.xlu0 %v2482, 16
      %v3082 = vpop.permute.xlu0 %3081
      %3083 = vrot.lane.b32.xlu0 %v2483, 16
      %v3084 = vpop.permute.xlu0 %3083
      %3085 = vrot.lane.b32.xlu0 %v2484, 16
      %v3086 = vpop.permute.xlu0 %3085
      %3087 = vrot.lane.b32.xlu0 %v2485, 16
      %v3088 = vpop.permute.xlu0 %3087
      %3089 = vrot.lane.b32.xlu0 %v2486, 16
      %v3090 = vpop.permute.xlu0 %3089
      %3091 = vrot.lane.b32.xlu0 %v2487, 16
      %v3092 = vpop.permute.xlu0 %3091
      %3093 = vrot.lane.b32.xlu0 %v2488, 16
      %v3094 = vpop.permute.xlu0 %3093
      %3095 = vrot.lane.b32.xlu0 %v2489, 16
      %v3096 = vpop.permute.xlu0 %3095
      %3097 = vrot.lane.b32.xlu0 %v2490, 16
      %v3098 = vpop.permute.xlu0 %3097
      %3099 = vrot.lane.b32.xlu0 %v2491, 16
      %v3100 = vpop.permute.xlu0 %3099
      %3165 = vrot.lane.b32.xlu0 %v2492, 20
      %v3166 = vpop.permute.xlu0 %3165
      %3167 = vrot.lane.b32.xlu0 %v2493, 20
      %v3168 = vpop.permute.xlu0 %3167
      %3169 = vrot.lane.b32.xlu0 %v2494, 20
      %v3170 = vpop.permute.xlu0 %3169
      %3171 = vrot.lane.b32.xlu0 %v2495, 20
      %v3172 = vpop.permute.xlu0 %3171
      %3173 = vrot.lane.b32.xlu0 %v2496, 20
      %v3174 = vpop.permute.xlu0 %3173
      %3175 = vrot.lane.b32.xlu0 %v2497, 20
      %v3176 = vpop.permute.xlu0 %3175
      %3177 = vrot.lane.b32.xlu0 %v2498, 20
      %v3178 = vpop.permute.xlu0 %3177
      %3179 = vrot.lane.b32.xlu0 %v2499, 20
      %v3180 = vpop.permute.xlu0 %3179
      %3181 = vrot.lane.b32.xlu0 %v2500, 20
      %v3182 = vpop.permute.xlu0 %3181
      %3183 = vrot.lane.b32.xlu0 %v2501, 20
      %v3184 = vpop.permute.xlu0 %3183
      %3185 = vrot.lane.b32.xlu0 %v2502, 20
      %v3186 = vpop.permute.xlu0 %3185
      %3187 = vrot.lane.b32.xlu0 %v2503, 20
      %v3188 = vpop.permute.xlu0 %3187
      %3189 = vrot.lane.b32.xlu0 %v2504, 20
      %v3190 = vpop.permute.xlu0 %3189
      %3191 = vrot.lane.b32.xlu0 %v2505, 20
      %v3192 = vpop.permute.xlu0 %3191
      %3193 = vrot.lane.b32.xlu0 %v2506, 20
      %v3194 = vpop.permute.xlu0 %3193
      %3195 = vrot.lane.b32.xlu0 %v2507, 20
      %v3196 = vpop.permute.xlu0 %3195
      %3197 = vrot.lane.b32.xlu0 %v2508, 20
      %v3198 = vpop.permute.xlu0 %3197
      %3199 = vrot.lane.b32.xlu0 %v2509, 20
      %v3200 = vpop.permute.xlu0 %3199
      %3201 = vrot.lane.b32.xlu0 %v2510, 20
      %v3202 = vpop.permute.xlu0 %3201
      %3203 = vrot.lane.b32.xlu0 %v2511, 20
      %v3204 = vpop.permute.xlu0 %3203
      %3205 = vrot.lane.b32.xlu0 %v2512, 20
      %v3206 = vpop.permute.xlu0 %3205
      %3207 = vrot.lane.b32.xlu0 %v2513, 20
      %v3208 = vpop.permute.xlu0 %3207
      %3209 = vrot.lane.b32.xlu0 %v2514, 20
      %v3210 = vpop.permute.xlu0 %3209
      %3211 = vrot.lane.b32.xlu0 %v2515, 20
      %v3212 = vpop.permute.xlu0 %3211
      %3213 = vrot.lane.b32.xlu0 %v2516, 20
      %v3214 = vpop.permute.xlu0 %3213
      %3215 = vrot.lane.b32.xlu0 %v2517, 20
      %v3216 = vpop.permute.xlu0 %3215
      %3217 = vrot.lane.b32.xlu0 %v2518, 20
      %v3218 = vpop.permute.xlu0 %3217
      %3219 = vrot.lane.b32.xlu0 %v2519, 20
      %v3220 = vpop.permute.xlu0 %3219
      %3221 = vrot.lane.b32.xlu0 %v2520, 20
      %v3222 = vpop.permute.xlu0 %3221
      %3223 = vrot.lane.b32.xlu0 %v2521, 20
      %v3224 = vpop.permute.xlu0 %3223
      %3225 = vrot.lane.b32.xlu0 %v2522, 20
      %v3226 = vpop.permute.xlu0 %3225
      %3227 = vrot.lane.b32.xlu0 %v2523, 20
      %v3228 = vpop.permute.xlu0 %3227
      %3293 = vrot.lane.b32.xlu0 %v2525, 24
      %v3294 = vpop.permute.xlu0 %3293
      %3295 = vrot.lane.b32.xlu0 %v2526, 24
      %v3296 = vpop.permute.xlu0 %3295
      %3297 = vrot.lane.b32.xlu0 %v2527, 24
      %v3298 = vpop.permute.xlu0 %3297
      %3299 = vrot.lane.b32.xlu0 %v2528, 24
      %v3300 = vpop.permute.xlu0 %3299
      %3301 = vrot.lane.b32.xlu0 %v2529, 24
      %v3302 = vpop.permute.xlu0 %3301
      %3303 = vrot.lane.b32.xlu0 %v2530, 24
      %v3304 = vpop.permute.xlu0 %3303
      %3305 = vrot.lane.b32.xlu0 %v2531, 24
      %v3306 = vpop.permute.xlu0 %3305
      %3307 = vrot.lane.b32.xlu0 %v2532, 24
      %v3308 = vpop.permute.xlu0 %3307
      %3309 = vrot.lane.b32.xlu0 %v2533, 24
      %v3310 = vpop.permute.xlu0 %3309
      %3311 = vrot.lane.b32.xlu0 %v2534, 24
      %v3312 = vpop.permute.xlu0 %3311
      %3313 = vrot.lane.b32.xlu0 %v2535, 24
      %v3314 = vpop.permute.xlu0 %3313
      %3315 = vrot.lane.b32.xlu0 %v2536, 24
      %v3316 = vpop.permute.xlu0 %3315
      %3317 = vrot.lane.b32.xlu0 %v2537, 24
      %v3318 = vpop.permute.xlu0 %3317
      %3319 = vrot.lane.b32.xlu0 %v2538, 24
      %v3320 = vpop.permute.xlu0 %3319
      %3321 = vrot.lane.b32.xlu0 %v2539, 24
      %v3322 = vpop.permute.xlu0 %3321
      %3323 = vrot.lane.b32.xlu0 %v2540, 24
      %v3324 = vpop.permute.xlu0 %3323
      %3325 = vrot.lane.b32.xlu0 %v2541, 24
      %v3326 = vpop.permute.xlu0 %3325
      %3327 = vrot.lane.b32.xlu0 %v2542, 24
      %v3328 = vpop.permute.xlu0 %3327
      %3329 = vrot.lane.b32.xlu0 %v2543, 24
      %v3330 = vpop.permute.xlu0 %3329
      %3331 = vrot.lane.b32.xlu0 %v2544, 24
      %v3332 = vpop.permute.xlu0 %3331
      %3333 = vrot.lane.b32.xlu0 %v2545, 24
      %v3334 = vpop.permute.xlu0 %3333
      %3335 = vrot.lane.b32.xlu0 %v2546, 24
      %v3336 = vpop.permute.xlu0 %3335
      %3337 = vrot.lane.b32.xlu0 %v2547, 24
      %v3338 = vpop.permute.xlu0 %3337
      %3339 = vrot.lane.b32.xlu0 %v2548, 24
      %v3340 = vpop.permute.xlu0 %3339
      %3341 = vrot.lane.b32.xlu0 %v2549, 24
      %v3342 = vpop.permute.xlu0 %3341
      %3343 = vrot.lane.b32.xlu0 %v2550, 24
      %v3344 = vpop.permute.xlu0 %3343
      %3345 = vrot.lane.b32.xlu0 %v2551, 24
      %v3346 = vpop.permute.xlu0 %3345
      %3347 = vrot.lane.b32.xlu0 %v2552, 24
      %v3348 = vpop.permute.xlu0 %3347
      %3349 = vrot.lane.b32.xlu0 %v2553, 24
      %v3350 = vpop.permute.xlu0 %3349
      %3351 = vrot.lane.b32.xlu0 %v2554, 24
      %v3352 = vpop.permute.xlu0 %3351
      %3353 = vrot.lane.b32.xlu0 %v2555, 24
      %v3354 = vpop.permute.xlu0 %3353
      %3355 = vrot.lane.b32.xlu0 %v2556, 24
      %v3356 = vpop.permute.xlu0 %3355
      %3421 = vrot.lane.b32.xlu0 %v2557, 28
      %v3422 = vpop.permute.xlu0 %3421
      %3423 = vrot.lane.b32.xlu0 %v2558, 28
      %v3424 = vpop.permute.xlu0 %3423
      %3425 = vrot.lane.b32.xlu0 %v2559, 28
      %v3426 = vpop.permute.xlu0 %3425
      %3427 = vrot.lane.b32.xlu0 %v2560, 28
      %v3428 = vpop.permute.xlu0 %3427
      %3429 = vrot.lane.b32.xlu0 %v2561, 28
      %v3430 = vpop.permute.xlu0 %3429
      %3431 = vrot.lane.b32.xlu0 %v2562, 28
      %v3432 = vpop.permute.xlu0 %3431
      %3433 = vrot.lane.b32.xlu0 %v2563, 28
      %v3434 = vpop.permute.xlu0 %3433
      %3435 = vrot.lane.b32.xlu0 %v2564, 28
      %v3436 = vpop.permute.xlu0 %3435
      %3437 = vrot.lane.b32.xlu0 %v2565, 28
      %v3438 = vpop.permute.xlu0 %3437
      %3439 = vrot.lane.b32.xlu0 %v2566, 28
      %v3440 = vpop.permute.xlu0 %3439
      %3441 = vrot.lane.b32.xlu0 %v2567, 28
      %v3442 = vpop.permute.xlu0 %3441
      %3443 = vrot.lane.b32.xlu0 %v2568, 28
      %v3444 = vpop.permute.xlu0 %3443
      %3445 = vrot.lane.b32.xlu0 %v2569, 28
      %v3446 = vpop.permute.xlu0 %3445
      %3447 = vrot.lane.b32.xlu0 %v2570, 28
      %v3448 = vpop.permute.xlu0 %3447
      %3449 = vrot.lane.b32.xlu0 %v2571, 28
      %v3450 = vpop.permute.xlu0 %3449
      %3451 = vrot.lane.b32.xlu0 %v2572, 28
      %v3452 = vpop.permute.xlu0 %3451
      %3453 = vrot.lane.b32.xlu0 %v2573, 28
      %v3454 = vpop.permute.xlu0 %3453
      %3455 = vrot.lane.b32.xlu0 %v2574, 28
      %v3456 = vpop.permute.xlu0 %3455
      %3457 = vrot.lane.b32.xlu0 %v2575, 28
      %v3458 = vpop.permute.xlu0 %3457
      %3459 = vrot.lane.b32.xlu0 %v2576, 28
      %v3460 = vpop.permute.xlu0 %3459
      %3461 = vrot.lane.b32.xlu0 %v2577, 28
      %v3462 = vpop.permute.xlu0 %3461
      %3463 = vrot.lane.b32.xlu0 %v2578, 28
      %v3464 = vpop.permute.xlu0 %3463
      %3465 = vrot.lane.b32.xlu0 %v2579, 28
      %v3466 = vpop.permute.xlu0 %3465
      %3467 = vrot.lane.b32.xlu0 %v2580, 28
      %v3468 = vpop.permute.xlu0 %3467
      %3469 = vrot.lane.b32.xlu0 %v2581, 28
      %v3470 = vpop.permute.xlu0 %3469
      %3471 = vrot.lane.b32.xlu0 %v2582, 28
      %v3472 = vpop.permute.xlu0 %3471
      %3473 = vrot.lane.b32.xlu0 %v2583, 28
      %v3474 = vpop.permute.xlu0 %3473
      %3475 = vrot.lane.b32.xlu0 %v2584, 28
      %v3476 = vpop.permute.xlu0 %3475
      %3477 = vrot.lane.b32.xlu0 %v2585, 28
      %v3478 = vpop.permute.xlu0 %3477
      %3479 = vrot.lane.b32.xlu0 %v2586, 28
      %v3480 = vpop.permute.xlu0 %3479
      %3481 = vrot.lane.b32.xlu0 %v2587, 28
      %v3482 = vpop.permute.xlu0 %3481
      %3483 = vrot.lane.b32.xlu0 %v2588, 28
      %v3484 = vpop.permute.xlu0 %3483
      %3549 = vrot.lane.b32.xlu0 %v2589, 32
      %v3550 = vpop.permute.xlu0 %3549
      %3551 = vrot.lane.b32.xlu0 %v2590, 32
      %v3552 = vpop.permute.xlu0 %3551
      %3553 = vrot.lane.b32.xlu0 %v2591, 32
      %v3554 = vpop.permute.xlu0 %3553
      %3555 = vrot.lane.b32.xlu0 %v2592, 32
      %v3556 = vpop.permute.xlu0 %3555
      %3557 = vrot.lane.b32.xlu0 %v2593, 32
      %v3558 = vpop.permute.xlu0 %3557
      %3559 = vrot.lane.b32.xlu0 %v2594, 32
      %v3560 = vpop.permute.xlu0 %3559
      %3561 = vrot.lane.b32.xlu0 %v2595, 32
      %v3562 = vpop.permute.xlu0 %3561
      %3563 = vrot.lane.b32.xlu0 %v2596, 32
      %v3564 = vpop.permute.xlu0 %3563
      %3565 = vrot.lane.b32.xlu0 %v2597, 32
      %v3566 = vpop.permute.xlu0 %3565
      %3567 = vrot.lane.b32.xlu0 %v2598, 32
      %v3568 = vpop.permute.xlu0 %3567
      %3569 = vrot.lane.b32.xlu0 %v2599, 32
      %v3570 = vpop.permute.xlu0 %3569
      %3571 = vrot.lane.b32.xlu0 %v2600, 32
      %v3572 = vpop.permute.xlu0 %3571
      %3573 = vrot.lane.b32.xlu0 %v2601, 32
      %v3574 = vpop.permute.xlu0 %3573
      %3575 = vrot.lane.b32.xlu0 %v2602, 32
      %v3576 = vpop.permute.xlu0 %3575
      %3577 = vrot.lane.b32.xlu0 %v2603, 32
      %v3578 = vpop.permute.xlu0 %3577
      %3579 = vrot.lane.b32.xlu0 %v2604, 32
      %v3580 = vpop.permute.xlu0 %3579
      %3581 = vrot.lane.b32.xlu0 %v2605, 32
      %v3582 = vpop.permute.xlu0 %3581
      %3583 = vrot.lane.b32.xlu0 %v2606, 32
      %v3584 = vpop.permute.xlu0 %3583
      %3585 = vrot.lane.b32.xlu0 %v2607, 32
      %v3586 = vpop.permute.xlu0 %3585
      %3587 = vrot.lane.b32.xlu0 %v2608, 32
      %v3588 = vpop.permute.xlu0 %3587
      %3589 = vrot.lane.b32.xlu0 %v2609, 32
      %v3590 = vpop.permute.xlu0 %3589
      %3591 = vrot.lane.b32.xlu0 %v2610, 32
      %v3592 = vpop.permute.xlu0 %3591
      %3593 = vrot.lane.b32.xlu0 %v2611, 32
      %v3594 = vpop.permute.xlu0 %3593
      %3595 = vrot.lane.b32.xlu0 %v2612, 32
      %v3596 = vpop.permute.xlu0 %3595
      %3597 = vrot.lane.b32.xlu0 %v2613, 32
      %v3598 = vpop.permute.xlu0 %3597
      %3599 = vrot.lane.b32.xlu0 %v2614, 32
      %v3600 = vpop.permute.xlu0 %3599
      %3601 = vrot.lane.b32.xlu0 %v2615, 32
      %v3602 = vpop.permute.xlu0 %3601
      %3603 = vrot.lane.b32.xlu0 %v2616, 32
      %v3604 = vpop.permute.xlu0 %3603
      %3605 = vrot.lane.b32.xlu0 %v2617, 32
      %v3606 = vpop.permute.xlu0 %3605
      %3607 = vrot.lane.b32.xlu0 %v2618, 32
      %v3608 = vpop.permute.xlu0 %3607
      %3609 = vrot.lane.b32.xlu0 %v2619, 32
      %v3610 = vpop.permute.xlu0 %3609
      %3611 = vrot.lane.b32.xlu0 %v2620, 32
      %v3612 = vpop.permute.xlu0 %3611
      %v3645 = vsel %vm230, %v2332, %v2654
      %v3646 = vsel %vm230, %v2333, %v2656
      %v3647 = vsel %vm230, %v2334, %v2658
      %v3648 = vsel %vm230, %v2335, %v2660
      %v3649 = vsel %vm230, %v2336, %v2662
      %v3650 = vsel %vm230, %v2337, %v2664
      %v3651 = vsel %vm230, %v2338, %v2666
      %v3652 = vsel %vm230, %v2339, %v2668
      %v3653 = vsel %vm230, %v2340, %v2670
      %v3654 = vsel %vm230, %v2341, %v2672
      %v3655 = vsel %vm230, %v2342, %v2674
      %v3656 = vsel %vm230, %v2343, %v2676
      %v3657 = vsel %vm230, %v2344, %v2678
      %v3658 = vsel %vm230, %v2345, %v2680
      %v3659 = vsel %vm230, %v2346, %v2682
      %v3660 = vsel %vm230, %v2347, %v2684
      %v3661 = vsel %vm230, %v2348, %v2686
      %v3662 = vsel %vm230, %v2349, %v2688
      %v3663 = vsel %vm230, %v2350, %v2690
      %v3664 = vsel %vm230, %v2351, %v2692
      %v3665 = vsel %vm230, %v2352, %v2694
      %v3666 = vsel %vm230, %v2353, %v2696
      %v3667 = vsel %vm230, %v2354, %v2698
      %v3668 = vsel %vm230, %v2355, %v2700
      %v3669 = vsel %vm230, %v2356, %v2702
      %v3670 = vsel %vm230, %v2357, %v2704
      %v3671 = vsel %vm230, %v2358, %v2706
      %v3672 = vsel %vm230, %v2359, %v2708
      %v3673 = vsel %vm230, %v2360, %v2710
      %v3674 = vsel %vm230, %v2361, %v2712
      %v3675 = vsel %vm230, %v2362, %v2714
      %v3676 = vsel %vm230, %v2363, %v2716
      %v3677 = vsel %vm1655, %v3645, %v2782
      %v3678 = vsel %vm1655, %v3646, %v2784
      %v3679 = vsel %vm1655, %v3647, %v2786
      %v3680 = vsel %vm1655, %v3648, %v2788
      %v3681 = vsel %vm1655, %v3649, %v2790
      %v3682 = vsel %vm1655, %v3650, %v2792
      %v3683 = vsel %vm1655, %v3651, %v2794
      %v3684 = vsel %vm1655, %v3652, %v2796
      %v3685 = vsel %vm1655, %v3653, %v2798
      %v3686 = vsel %vm1655, %v3654, %v2800
      %v3687 = vsel %vm1655, %v3655, %v2802
      %v3688 = vsel %vm1655, %v3656, %v2804
      %v3689 = vsel %vm1655, %v3657, %v2806
      %v3690 = vsel %vm1655, %v3658, %v2808
      %v3691 = vsel %vm1655, %v3659, %v2810
      %v3692 = vsel %vm1655, %v3660, %v2812
      %v3693 = vsel %vm1655, %v3661, %v2814
      %v3694 = vsel %vm1655, %v3662, %v2816
      %v3695 = vsel %vm1655, %v3663, %v2818
      %v3696 = vsel %vm1655, %v3664, %v2820
      %v3697 = vsel %vm1655, %v3665, %v2822
      %v3698 = vsel %vm1655, %v3666, %v2824
      %v3699 = vsel %vm1655, %v3667, %v2826
      %v3700 = vsel %vm1655, %v3668, %v2828
      %v3701 = vsel %vm1655, %v3669, %v2830
      %v3702 = vsel %vm1655, %v3670, %v2832
      %v3703 = vsel %vm1655, %v3671, %v2834
      %v3704 = vsel %vm1655, %v3672, %v2836
      %v3705 = vsel %vm1655, %v3673, %v2838
      %v3706 = vsel %vm1655, %v3674, %v2840
      %v3707 = vsel %vm1655, %v3675, %v2842
      %v3708 = vsel %vm1655, %v3676, %v2844
      %v3709 = vsel %vm1688, %v3677, %v2910
      %v3710 = vsel %vm1688, %v3678, %v2912
      %v3711 = vsel %vm1688, %v3679, %v2914
      %v3712 = vsel %vm1688, %v3680, %v2916
      %v3713 = vsel %vm1688, %v3681, %v2918
      %v3714 = vsel %vm1688, %v3682, %v2920
      %v3715 = vsel %vm1688, %v3683, %v2922
      %v3716 = vsel %vm1688, %v3684, %v2924
      %v3717 = vsel %vm1688, %v3685, %v2926
      %v3718 = vsel %vm1688, %v3686, %v2928
      %v3719 = vsel %vm1688, %v3687, %v2930
      %v3720 = vsel %vm1688, %v3688, %v2932
      %v3721 = vsel %vm1688, %v3689, %v2934
      %v3722 = vsel %vm1688, %v3690, %v2936
      %v3723 = vsel %vm1688, %v3691, %v2938
      %v3724 = vsel %vm1688, %v3692, %v2940
      %v3725 = vsel %vm1688, %v3693, %v2942
      %v3726 = vsel %vm1688, %v3694, %v2944
      %v3727 = vsel %vm1688, %v3695, %v2946
      %v3728 = vsel %vm1688, %v3696, %v2948
      %v3729 = vsel %vm1688, %v3697, %v2950
      %v3730 = vsel %vm1688, %v3698, %v2952
      %v3731 = vsel %vm1688, %v3699, %v2954
      %v3732 = vsel %vm1688, %v3700, %v2956
      %v3733 = vsel %vm1688, %v3701, %v2958
      %v3734 = vsel %vm1688, %v3702, %v2960
      %v3735 = vsel %vm1688, %v3703, %v2962
      %v3736 = vsel %vm1688, %v3704, %v2964
      %v3737 = vsel %vm1688, %v3705, %v2966
      %v3738 = vsel %vm1688, %v3706, %v2968
      %v3739 = vsel %vm1688, %v3707, %v2970
      %v3740 = vsel %vm1688, %v3708, %v2972
      %v3741 = vsel %vm1721, %v3709, %v3038
      %v3742 = vsel %vm1721, %v3710, %v3040
      %v3743 = vsel %vm1721, %v3711, %v3042
      %v3744 = vsel %vm1721, %v3712, %v3044
      %v3745 = vsel %vm1721, %v3713, %v3046
      %v3746 = vsel %vm1721, %v3714, %v3048
      %v3747 = vsel %vm1721, %v3715, %v3050
      %v3748 = vsel %vm1721, %v3716, %v3052
      %v3749 = vsel %vm1721, %v3717, %v3054
      %v3750 = vsel %vm1721, %v3718, %v3056
      %v3751 = vsel %vm1721, %v3719, %v3058
      %v3752 = vsel %vm1721, %v3720, %v3060
      %v3753 = vsel %vm1721, %v3721, %v3062
      %v3754 = vsel %vm1721, %v3722, %v3064
      %v3755 = vsel %vm1721, %v3723, %v3066
      %v3756 = vsel %vm1721, %v3724, %v3068
      %v3757 = vsel %vm1721, %v3725, %v3070
      %v3758 = vsel %vm1721, %v3726, %v3072
      %v3759 = vsel %vm1721, %v3727, %v3074
      %v3760 = vsel %vm1721, %v3728, %v3076
      %v3761 = vsel %vm1721, %v3729, %v3078
      %v3762 = vsel %vm1721, %v3730, %v3080
      %v3763 = vsel %vm1721, %v3731, %v3082
      %v3764 = vsel %vm1721, %v3732, %v3084
      %v3765 = vsel %vm1721, %v3733, %v3086
      %v3766 = vsel %vm1721, %v3734, %v3088
      %v3767 = vsel %vm1721, %v3735, %v3090
      %v3768 = vsel %vm1721, %v3736, %v3092
      %v3769 = vsel %vm1721, %v3737, %v3094
      %v3770 = vsel %vm1721, %v3738, %v3096
      %v3771 = vsel %vm1721, %v3739, %v3098
      %v3772 = vsel %vm1721, %v3740, %v3100
      %v3773 = vsel %vm1754, %v3741, %v3166
      %v3774 = vsel %vm1754, %v3742, %v3168
      %v3775 = vsel %vm1754, %v3743, %v3170
      %v3776 = vsel %vm1754, %v3744, %v3172
      %v3777 = vsel %vm1754, %v3745, %v3174
      %v3778 = vsel %vm1754, %v3746, %v3176
      %v3779 = vsel %vm1754, %v3747, %v3178
      %v3780 = vsel %vm1754, %v3748, %v3180
      %v3781 = vsel %vm1754, %v3749, %v3182
      %v3782 = vsel %vm1754, %v3750, %v3184
      %v3783 = vsel %vm1754, %v3751, %v3186
      %v3784 = vsel %vm1754, %v3752, %v3188
      %v3785 = vsel %vm1754, %v3753, %v3190
      %v3786 = vsel %vm1754, %v3754, %v3192
      %v3787 = vsel %vm1754, %v3755, %v3194
      %v3788 = vsel %vm1754, %v3756, %v3196
      %v3789 = vsel %vm1754, %v3757, %v3198
      %v3790 = vsel %vm1754, %v3758, %v3200
      %v3791 = vsel %vm1754, %v3759, %v3202
      %v3792 = vsel %vm1754, %v3760, %v3204
      %v3793 = vsel %vm1754, %v3761, %v3206
      %v3794 = vsel %vm1754, %v3762, %v3208
      %v3795 = vsel %vm1754, %v3763, %v3210
      %v3796 = vsel %vm1754, %v3764, %v3212
      %v3797 = vsel %vm1754, %v3765, %v3214
      %v3798 = vsel %vm1754, %v3766, %v3216
      %v3799 = vsel %vm1754, %v3767, %v3218
      %v3800 = vsel %vm1754, %v3768, %v3220
      %v3801 = vsel %vm1754, %v3769, %v3222
      %v3802 = vsel %vm1754, %v3770, %v3224
      %v3803 = vsel %vm1754, %v3771, %v3226
      %v3804 = vsel %vm1754, %v3772, %v3228
      %v3805 = vsel %vm1787, %v3773, %v3294
      %v3806 = vsel %vm1787, %v3774, %v3296
      %v3807 = vsel %vm1787, %v3775, %v3298
      %v3808 = vsel %vm1787, %v3776, %v3300
      %v3809 = vsel %vm1787, %v3777, %v3302
      %v3810 = vsel %vm1787, %v3778, %v3304
      %v3811 = vsel %vm1787, %v3779, %v3306
      %v3812 = vsel %vm1787, %v3780, %v3308
      %v3813 = vsel %vm1787, %v3781, %v3310
      %v3814 = vsel %vm1787, %v3782, %v3312
      %v3815 = vsel %vm1787, %v3783, %v3314
      %v3816 = vsel %vm1787, %v3784, %v3316
      %v3817 = vsel %vm1787, %v3785, %v3318
      %v3818 = vsel %vm1787, %v3786, %v3320
      %v3819 = vsel %vm1787, %v3787, %v3322
      %v3820 = vsel %vm1787, %v3788, %v3324
      %v3821 = vsel %vm1787, %v3789, %v3326
      %v3822 = vsel %vm1787, %v3790, %v3328
      %v3823 = vsel %vm1787, %v3791, %v3330
      %v3824 = vsel %vm1787, %v3792, %v3332
      %v3825 = vsel %vm1787, %v3793, %v3334
      %v3826 = vsel %vm1787, %v3794, %v3336
      %v3827 = vsel %vm1787, %v3795, %v3338
      %v3828 = vsel %vm1787, %v3796, %v3340
      %v3829 = vsel %vm1787, %v3797, %v3342
      %v3830 = vsel %vm1787, %v3798, %v3344
      %v3831 = vsel %vm1787, %v3799, %v3346
      %v3832 = vsel %vm1787, %v3800, %v3348
      %v3833 = vsel %vm1787, %v3801, %v3350
      %v3834 = vsel %vm1787, %v3802, %v3352
      %v3835 = vsel %vm1787, %v3803, %v3354
      %v3836 = vsel %vm1787, %v3804, %v3356
      %v3837 = vsel %vm1820, %v3805, %v3422
      %v3838 = vsel %vm1820, %v3806, %v3424
      %v3839 = vsel %vm1820, %v3807, %v3426
      %v3840 = vsel %vm1820, %v3808, %v3428
      %v3841 = vsel %vm1820, %v3809, %v3430
      %v3842 = vsel %vm1820, %v3810, %v3432
      %v3843 = vsel %vm1820, %v3811, %v3434
      %v3844 = vsel %vm1820, %v3812, %v3436
      %v3845 = vsel %vm1820, %v3813, %v3438
      %v3846 = vsel %vm1820, %v3814, %v3440
      %v3847 = vsel %vm1820, %v3815, %v3442
      %v3848 = vsel %vm1820, %v3816, %v3444
      %v3849 = vsel %vm1820, %v3817, %v3446
      %v3850 = vsel %vm1820, %v3818, %v3448
      %v3851 = vsel %vm1820, %v3819, %v3450
      %v3852 = vsel %vm1820, %v3820, %v3452
      %v3853 = vsel %vm1820, %v3821, %v3454
      %v3854 = vsel %vm1820, %v3822, %v3456
      %v3855 = vsel %vm1820, %v3823, %v3458
      %v3856 = vsel %vm1820, %v3824, %v3460
      %v3857 = vsel %vm1820, %v3825, %v3462
      %v3858 = vsel %vm1820, %v3826, %v3464
      %v3859 = vsel %vm1820, %v3827, %v3466
      %v3860 = vsel %vm1820, %v3828, %v3468
      %v3861 = vsel %vm1820, %v3829, %v3470
      %v3862 = vsel %vm1820, %v3830, %v3472
      %v3863 = vsel %vm1820, %v3831, %v3474
      %v3864 = vsel %vm1820, %v3832, %v3476
      %v3865 = vsel %vm1820, %v3833, %v3478
      %v3866 = vsel %vm1820, %v3834, %v3480
      %v3867 = vsel %vm1820, %v3835, %v3482
      %v3868 = vsel %vm1820, %v3836, %v3484
      %v3869 = vsel %vm1853, %v3837, %v3550
      %v3870 = vsel %vm1853, %v3838, %v3552
      %v3871 = vsel %vm1853, %v3839, %v3554
      %v3872 = vsel %vm1853, %v3840, %v3556
      %v3873 = vsel %vm1853, %v3841, %v3558
      %v3874 = vsel %vm1853, %v3842, %v3560
      %v3875 = vsel %vm1853, %v3843, %v3562
      %v3876 = vsel %vm1853, %v3844, %v3564
      %v3877 = vsel %vm1853, %v3845, %v3566
      %v3878 = vsel %vm1853, %v3846, %v3568
      %v3879 = vsel %vm1853, %v3847, %v3570
      %v3880 = vsel %vm1853, %v3848, %v3572
      %v3881 = vsel %vm1853, %v3849, %v3574
      %v3882 = vsel %vm1853, %v3850, %v3576
      %v3883 = vsel %vm1853, %v3851, %v3578
      %v3884 = vsel %vm1853, %v3852, %v3580
      %v3885 = vsel %vm1853, %v3853, %v3582
      %v3886 = vsel %vm1853, %v3854, %v3584
      %v3887 = vsel %vm1853, %v3855, %v3586
      %v3888 = vsel %vm1853, %v3856, %v3588
      %v3889 = vsel %vm1853, %v3857, %v3590
      %v3890 = vsel %vm1853, %v3858, %v3592
      %v3891 = vsel %vm1853, %v3859, %v3594
      %v3892 = vsel %vm1853, %v3860, %v3596
      %v3893 = vsel %vm1853, %v3861, %v3598
      %v3894 = vsel %vm1853, %v3862, %v3600
      %v3895 = vsel %vm1853, %v3863, %v3602
      %v3896 = vsel %vm1853, %v3864, %v3604
      %v3897 = vsel %vm1853, %v3865, %v3606
      %v3898 = vsel %vm1853, %v3866, %v3608
      %v3899 = vsel %vm1853, %v3867, %v3610
      %v3900 = vsel %vm1853, %v3868, %v3612
      %v3901 = vld [vmem:[%s2] sm:$0xff]
      %v3902 = vld [vmem:[%s2 + $0x8] sm:$0xff]
      %v3903 = vld [vmem:[%s2 + $0x10] sm:$0xff]
      %v3904 = vld [vmem:[%s2 + $0x18] sm:$0xff]
      %v3905 = vld [vmem:[%s2 + $0x20] sm:$0xf]
      %v3906 = vld [vmem:[%s3 + $0x1] sm:$0x1]
      %v3907 = vlaneseq
      %v3908 = vshrl.u32 %v3907, 7
      %v3909 = vsub.s32 0, %v3908
      %v3910 = vrot.slane %v3906, %v3909
      %v3912 = vsel %vm1896, %v3869, 0
      %v3915 = vsel %vm1896, %v3870, 0
      %v3918 = vsel %vm1896, %v3871, 0
      %v3921 = vsel %vm1896, %v3872, 0
      %v3924 = vsel %vm1896, %v3873, 0
      %v3927 = vsel %vm1896, %v3874, 0
      %v3930 = vsel %vm1896, %v3875, 0
      %v3933 = vsel %vm1896, %v3876, 0
      %v3936 = vsel %vm1896, %v3877, 0
      %v3939 = vsel %vm1896, %v3878, 0
      %v3942 = vsel %vm1896, %v3879, 0
      %v3945 = vsel %vm1896, %v3880, 0
      %v3948 = vsel %vm1896, %v3881, 0
      %v3951 = vsel %vm1896, %v3882, 0
      %v3954 = vsel %vm1896, %v3883, 0
      %v3957 = vsel %vm1896, %v3884, 0
      %v3960 = vsel %vm1896, %v3885, 0
      %v3963 = vsel %vm1896, %v3886, 0
      %v3966 = vsel %vm1896, %v3887, 0
      %v3969 = vsel %vm1896, %v3888, 0
      %v3972 = vsel %vm1896, %v3889, 0
      %v3975 = vsel %vm1896, %v3890, 0
      %v3978 = vsel %vm1896, %v3891, 0
      %v3981 = vsel %vm1896, %v3892, 0
      %v3984 = vsel %vm1896, %v3893, 0
      %v3987 = vsel %vm1896, %v3894, 0
      %v3990 = vsel %vm1896, %v3895, 0
      %v3993 = vsel %vm1896, %v3896, 0
      %v3996 = vsel %vm1896, %v3897, 0
      %v3999 = vsel %vm1896, %v3898, 0
      %v4002 = vsel %vm1896, %v3899, 0
      %v4005 = vsel %vm1896, %v3900, 0
      %v4008 = vsel %vm1993, %v3905, 0
      %4010 = vmatprep.subr.mxu0 0.0
      %4011 = vmatpush1.msra.mxu0 %v3901
      %4012 = vmatprep.subr.mxu0 0.0
      %4013 = vmatpush1.msra.mxu0 %v3902
      %4014 = vmatprep.subr.mxu0 0.0
      %4015 = vmatpush1.msra.mxu0 %v3903
      %4016 = vmatprep.subr.mxu0 0.0
      %4017 = vmatpush1.msra.mxu0 %v3904
      %4018 = vmatprep.subr.mxu0 0.0
      %4019 = vmatpush1.msra.mxu0 %v4008
      %4020 = vmatprep.subr.mxu0 0.0
      %4021 = vmatpush1.msra.mxu0 0.0
      %4022 = vmatprep.subr.mxu0 0.0
      %4023 = vmatpush1.msra.mxu0 0.0
      %4024 = vmatprep.subr.mxu0 0.0
      %4025 = vmatpush1.msra.mxu0 0.0
      %4026 = vmatprep.subr.mxu0 0.0
      %4027 = vmatpush1.msra.mxu0 0.0
      %4028 = vmatprep.subr.mxu0 0.0
      %4029 = vmatpush1.msra.mxu0 0.0
      %4030 = vmatprep.subr.mxu0 0.0
      %4031 = vmatpush1.msra.mxu0 0.0
      %4032 = vmatprep.subr.mxu0 0.0
      %4033 = vmatpush1.msra.mxu0 0.0
      %4034 = vmatprep.subr.mxu0 0.0
      %4035 = vmatpush1.msra.mxu0 0.0
      %4036 = vmatprep.subr.mxu0 0.0
      %4037 = vmatpush1.msra.mxu0 0.0
      %4038 = vmatprep.subr.mxu0 0.0
      %4039 = vmatpush1.msra.mxu0 0.0
      %4040 = vmatprep.subr.mxu0 0.0
      %4041 = vmatpush1.msra.mxu0 0.0
      %4042 = vmatprep.subr.mxu0 0.0
      %4043 = vmatpush1.msra.mxu0 0.0
      %4044 = vmatprep.subr.mxu0 0.0
      %4045 = vmatpush1.msra.mxu0 0.0
      %4046 = vmatprep.subr.mxu0 0.0
      %4047 = vmatpush1.msra.mxu0 0.0
      %4048 = vmatprep.subr.mxu0 0.0
      %4049 = vmatpush1.msra.mxu0 0.0
      %4050 = vmatprep.subr.mxu0 0.0
      %4051 = vmatpush1.msra.mxu0 0.0
      %4052 = vmatprep.subr.mxu0 0.0
      %4053 = vmatpush1.msra.mxu0 0.0
      %4054 = vmatprep.subr.mxu0 0.0
      %4055 = vmatpush1.msra.mxu0 0.0
      %4056 = vmatprep.subr.mxu0 0.0
      %4057 = vmatpush1.msra.mxu0 0.0
      %4058 = vmatprep.subr.mxu0 0.0
      %4059 = vmatpush1.msra.mxu0 0.0
      %4060 = vmatprep.subr.mxu0 0.0
      %4061 = vmatpush1.msra.mxu0 0.0
      %4062 = vmatprep.subr.mxu0 0.0
      %4063 = vmatpush1.msra.mxu0 0.0
      %4064 = vmatprep.subr.mxu0 0.0
      %4065 = vmatpush1.msra.mxu0 0.0
      %4066 = vmatprep.subr.mxu0 0.0
      %4067 = vmatpush1.msra.mxu0 0.0
      %4068 = vmatprep.subr.mxu0 0.0
      %4069 = vmatpush1.msra.mxu0 0.0
      %4070 = vmatprep.subr.mxu0 0.0
      %4071 = vmatpush1.msra.mxu0 0.0
      %4072 = vmatprep.subr.mxu0 0.0
      %4073 = vmatpush1.msra.mxu0 0.0
      %4074 = vmatprep.mubr.f32.mxu0 0.0
      %4075 = vmatmul.mubr.f32.gmra.mrb[0].mxu0 %v3912
      %v4076 = vpop.f32.mrb[0].mxu0
      %v4077 = vadd.f32 %v3910, %v4076
      %v4078 = vpop.f32.mrb[0].mxu0
      %4079 = vmatprep.mubr.f32.mxu0 0.0
      %4080 = vmatmul.mubr.f32.gmra.mrb[0].mxu0 %v3915
      %v4081 = vpop.f32.mrb[0].mxu0
      %v4082 = vadd.f32 %v3910, %v4081
      %v4083 = vpop.f32.mrb[0].mxu0
      %4084 = vmatprep.mubr.f32.mxu0 0.0
      %4085 = vmatmul.mubr.f32.gmra.mrb[0].mxu0 %v3918
      %v4086 = vpop.f32.mrb[0].mxu0
      %v4087 = vadd.f32 %v3910, %v4086
      %v4088 = vpop.f32.mrb[0].mxu0
      %4089 = vmatprep.mubr.f32.mxu0 0.0
      %4090 = vmatmul.mubr.f32.gmra.mrb[0].mxu0 %v3921
      %v4091 = vpop.f32.mrb[0].mxu0
      %v4092 = vadd.f32 %v3910, %v4091
      %v4093 = vpop.f32.mrb[0].mxu0
      %4094 = vmatprep.mubr.f32.mxu0 0.0
      %4095 = vmatmul.mubr.f32.gmra.mrb[0].mxu0 %v3924
      %v4096 = vpop.f32.mrb[0].mxu0
      %v4097 = vadd.f32 %v3910, %v4096
      %v4098 = vpop.f32.mrb[0].mxu0
      %4099 = vmatprep.mubr.f32.mxu0 0.0
      %4100 = vmatmul.mubr.f32.gmra.mrb[0].mxu0 %v3927
      %v4101 = vpop.f32.mrb[0].mxu0
      %v4102 = vadd.f32 %v3910, %v4101
      %v4103 = vpop.f32.mrb[0].mxu0
      %4104 = vmatprep.mubr.f32.mxu0 0.0
      %4105 = vmatmul.mubr.f32.gmra.mrb[0].mxu0 %v3930
      %v4106 = vpop.f32.mrb[0].mxu0
      %v4107 = vadd.f32 %v3910, %v4106
      %v4108 = vpop.f32.mrb[0].mxu0
      %4109 = vmatprep.mubr.f32.mxu0 0.0
      %4110 = vmatmul.mubr.f32.gmra.mrb[0].mxu0 %v3933
      %v4111 = vpop.f32.mrb[0].mxu0
      %v4112 = vadd.f32 %v3910, %v4111
      %v4113 = vpop.f32.mrb[0].mxu0
      %4114 = vmatprep.mubr.f32.mxu0 0.0
      %4115 = vmatmul.mubr.f32.gmra.mrb[0].mxu0 %v3936
      %v4116 = vpop.f32.mrb[0].mxu0
      %v4117 = vadd.f32 %v3910, %v4116
      %v4118 = vpop.f32.mrb[0].mxu0
      %4119 = vmatprep.mubr.f32.mxu0 0.0
      %4120 = vmatmul.mubr.f32.gmra.mrb[0].mxu0 %v3939
      %v4121 = vpop.f32.mrb[0].mxu0
      %v4122 = vadd.f32 %v3910, %v4121
      %v4123 = vpop.f32.mrb[0].mxu0
      %4124 = vmatprep.mubr.f32.mxu0 0.0
      %4125 = vmatmul.mubr.f32.gmra.mrb[0].mxu0 %v3942
      %v4126 = vpop.f32.mrb[0].mxu0
      %v4127 = vadd.f32 %v3910, %v4126
      %v4128 = vpop.f32.mrb[0].mxu0
      %4129 = vmatprep.mubr.f32.mxu0 0.0
      %4130 = vmatmul.mubr.f32.gmra.mrb[0].mxu0 %v3945
      %v4131 = vpop.f32.mrb[0].mxu0
      %v4132 = vadd.f32 %v3910, %v4131
      %v4133 = vpop.f32.mrb[0].mxu0
      %4134 = vmatprep.mubr.f32.mxu0 0.0
      %4135 = vmatmul.mubr.f32.gmra.mrb[0].mxu0 %v3948
      %v4136 = vpop.f32.mrb[0].mxu0
      %v4137 = vadd.f32 %v3910, %v4136
      %v4138 = vpop.f32.mrb[0].mxu0
      %4139 = vmatprep.mubr.f32.mxu0 0.0
      %4140 = vmatmul.mubr.f32.gmra.mrb[0].mxu0 %v3951
      %v4141 = vpop.f32.mrb[0].mxu0
      %v4142 = vadd.f32 %v3910, %v4141
      %v4143 = vpop.f32.mrb[0].mxu0
      %4144 = vmatprep.mubr.f32.mxu0 0.0
      %4145 = vmatmul.mubr.f32.gmra.mrb[0].mxu0 %v3954
      %v4146 = vpop.f32.mrb[0].mxu0
      %v4147 = vadd.f32 %v3910, %v4146
      %v4148 = vpop.f32.mrb[0].mxu0
      %4149 = vmatprep.mubr.f32.mxu0 0.0
      %4150 = vmatmul.mubr.f32.gmra.mrb[0].mxu0 %v3957
      %v4151 = vpop.f32.mrb[0].mxu0
      %v4152 = vadd.f32 %v3910, %v4151
      %v4153 = vpop.f32.mrb[0].mxu0
      %4154 = vmatprep.mubr.f32.mxu0 0.0
      %4155 = vmatmul.mubr.f32.gmra.mrb[0].mxu0 %v3960
      %v4156 = vpop.f32.mrb[0].mxu0
      %v4157 = vadd.f32 %v3910, %v4156
      %v4158 = vpop.f32.mrb[0].mxu0
      %4159 = vmatprep.mubr.f32.mxu0 0.0
      %4160 = vmatmul.mubr.f32.gmra.mrb[0].mxu0 %v3963
      %v4161 = vpop.f32.mrb[0].mxu0
      %v4162 = vadd.f32 %v3910, %v4161
      %v4163 = vpop.f32.mrb[0].mxu0
      %4164 = vmatprep.mubr.f32.mxu0 0.0
      %4165 = vmatmul.mubr.f32.gmra.mrb[0].mxu0 %v3966
      %v4166 = vpop.f32.mrb[0].mxu0
      %v4167 = vadd.f32 %v3910, %v4166
      %v4168 = vpop.f32.mrb[0].mxu0
      %4169 = vmatprep.mubr.f32.mxu0 0.0
      %4170 = vmatmul.mubr.f32.gmra.mrb[0].mxu0 %v3969
      %v4171 = vpop.f32.mrb[0].mxu0
      %v4172 = vadd.f32 %v3910, %v4171
      %v4173 = vpop.f32.mrb[0].mxu0
      %4174 = vmatprep.mubr.f32.mxu0 0.0
      %4175 = vmatmul.mubr.f32.gmra.mrb[0].mxu0 %v3972
      %v4176 = vpop.f32.mrb[0].mxu0
      %v4177 = vadd.f32 %v3910, %v4176
      %v4178 = vpop.f32.mrb[0].mxu0
      %4179 = vmatprep.mubr.f32.mxu0 0.0
      %4180 = vmatmul.mubr.f32.gmra.mrb[0].mxu0 %v3975
      %v4181 = vpop.f32.mrb[0].mxu0
      %v4182 = vadd.f32 %v3910, %v4181
      %v4183 = vpop.f32.mrb[0].mxu0
      %4184 = vmatprep.mubr.f32.mxu0 0.0
      %4185 = vmatmul.mubr.f32.gmra.mrb[0].mxu0 %v3978
      %v4186 = vpop.f32.mrb[0].mxu0
      %v4187 = vadd.f32 %v3910, %v4186
      %v4188 = vpop.f32.mrb[0].mxu0
      %4189 = vmatprep.mubr.f32.mxu0 0.0
      %4190 = vmatmul.mubr.f32.gmra.mrb[0].mxu0 %v3981
      %v4191 = vpop.f32.mrb[0].mxu0
      %v4192 = vadd.f32 %v3910, %v4191
      %v4193 = vpop.f32.mrb[0].mxu0
      %4194 = vmatprep.mubr.f32.mxu0 0.0
      %4195 = vmatmul.mubr.f32.gmra.mrb[0].mxu0 %v3984
      %v4196 = vpop.f32.mrb[0].mxu0
      %v4197 = vadd.f32 %v3910, %v4196
      %v4198 = vpop.f32.mrb[0].mxu0
      %4199 = vmatprep.mubr.f32.mxu0 0.0
      %4200 = vmatmul.mubr.f32.gmra.mrb[0].mxu0 %v3987
      %v4201 = vpop.f32.mrb[0].mxu0
      %v4202 = vadd.f32 %v3910, %v4201
      %v4203 = vpop.f32.mrb[0].mxu0
      %4204 = vmatprep.mubr.f32.mxu0 0.0
      %4205 = vmatmul.mubr.f32.gmra.mrb[0].mxu0 %v3990
      %v4206 = vpop.f32.mrb[0].mxu0
      %v4207 = vadd.f32 %v3910, %v4206
      %v4208 = vpop.f32.mrb[0].mxu0
      %4209 = vmatprep.mubr.f32.mxu0 0.0
      %4210 = vmatmul.mubr.f32.gmra.mrb[0].mxu0 %v3993
      %v4211 = vpop.f32.mrb[0].mxu0
      %v4212 = vadd.f32 %v3910, %v4211
      %v4213 = vpop.f32.mrb[0].mxu0
      %4214 = vmatprep.mubr.f32.mxu0 0.0
      %4215 = vmatmul.mubr.f32.gmra.mrb[0].mxu0 %v3996
      %v4216 = vpop.f32.mrb[0].mxu0
      %v4217 = vadd.f32 %v3910, %v4216
      %v4218 = vpop.f32.mrb[0].mxu0
      %4219 = vmatprep.mubr.f32.mxu0 0.0
      %4220 = vmatmul.mubr.f32.gmra.mrb[0].mxu0 %v3999
      %v4221 = vpop.f32.mrb[0].mxu0
      %v4222 = vadd.f32 %v3910, %v4221
      %v4223 = vpop.f32.mrb[0].mxu0
      %4224 = vmatprep.mubr.f32.mxu0 0.0
      %4225 = vmatmul.mubr.f32.gmra.mrb[0].mxu0 %v4002
      %v4226 = vpop.f32.mrb[0].mxu0
      %v4227 = vadd.f32 %v3910, %v4226
      %v4228 = vpop.f32.mrb[0].mxu0
      %4229 = vmatprep.mubr.f32.mxu0 0.0
      %4230 = vmatmul.mubr.f32.gmra.mrb[0].mxu0 %v4005
      %v4231 = vpop.f32.mrb[0].mxu0
      %v4232 = vadd.f32 %v3910, %v4231
      %v4233 = vpop.f32.mrb[0].mxu0
      %4234 = vdwg.mxu0
      %v4235 = vadd.f32 %v4077, %v198
      %v4236 = vadd.f32 %v4082, %v199
      %v4237 = vadd.f32 %v4087, %v200
      %v4238 = vadd.f32 %v4092, %v201
      %v4239 = vadd.f32 %v4097, %v202
      %v4240 = vadd.f32 %v4102, %v203
      %v4241 = vadd.f32 %v4107, %v204
      %v4242 = vadd.f32 %v4112, %v205
      %v4243 = vadd.f32 %v4117, %v206
      %v4244 = vadd.f32 %v4122, %v207
      %v4245 = vadd.f32 %v4127, %v208
      %v4246 = vadd.f32 %v4132, %v209
      %v4247 = vadd.f32 %v4137, %v210
      %v4248 = vadd.f32 %v4142, %v211
      %v4249 = vadd.f32 %v4147, %v212
      %v4250 = vadd.f32 %v4152, %v213
      %v4251 = vadd.f32 %v4157, %v214
      %v4252 = vadd.f32 %v4162, %v215
      %v4253 = vadd.f32 %v4167, %v216
      %v4254 = vadd.f32 %v4172, %v217
      %v4255 = vadd.f32 %v4177, %v218
      %v4256 = vadd.f32 %v4182, %v219
      %v4257 = vadd.f32 %v4187, %v220
      %v4258 = vadd.f32 %v4192, %v221
      %v4259 = vadd.f32 %v4197, %v222
      %v4260 = vadd.f32 %v4202, %v223
      %v4261 = vadd.f32 %v4207, %v224
      %v4262 = vadd.f32 %v4212, %v225
      %v4263 = vadd.f32 %v4217, %v226
      %v4264 = vadd.f32 %v4222, %v227
      %v4265 = vadd.f32 %v4227, %v228
      %v4266 = vadd.f32 %v4232, %v229
      %v4267 = vmax.f32 %v4235, 0.0
      %v4268 = vmax.f32 %v4236, 0.0
      %v4269 = vmax.f32 %v4237, 0.0
      %v4270 = vmax.f32 %v4238, 0.0
      %v4271 = vmax.f32 %v4239, 0.0
      %v4272 = vmax.f32 %v4240, 0.0
      %v4273 = vmax.f32 %v4241, 0.0
      %v4274 = vmax.f32 %v4242, 0.0
      %v4275 = vmax.f32 %v4243, 0.0
      %v4276 = vmax.f32 %v4244, 0.0
      %v4277 = vmax.f32 %v4245, 0.0
      %v4278 = vmax.f32 %v4246, 0.0
      %v4279 = vmax.f32 %v4247, 0.0
      %v4280 = vmax.f32 %v4248, 0.0
      %v4281 = vmax.f32 %v4249, 0.0
      %v4282 = vmax.f32 %v4250, 0.0
      %v4283 = vmax.f32 %v4251, 0.0
      %v4284 = vmax.f32 %v4252, 0.0
      %v4285 = vmax.f32 %v4253, 0.0
      %v4286 = vmax.f32 %v4254, 0.0
      %v4287 = vmax.f32 %v4255, 0.0
      %v4288 = vmax.f32 %v4256, 0.0
      %v4289 = vmax.f32 %v4257, 0.0
      %v4290 = vmax.f32 %v4258, 0.0
      %v4291 = vmax.f32 %v4259, 0.0
      %v4292 = vmax.f32 %v4260, 0.0
      %v4293 = vmax.f32 %v4261, 0.0
      %v4294 = vmax.f32 %v4262, 0.0
      %v4295 = vmax.f32 %v4263, 0.0
      %v4296 = vmax.f32 %v4264, 0.0
      %v4297 = vmax.f32 %v4265, 0.0
      %v4298 = vmax.f32 %v4266, 0.0
      %4299 = vst.msk [vmem:[%s197] sm:$0xff] %vm230, %v4267
      %4300 = vst.msk [vmem:[%s197 + $0x8] sm:$0xff] %vm230, %v4268
      %4301 = vst.msk [vmem:[%s197 + $0x10] sm:$0xff] %vm230, %v4269
      %4302 = vst.msk [vmem:[%s197 + $0x18] sm:$0xff] %vm230, %v4270
      %4303 = vst.msk [vmem:[%s197 + $0x20] sm:$0xff] %vm230, %v4271
      %4304 = vst.msk [vmem:[%s197 + $0x28] sm:$0xff] %vm230, %v4272
      %4305 = vst.msk [vmem:[%s197 + $0x30] sm:$0xff] %vm230, %v4273
      %4306 = vst.msk [vmem:[%s197 + $0x38] sm:$0xff] %vm230, %v4274
      %4307 = vst.msk [vmem:[%s197 + $0x40] sm:$0xff] %vm230, %v4275
      %4308 = vst.msk [vmem:[%s197 + $0x48] sm:$0xff] %vm230, %v4276
      %4309 = vst.msk [vmem:[%s197 + $0x50] sm:$0xff] %vm230, %v4277
      %4310 = vst.msk [vmem:[%s197 + $0x58] sm:$0xff] %vm230, %v4278
      %4311 = vst.msk [vmem:[%s197 + $0x60] sm:$0xff] %vm230, %v4279
      %4312 = vst.msk [vmem:[%s197 + $0x68] sm:$0xff] %vm230, %v4280
      %4313 = vst.msk [vmem:[%s197 + $0x70] sm:$0xff] %vm230, %v4281
      %4314 = vst.msk [vmem:[%s197 + $0x78] sm:$0xff] %vm230, %v4282
      %4315 = vst.msk [vmem:[%s197 + $0x80] sm:$0xff] %vm230, %v4283
      %4316 = vst.msk [vmem:[%s197 + $0x88] sm:$0xff] %vm230, %v4284
      %4317 = vst.msk [vmem:[%s197 + $0x90] sm:$0xff] %vm230, %v4285
      %4318 = vst.msk [vmem:[%s197 + $0x98] sm:$0xff] %vm230, %v4286
      %4319 = vst.msk [vmem:[%s197 + $0xa0] sm:$0xff] %vm230, %v4287
      %4320 = vst.msk [vmem:[%s197 + $0xa8] sm:$0xff] %vm230, %v4288
      %4321 = vst.msk [vmem:[%s197 + $0xb0] sm:$0xff] %vm230, %v4289
      %4322 = vst.msk [vmem:[%s197 + $0xb8] sm:$0xff] %vm230, %v4290
      %4323 = vst.msk [vmem:[%s197 + $0xc0] sm:$0xff] %vm230, %v4291
      %4324 = vst.msk [vmem:[%s197 + $0xc8] sm:$0xff] %vm230, %v4292
      %4325 = vst.msk [vmem:[%s197 + $0xd0] sm:$0xff] %vm230, %v4293
      %4326 = vst.msk [vmem:[%s197 + $0xd8] sm:$0xff] %vm230, %v4294
      %4327 = vst.msk [vmem:[%s197 + $0xe0] sm:$0xff] %vm230, %v4295
      %4328 = vst.msk [vmem:[%s197 + $0xe8] sm:$0xff] %vm230, %v4296
      %4329 = vst.msk [vmem:[%s197 + $0xf0] sm:$0xff] %vm230, %v4297
      %4330 = vst.msk [vmem:[%s197 + $0xf8] sm:$0xff] %vm230, %v4298
      %p4331 = scmp.lt.s32.totalorder %s15, 1
      %s4332 = scalar_select %p4331, %s15, 1
      %s4333 = smul.addr %s4332, 32
      %s4334 = smul.addr %s4333, 8
      %s4335 = scalar_lea.vmem %s4, %s4334
      // Predicated region
      $region37: #{tpu_custom_call.1} parent=35 // pred_check
        %p4336 = pneg %p122
      $region38: #{tpu_custom_call.1} parent=35 // pred_check_branch
        %4338 = sbr.rel (%p4336) target = $region40
      $region39: #{tpu_custom_call.1} parent=35 // pred_region
        _
      $region40: #{tpu_custom_call.1} parent=35 // pred_fallthru
        _
    $region36: #{tpu_custom_call.1} parent=5 // pred_fallthru
      _
    %p4339 = scmp.le.s32.totalorder 2, %s10
    // Predicated region
    $region41: #{tpu_custom_call.1} parent=5 // pred_check
      %p4340 = pneg %p4339
    $region42: #{tpu_custom_call.1} parent=5 // pred_check_branch
      %4342 = sbr.rel (%p4340) target = $region44
    $region43: #{tpu_custom_call.1} parent=5 // pred_region
      %s4343 = ssub.s32 %s10, 2
      // Predicated region
      $region45: #{tpu_custom_call.1} parent=43 // pred_check
        %p4344 = pneg %p128
      $region46: #{tpu_custom_call.1} parent=43 // pred_check_branch
        %4346 = sbr.rel (%p4344) target = $region48
      $region47: #{tpu_custom_call.1} parent=43 // pred_region
        %p4347 = scmp.lt.s32.totalorder %s16, 1
        %s4348 = scalar_select %p4347, %s16, 1
        %s4349 = smul.addr %s4348, 32
        %s4350 = smul.addr %s4349, 8
        %s4351 = scalar_lea.vmem %s4, %s4350
      $region48: #{tpu_custom_call.1} parent=43 // pred_fallthru
        _
    $region44: #{tpu_custom_call.1} parent=5 // pred_fallthru
      _
  $region6: #{tpu_custom_call.1} parent=0 // loop_footer
    %s14 = sadd.s32 1, %s10
  $region7: #{tpu_custom_call.1} parent=0 // loop_footer_branch
    %9 = sbr.rel target = $region3
  $region8: #{tpu_custom_call.1} parent=0 // loop_exit
    _

</llo_original>
